<compile_context>
chip_gen: v6e
topology: v6e:2x2x1
jax: 0.10.0
libtpu: 0.0.40
codegen_flags: <defaults>
</compile_context>

<pallas_src>
import functools

import jax
import jax.numpy as jnp
from jax.experimental import pallas as pl
from jax.experimental.pallas import tpu as pltpu

LANE = 128


def _round_up(x, m):
    return (x + m - 1) // m * m


# -----------------------------------------------------------------------------
# Fused Pallas kernel: in-VMEM im2col (9 shifted taps) + conv matmuls + BN + ReLU
#                      + masked GAP + FC head — one grid step per image.
# -----------------------------------------------------------------------------
def fused_conv_gap_head_kernel(x_ref, w_ref, shift_ref, gap_ref, fcw_ref, fcb_ref,
                               o_ref, *, wp, c_in, hw_flat):
    """Grid = (image n [parallel],).

    x_ref:     [1, L, C_in]        bf16  padded image, spatially flattened (row width wp=W+2)
    w_ref:     [9, C_in, C_out]    bf16  conv weight per tap (BN scale folded in)
    shift_ref: [1, C_out]          f32   BN shift (beta - mean*scale)
    gap_ref:   [hw_flat, 1]        f32   GAP weights: 1/(H*W) on real pixels, 0 on wrap cols
    fcw_ref:   [C_out, NC_pad]     bf16  head weight
    fcb_ref:   [1, NC_pad]         f32   head bias
    o_ref:     [1, 1, NC_pad]      f32   logits for this image
    """
    x = x_ref[0]                                        # [L, C_in] bf16, whole padded image

    # Conv as 9 shifted matmuls: tap (dh, dw) of output row-major pixel j lives at
    # flat index dh*wp + dw + j of the padded, flattened image (contiguous slice).
    acc = None
    for dh in range(3):
        for dw in range(3):
            t = dh * 3 + dw
            start = dh * wp + dw
            tap = x[start:start + hw_flat, :]                        # [hw_flat, C_in] bf16
            d = jnp.dot(tap, w_ref[t], preferred_element_type=jnp.float32)
            acc = d if acc is None else acc + d                      # [hw_flat, C_out] f32

    # BN (scale folded into w) + ReLU epilogue.
    y = jnp.maximum(acc + shift_ref[...], 0.0)                       # [hw_flat, C_out]

    # Global average pool: GAP weights zero out the 2 wrap columns per flattened row and
    # already carry the 1/(H*W) factor -> single vmul + cross-sublane reduce (XLU).
    pooled = jnp.sum(y * gap_ref[...], axis=0, keepdims=True)        # [1, C_out] f32

    # Classifier head (bf16 operands, f32 accumulation).
    logits = jnp.dot(pooled.astype(jnp.bfloat16), fcw_ref[...],
                     preferred_element_type=jnp.float32) + fcb_ref[...]
    o_ref[0] = logits.astype(o_ref.dtype)


# -----------------------------------------------------------------------------
# Glue (plain JAX): bf16 cast, spatial pad + flatten, BN fold, pallas_call wiring
# -----------------------------------------------------------------------------
@functools.partial(jax.jit, static_argnames=("num_classes",))
def timm_model_forward(x, params, num_classes=10):
    """x: [N, C, H, W] float32 (NCHW)  ->  logits [N, num_classes] float32."""
    n, c, h, w = x.shape
    conv_w = params["conv_w"]                          # [C_out, C, 3, 3]
    c_out = conv_w.shape[0]

    wp = w + 2                                         # padded row width
    hw_flat = h * wp                                   # conv-output rows incl. wrap cols
    flat_len = (h + 2) * wp                            # padded image, flattened
    l_pad = _round_up(flat_len + 2, 8)                 # +2: largest tap offset reads past end
    nc_pad = _round_up(num_classes, LANE)

    # --- raw input stream: bf16 cast FIRST, then pad + flatten (no im2col) ------
    xb = x.astype(jnp.bfloat16)
    xp = jnp.pad(xb, ((0, 0), (0, 0), (1, 1), (1, 1)))               # [N, C, H+2, W+2]
    xflat = xp.transpose(0, 2, 3, 1).reshape(n, flat_len, c)         # [N, (H+2)*(W+2), C]
    xflat = jnp.pad(xflat, ((0, 0), (0, l_pad - flat_len), (0, 0)))  # [N, L, C]

    # --- fold BN (eval) into conv weight + shift; tap-major weight layout --------
    eps = 1e-5
    scale = params["bn_gamma"] / jnp.sqrt(params["bn_var"] + eps)    # [C_out]
    shift = params["bn_beta"] - params["bn_mean"] * scale            # [C_out]
    # [C_out, C, 3, 3] -> [3, 3, C, C_out] -> [9, C, C_out], scaled, bf16
    w_taps = (conv_w.transpose(2, 3, 1, 0).reshape(9, c, c_out)
              * scale[None, None, :]).astype(jnp.bfloat16)
    shift_p = shift.reshape(1, c_out).astype(jnp.float32)

    # --- GAP weights: 1/(H*W) on real pixels, 0 on the 2 wrap columns per row ----
    j = jnp.arange(hw_flat)
    gap_w = jnp.where((j % wp) < w, 1.0 / (h * w), 0.0)
    gap_w = gap_w.astype(jnp.float32).reshape(hw_flat, 1)

    # --- head params (bf16 weight, padded class dim for a lane-dense store) ------
    fc_w = jnp.pad(params["fc_w"].T,
                   ((0, 0), (0, nc_pad - num_classes))).astype(jnp.bfloat16)
    fc_b = jnp.pad(params["fc_b"], (0, nc_pad - num_classes)).reshape(1, nc_pad)
    fc_b = fc_b.astype(jnp.float32)

    # Real (unpadded) dims for the cost estimate.
    flops = n * (2 * h * w * (9 * c) * c_out + 2 * c_out * num_classes)
    bytes_accessed = (n * l_pad * c * 2          # raw image (bf16)
                      + 9 * c * c_out * 2        # conv weight (bf16)
                      + c_out * 4                # bn shift
                      + hw_flat * 4              # GAP weights
                      + c_out * nc_pad * 2       # head weight (bf16)
                      + nc_pad * 4               # head bias
                      + n * nc_pad * 4)          # logits

    kernel = functools.partial(fused_conv_gap_head_kernel,
                               wp=wp, c_in=c, hw_flat=hw_flat)

    logits_pad = pl.pallas_call(
        kernel,
        out_shape=jax.ShapeDtypeStruct((n, 1, nc_pad), jnp.float32),
        grid_spec=pltpu.PrefetchScalarGridSpec(
            num_scalar_prefetch=0,
            grid=(n,),
            in_specs=[
                pl.BlockSpec((1, l_pad, c), lambda i: (i, 0, 0)),        # raw image
                pl.BlockSpec((9, c, c_out), lambda i: (0, 0, 0)),        # conv weight
                pl.BlockSpec((1, c_out), lambda i: (0, 0)),              # bn shift
                pl.BlockSpec((hw_flat, 1), lambda i: (0, 0)),            # GAP weights
                pl.BlockSpec((c_out, nc_pad), lambda i: (0, 0)),         # fc weight
                pl.BlockSpec((1, nc_pad), lambda i: (0, 0)),             # fc bias
            ],
            out_specs=pl.BlockSpec((1, 1, nc_pad), lambda i: (i, 0, 0)),
        ),
        compiler_params=pltpu.CompilerParams(
            dimension_semantics=("parallel",),
            vmem_limit_bytes=32 * 1024 * 1024,
        ),
        cost_estimate=pl.CostEstimate(flops=flops, transcendentals=0,
                                      bytes_accessed=bytes_accessed),
    )(xflat, w_taps, shift_p, gap_w, fc_w, fc_b)

    return logits_pad[:, 0, :num_classes]


def init_params(key, in_ch=4, hidden=32, num_classes=10):
    """Deterministic synthetic parameters (tiny conv classifier)."""
    k_conv, k_fc, k_bn = jax.random.split(key, 3)
    return {
        "conv_w": 0.1 * jax.random.normal(k_conv, (hidden, in_ch, 3, 3), jnp.float32),
        "bn_gamma": jnp.ones((hidden,), jnp.float32),
        "bn_beta": jnp.zeros((hidden,), jnp.float32),
        "bn_mean": 0.01 * jax.random.normal(k_bn, (hidden,), jnp.float32),
        "bn_var": jnp.ones((hidden,), jnp.float32),
        "fc_w": 0.1 * jax.random.normal(k_fc, (num_classes, hidden), jnp.float32),
        "fc_b": jnp.zeros((num_classes,), jnp.float32),
    }


# -----------------------------------------------------------------------------
# Pure-JAX reference for correctness check
# -----------------------------------------------------------------------------
def reference_forward(x, params):
    eps = 1e-5
    y = jax.lax.conv_general_dilated(
        x, params["conv_w"], window_strides=(1, 1), padding="SAME",
        dimension_numbers=("NCHW", "OIHW", "NCHW"))
    scale = params["bn_gamma"] / jnp.sqrt(params["bn_var"] + eps)
    shift = params["bn_beta"] - params["bn_mean"] * scale
    y = y * scale[None, :, None, None] + shift[None, :, None, None]
    y = jnp.maximum(y, 0.0)
    pooled = jnp.mean(y, axis=(2, 3))
    return pooled @ params["fc_w"].T + params["fc_b"]


if __name__ == "__main__":
    key = jax.random.PRNGKey(0)
    k_x, k_p = jax.random.split(key)

    N, C, H, W = 2, 4, 16, 16
    HIDDEN, NUM_CLASSES = 32, 10

    x = jax.random.normal(k_x, (N, C, H, W), jnp.float32)
    params = init_params(k_p, in_ch=C, hidden=HIDDEN, num_classes=NUM_CLASSES)

    logits = timm_model_forward(x, params, num_classes=NUM_CLASSES)
    logits = jax.block_until_ready(logits)

    ref = reference_forward(x, params)
    assert logits.shape == (N, NUM_CLASSES)
    # bf16 operands with f32 accumulation -> slightly looser tolerance than pure f32.
    assert jnp.allclose(logits, ref, atol=2e-2, rtol=2e-2), "mismatch vs reference"

    print("KERNEL_OK")
</pallas_src>

<mosaic_0001>
module attributes {stable_mosaic.version = 11 : i64} {
  func.func @fused_conv_gap_head_kernel(%arg0: i32, %arg1: memref<1x328x4xbf16, #tpu.memory_space<vmem>>, %arg2: memref<9x4x32xbf16, #tpu.memory_space<vmem>>, %arg3: memref<1x32xf32, #tpu.memory_space<vmem>>, %arg4: memref<288x1xf32, #tpu.memory_space<vmem>>, %arg5: memref<32x128xbf16, #tpu.memory_space<vmem>>, %arg6: memref<1x128xf32, #tpu.memory_space<vmem>>, %arg7: memref<1x1x128xf32, #tpu.memory_space<vmem>>) attributes {dimension_semantics = [#tpu.dimension_semantics<parallel>], iteration_bounds = array<i64: 2>, scalar_prefetch = 0 : i64, scratch_operands = 0 : i64, tpu.core_type = #tpu.core_type<tc>, window_params = [{transform_indices = @transform_0, window_bounds = array<i64: 1, 328, 4>}, {pipeline_mode = #tpu.pipeline_mode<synchronous>, transform_indices = @transform_1, window_bounds = array<i64: 9, 4, 32>}, {pipeline_mode = #tpu.pipeline_mode<synchronous>, transform_indices = @transform_2, window_bounds = array<i64: 1, 32>}, {pipeline_mode = #tpu.pipeline_mode<synchronous>, transform_indices = @transform_3, window_bounds = array<i64: 288, 1>}, {pipeline_mode = #tpu.pipeline_mode<synchronous>, transform_indices = @transform_4, window_bounds = array<i64: 32, 128>}, {pipeline_mode = #tpu.pipeline_mode<synchronous>, transform_indices = @transform_5, window_bounds = array<i64: 1, 128>}, {transform_indices = @transform_6, window_bounds = array<i64: 1, 1, 128>}]} {
    %c0 = arith.constant 0 : index
    %c0_0 = arith.constant 0 : index
    %c0_1 = arith.constant 0 : index
    %0 = vector.load %arg1[%c0, %c0_0, %c0_1] : memref<1x328x4xbf16, #tpu.memory_space<vmem>>, vector<1x328x4xbf16>
    %1 = vector.shape_cast %0 : vector<1x328x4xbf16> to vector<328x4xbf16>
    %2 = vector.extract_strided_slice %1 {offsets = [0, 0], sizes = [288, 4], strides = [1, 1]} : vector<328x4xbf16> to vector<288x4xbf16>
    %c0_2 = arith.constant 0 : index
    %c0_3 = arith.constant 0 : index
    %c0_4 = arith.constant 0 : index
    %3 = vector.load %arg2[%c0_2, %c0_3, %c0_4] : memref<9x4x32xbf16, #tpu.memory_space<vmem>>, vector<1x4x32xbf16>
    %4 = vector.shape_cast %3 : vector<1x4x32xbf16> to vector<4x32xbf16>
    %cst = arith.constant dense<0.000000e+00> : vector<288x32xf32>
    %5 = tpu.matmul %2, %4, %cst {dimension_numbers = #tpu.dot_dimension_numbers<[1], [0], [0], [1], [0, 0, 1, 1], [], []>} : vector<288x4xbf16>, vector<4x32xbf16>, vector<288x32xf32> -> vector<288x32xf32>
    %6 = vector.extract_strided_slice %1 {offsets = [1, 0], sizes = [288, 4], strides = [1, 1]} : vector<328x4xbf16> to vector<288x4xbf16>
    %c1 = arith.constant 1 : index
    %c0_5 = arith.constant 0 : index
    %c0_6 = arith.constant 0 : index
    %7 = vector.load %arg2[%c1, %c0_5, %c0_6] : memref<9x4x32xbf16, #tpu.memory_space<vmem>>, vector<1x4x32xbf16>
    %8 = vector.shape_cast %7 : vector<1x4x32xbf16> to vector<4x32xbf16>
    %cst_7 = arith.constant dense<0.000000e+00> : vector<288x32xf32>
    %9 = tpu.matmul %6, %8, %cst_7 {dimension_numbers = #tpu.dot_dimension_numbers<[1], [0], [0], [1], [0, 0, 1, 1], [], []>} : vector<288x4xbf16>, vector<4x32xbf16>, vector<288x32xf32> -> vector<288x32xf32>
    %10 = arith.addf %5, %9 : vector<288x32xf32>
    %11 = vector.extract_strided_slice %1 {offsets = [2, 0], sizes = [288, 4], strides = [1, 1]} : vector<328x4xbf16> to vector<288x4xbf16>
    %c2 = arith.constant 2 : index
    %c0_8 = arith.constant 0 : index
    %c0_9 = arith.constant 0 : index
    %12 = vector.load %arg2[%c2, %c0_8, %c0_9] : memref<9x4x32xbf16, #tpu.memory_space<vmem>>, vector<1x4x32xbf16>
    %13 = vector.shape_cast %12 : vector<1x4x32xbf16> to vector<4x32xbf16>
    %cst_10 = arith.constant dense<0.000000e+00> : vector<288x32xf32>
    %14 = tpu.matmul %11, %13, %cst_10 {dimension_numbers = #tpu.dot_dimension_numbers<[1], [0], [0], [1], [0, 0, 1, 1], [], []>} : vector<288x4xbf16>, vector<4x32xbf16>, vector<288x32xf32> -> vector<288x32xf32>
    %15 = arith.addf %10, %14 : vector<288x32xf32>
    %16 = vector.extract_strided_slice %1 {offsets = [18, 0], sizes = [288, 4], strides = [1, 1]} : vector<328x4xbf16> to vector<288x4xbf16>
    %c3 = arith.constant 3 : index
    %c0_11 = arith.constant 0 : index
    %c0_12 = arith.constant 0 : index
    %17 = vector.load %arg2[%c3, %c0_11, %c0_12] : memref<9x4x32xbf16, #tpu.memory_space<vmem>>, vector<1x4x32xbf16>
    %18 = vector.shape_cast %17 : vector<1x4x32xbf16> to vector<4x32xbf16>
    %cst_13 = arith.constant dense<0.000000e+00> : vector<288x32xf32>
    %19 = tpu.matmul %16, %18, %cst_13 {dimension_numbers = #tpu.dot_dimension_numbers<[1], [0], [0], [1], [0, 0, 1, 1], [], []>} : vector<288x4xbf16>, vector<4x32xbf16>, vector<288x32xf32> -> vector<288x32xf32>
    %20 = arith.addf %15, %19 : vector<288x32xf32>
    %21 = vector.extract_strided_slice %1 {offsets = [19, 0], sizes = [288, 4], strides = [1, 1]} : vector<328x4xbf16> to vector<288x4xbf16>
    %c4 = arith.constant 4 : index
    %c0_14 = arith.constant 0 : index
    %c0_15 = arith.constant 0 : index
    %22 = vector.load %arg2[%c4, %c0_14, %c0_15] : memref<9x4x32xbf16, #tpu.memory_space<vmem>>, vector<1x4x32xbf16>
    %23 = vector.shape_cast %22 : vector<1x4x32xbf16> to vector<4x32xbf16>
    %cst_16 = arith.constant dense<0.000000e+00> : vector<288x32xf32>
    %24 = tpu.matmul %21, %23, %cst_16 {dimension_numbers = #tpu.dot_dimension_numbers<[1], [0], [0], [1], [0, 0, 1, 1], [], []>} : vector<288x4xbf16>, vector<4x32xbf16>, vector<288x32xf32> -> vector<288x32xf32>
    %25 = arith.addf %20, %24 : vector<288x32xf32>
    %26 = vector.extract_strided_slice %1 {offsets = [20, 0], sizes = [288, 4], strides = [1, 1]} : vector<328x4xbf16> to vector<288x4xbf16>
    %c5 = arith.constant 5 : index
    %c0_17 = arith.constant 0 : index
    %c0_18 = arith.constant 0 : index
    %27 = vector.load %arg2[%c5, %c0_17, %c0_18] : memref<9x4x32xbf16, #tpu.memory_space<vmem>>, vector<1x4x32xbf16>
    %28 = vector.shape_cast %27 : vector<1x4x32xbf16> to vector<4x32xbf16>
    %cst_19 = arith.constant dense<0.000000e+00> : vector<288x32xf32>
    %29 = tpu.matmul %26, %28, %cst_19 {dimension_numbers = #tpu.dot_dimension_numbers<[1], [0], [0], [1], [0, 0, 1, 1], [], []>} : vector<288x4xbf16>, vector<4x32xbf16>, vector<288x32xf32> -> vector<288x32xf32>
    %30 = arith.addf %25, %29 : vector<288x32xf32>
    %31 = vector.extract_strided_slice %1 {offsets = [36, 0], sizes = [288, 4], strides = [1, 1]} : vector<328x4xbf16> to vector<288x4xbf16>
    %c6 = arith.constant 6 : index
    %c0_20 = arith.constant 0 : index
    %c0_21 = arith.constant 0 : index
    %32 = vector.load %arg2[%c6, %c0_20, %c0_21] : memref<9x4x32xbf16, #tpu.memory_space<vmem>>, vector<1x4x32xbf16>
    %33 = vector.shape_cast %32 : vector<1x4x32xbf16> to vector<4x32xbf16>
    %cst_22 = arith.constant dense<0.000000e+00> : vector<288x32xf32>
    %34 = tpu.matmul %31, %33, %cst_22 {dimension_numbers = #tpu.dot_dimension_numbers<[1], [0], [0], [1], [0, 0, 1, 1], [], []>} : vector<288x4xbf16>, vector<4x32xbf16>, vector<288x32xf32> -> vector<288x32xf32>
    %35 = arith.addf %30, %34 : vector<288x32xf32>
    %36 = vector.extract_strided_slice %1 {offsets = [37, 0], sizes = [288, 4], strides = [1, 1]} : vector<328x4xbf16> to vector<288x4xbf16>
    %c7 = arith.constant 7 : index
    %c0_23 = arith.constant 0 : index
    %c0_24 = arith.constant 0 : index
    %37 = vector.load %arg2[%c7, %c0_23, %c0_24] : memref<9x4x32xbf16, #tpu.memory_space<vmem>>, vector<1x4x32xbf16>
    %38 = vector.shape_cast %37 : vector<1x4x32xbf16> to vector<4x32xbf16>
    %cst_25 = arith.constant dense<0.000000e+00> : vector<288x32xf32>
    %39 = tpu.matmul %36, %38, %cst_25 {dimension_numbers = #tpu.dot_dimension_numbers<[1], [0], [0], [1], [0, 0, 1, 1], [], []>} : vector<288x4xbf16>, vector<4x32xbf16>, vector<288x32xf32> -> vector<288x32xf32>
    %40 = arith.addf %35, %39 : vector<288x32xf32>
    %41 = vector.extract_strided_slice %1 {offsets = [38, 0], sizes = [288, 4], strides = [1, 1]} : vector<328x4xbf16> to vector<288x4xbf16>
    %c8 = arith.constant 8 : index
    %c0_26 = arith.constant 0 : index
    %c0_27 = arith.constant 0 : index
    %42 = vector.load %arg2[%c8, %c0_26, %c0_27] : memref<9x4x32xbf16, #tpu.memory_space<vmem>>, vector<1x4x32xbf16>
    %43 = vector.shape_cast %42 : vector<1x4x32xbf16> to vector<4x32xbf16>
    %cst_28 = arith.constant dense<0.000000e+00> : vector<288x32xf32>
    %44 = tpu.matmul %41, %43, %cst_28 {dimension_numbers = #tpu.dot_dimension_numbers<[1], [0], [0], [1], [0, 0, 1, 1], [], []>} : vector<288x4xbf16>, vector<4x32xbf16>, vector<288x32xf32> -> vector<288x32xf32>
    %45 = arith.addf %40, %44 : vector<288x32xf32>
    %c0_29 = arith.constant 0 : index
    %c0_30 = arith.constant 0 : index
    %46 = vector.load %arg3[%c0_29, %c0_30] : memref<1x32xf32, #tpu.memory_space<vmem>>, vector<1x32xf32>
    %47 = vector.broadcast %46 : vector<1x32xf32> to vector<288x32xf32>
    %48 = arith.addf %45, %47 : vector<288x32xf32>
    %cst_31 = arith.constant 0.000000e+00 : f32
    %49 = vector.broadcast %cst_31 : f32 to vector<288x32xf32>
    %50 = arith.maximumf %48, %49 : vector<288x32xf32>
    %c0_32 = arith.constant 0 : index
    %c0_33 = arith.constant 0 : index
    %51 = vector.load %arg4[%c0_32, %c0_33] : memref<288x1xf32, #tpu.memory_space<vmem>>, vector<288x1xf32>
    %52 = vector.broadcast %51 : vector<288x1xf32> to vector<288x32xf32>
    %53 = arith.mulf %50, %52 : vector<288x32xf32>
    %cst_34 = arith.constant dense<0.000000e+00> : vector<32xf32>
    %54 = vector.multi_reduction <add>, %53, %cst_34 [0] : vector<288x32xf32> to vector<32xf32>
    %55 = vector.shape_cast %54 : vector<32xf32> to vector<1x32xf32>
    %56 = arith.truncf %55 : vector<1x32xf32> to vector<1x32xbf16>
    %c0_35 = arith.constant 0 : index
    %c0_36 = arith.constant 0 : index
    %57 = vector.load %arg5[%c0_35, %c0_36] : memref<32x128xbf16, #tpu.memory_space<vmem>>, vector<32x128xbf16>
    %cst_37 = arith.constant dense<0.000000e+00> : vector<1x128xf32>
    %58 = tpu.matmul %56, %57, %cst_37 {dimension_numbers = #tpu.dot_dimension_numbers<[1], [0], [0], [1], [0, 0, 1, 1], [], []>} : vector<1x32xbf16>, vector<32x128xbf16>, vector<1x128xf32> -> vector<1x128xf32>
    %c0_38 = arith.constant 0 : index
    %c0_39 = arith.constant 0 : index
    %59 = vector.load %arg6[%c0_38, %c0_39] : memref<1x128xf32, #tpu.memory_space<vmem>>, vector<1x128xf32>
    %60 = arith.addf %58, %59 : vector<1x128xf32>
    %c0_40 = arith.constant 0 : index
    %c0_41 = arith.constant 0 : index
    %c0_42 = arith.constant 0 : index
    %61 = vector.load %arg7[%c0_40, %c0_41, %c0_42] : memref<1x1x128xf32, #tpu.memory_space<vmem>>, vector<1x1x128xf32>
    %62 = vector.shape_cast %61 : vector<1x1x128xf32> to vector<1x128xf32>
    %63 = vector.shape_cast %60 : vector<1x128xf32> to vector<1x1x128xf32>
    tpu.vector_store %arg7[%c0_40, %c0_41, %c0_42], %63 {strides = array<i32>} : memref<1x1x128xf32, #tpu.memory_space<vmem>>, vector<1x1x128xf32>,
    return
  }
  func.func @transform_0(%arg0: i32) -> (i32, i32, i32) {
    %c0_i32 = arith.constant 0 : i32
    %c0_i32_0 = arith.constant 0 : i32
    %c0_i32_1 = arith.constant 0 : i32
    return %arg0, %c0_i32, %c0_i32_0 : i32, i32, i32
  }
  func.func @transform_1(%arg0: i32) -> (i32, i32, i32) {
    %c0_i32 = arith.constant 0 : i32
    %c0_i32_0 = arith.constant 0 : i32
    %c0_i32_1 = arith.constant 0 : i32
    %c0_i32_2 = arith.constant 0 : i32
    return %c0_i32, %c0_i32_0, %c0_i32_1 : i32, i32, i32
  }
  func.func @transform_2(%arg0: i32) -> (i32, i32) {
    %c0_i32 = arith.constant 0 : i32
    %c0_i32_0 = arith.constant 0 : i32
    %c0_i32_1 = arith.constant 0 : i32
    return %c0_i32, %c0_i32_0 : i32, i32
  }
  func.func @transform_3(%arg0: i32) -> (i32, i32) {
    %c0_i32 = arith.constant 0 : i32
    %c0_i32_0 = arith.constant 0 : i32
    %c0_i32_1 = arith.constant 0 : i32
    return %c0_i32, %c0_i32_0 : i32, i32
  }
  func.func @transform_4(%arg0: i32) -> (i32, i32) {
    %c0_i32 = arith.constant 0 : i32
    %c0_i32_0 = arith.constant 0 : i32
    %c0_i32_1 = arith.constant 0 : i32
    return %c0_i32, %c0_i32_0 : i32, i32
  }
  func.func @transform_5(%arg0: i32) -> (i32, i32) {
    %c0_i32 = arith.constant 0 : i32
    %c0_i32_0 = arith.constant 0 : i32
    %c0_i32_1 = arith.constant 0 : i32
    return %c0_i32, %c0_i32_0 : i32, i32
  }
  func.func @transform_6(%arg0: i32) -> (i32, i32, i32) {
    %c0_i32 = arith.constant 0 : i32
    %c0_i32_0 = arith.constant 0 : i32
    %c0_i32_1 = arith.constant 0 : i32
    return %arg0, %c0_i32, %c0_i32_0 : i32, i32, i32
  }
}

</mosaic_0001>

<llo_original>
// kernel: timm_model_forward.1
$region0: #{timm_model_forward.1}
  #allocation0 [shape = 'u32[]', space=smem, size = 0x4, offset = 0x4, fixed_abs, tag = 'smem constant byte address 0x4 - core index']
  #allocation1 [shape = 'u32[144,128]{1,0:T(1,128)}', space=vmem, size = 0x12000, scoped, tag = 'internal scratch']
  %s0 = inlined_call_operand.vmem [shape: bf16[2,328,4], index: 0, kind: input, shape index: {}]
  %s1 = inlined_call_operand.vmem [shape: bf16[9,4,32], index: 1, kind: input, shape index: {}]
  %s2 = inlined_call_operand.vmem [shape: f32[1,32], index: 2, kind: input, shape index: {}]
  %s3 = inlined_call_operand.vmem [shape: f32[288,1], index: 3, kind: input, shape index: {}]
  %s4 = inlined_call_operand.vmem [shape: bf16[32,128], index: 4, kind: input, shape index: {}]
  %s5 = inlined_call_operand.vmem [shape: f32[1,128], index: 5, kind: input, shape index: {}]
  %s6 = inlined_call_operand.hbm [shape: f32[2,1,128], index: 6, kind: output, shape index: {}]
  %s7 = sld [smem:[#allocation0]]
  $region57: #{timm_model_forward.1} parent=0
    _
  %s9 = ssub.s32 1, %s7
  %s10 = scalar_select 0, %s9, %s7
  $region1: #{timm_model_forward.1} parent=0
    #allocation2 [shape = 'u8[1024]{0}', space=vmem, size = 0x400, scoped, tag = 'output window, operand 0']
    #allocation3 [shape = 's32[2]{0}', space=sflag, size = 0x8, scoped, tag = 'scoped memory for timm_model_forward.1']
    %11 = vsyncpa [#allocation3], 0
    %s12 = scalar_lea.sflag [#allocation3], 1
    %13 = vsyncpa %s12, 0
    loop: start=0, step=1, limit=4
    $region2: #{timm_model_forward.1} parent=1 // loop_pre_header
      _
    $region3: #{timm_model_forward.1} parent=1 // loop_header
      %s15 = sphi 0, %s19
      %p16 = scmp.ge.s32.totalorder %s15, 4
      %s25 = sphi 0, %s27
      %s28 = sphi 0, %s25
      %s29 = sphi 0, %s28
      %s45 = sphi 0, %s29
      %s49 = sphi 0, %s49
      %s51 = sphi 0, %s49
      %s52 = sphi 0, %s51
      %s66 = sphi 0, %s52
      %s70 = sphi 0, %s70
      %s72 = sphi 0, %s70
      %s73 = sphi 0, %s72
      %s87 = sphi 0, %s73
      %s91 = sphi 0, %s91
      %s93 = sphi 0, %s91
      %s94 = sphi 0, %s93
      %s108 = sphi 0, %s94
      %s112 = sphi 0, %s112
      %s114 = sphi 0, %s112
      %s115 = sphi 0, %s114
      %s129 = sphi 0, %s115
      %s133 = sphi 0, %s133
      %s135 = sphi 0, %s133
      %s136 = sphi 0, %s135
      %s150 = sphi 0, %s136
      %s156 = sphi 0, %s158
      %s159 = sphi 0, %s156
      %s160 = sphi 0, %s159
      %s176 = sphi 0, %s160
    $region4: #{timm_model_forward.1} parent=1 // loop_header_branch
      %18 = sbr.rel (%p16) target = $region8
    $region5: #{timm_model_forward.1} parent=1 // loop_body
      %s20 = ssub.s32 %s15, 1
      %s21 = ssub.s32 %s15, 2
      %s22 = sadd.s32 %s15, 1
      %s23 = ssub.s32 %s15, %s22
      %p24 = scmp.eq.s32.totalorder %s23, 0
      %s26 = sadd.s32 %s25, 1
      %s27 = scalar_select %p24, %s25, %s26
      %p30 = pneg %p24
      %p31 = scmp.eq.s32.totalorder %s15, 1
      %p32 = por %p30, %p31
      %p33 = scmp.ne.s32.totalorder %s25, %s28
      %p34 = scmp.eq.s32.totalorder %s15, 0
      %p35 = por %p33, %p34
      %p36 = scmp.ne.s32.totalorder %s25, %s28
      %p37 = scmp.eq.s32.totalorder %s20, 1
      %p38 = por %p36, %p37
      %p39 = scmp.ne.s32.totalorder %s28, %s29
      %p40 = scmp.eq.s32.totalorder %s20, 0
      %p41 = por %p39, %p40
      %p42 = scmp.ne.s32.totalorder %s28, %s29
      %p43 = scmp.eq.s32.totalorder %s21, 1
      %p44 = por %p42, %p43
      %p46 = scmp.ne.s32.totalorder %s29, %s45
      %p47 = scmp.eq.s32.totalorder %s21, 0
      %p48 = por %p46, %p47
      %s50 = sadd.s32 %s49, 1
      %p53 = scmp.eq.s32.totalorder %s15, 1
      %p54 = scmp.ne.s32.totalorder %s49, %s51
      %p55 = scmp.eq.s32.totalorder %s15, 0
      %p56 = por %p54, %p55
      %p57 = scmp.ne.s32.totalorder %s49, %s51
      %p58 = scmp.eq.s32.totalorder %s20, 1
      %p59 = por %p57, %p58
      %p60 = scmp.ne.s32.totalorder %s51, %s52
      %p61 = scmp.eq.s32.totalorder %s20, 0
      %p62 = por %p60, %p61
      %p63 = scmp.ne.s32.totalorder %s51, %s52
      %p64 = scmp.eq.s32.totalorder %s21, 1
      %p65 = por %p63, %p64
      %p67 = scmp.ne.s32.totalorder %s52, %s66
      %p68 = scmp.eq.s32.totalorder %s21, 0
      %p69 = por %p67, %p68
      %s71 = sadd.s32 %s70, 1
      %p74 = scmp.eq.s32.totalorder %s15, 1
      %p75 = scmp.ne.s32.totalorder %s70, %s72
      %p76 = scmp.eq.s32.totalorder %s15, 0
      %p77 = por %p75, %p76
      %p78 = scmp.ne.s32.totalorder %s70, %s72
      %p79 = scmp.eq.s32.totalorder %s20, 1
      %p80 = por %p78, %p79
      %p81 = scmp.ne.s32.totalorder %s72, %s73
      %p82 = scmp.eq.s32.totalorder %s20, 0
      %p83 = por %p81, %p82
      %p84 = scmp.ne.s32.totalorder %s72, %s73
      %p85 = scmp.eq.s32.totalorder %s21, 1
      %p86 = por %p84, %p85
      %p88 = scmp.ne.s32.totalorder %s73, %s87
      %p89 = scmp.eq.s32.totalorder %s21, 0
      %p90 = por %p88, %p89
      %s92 = sadd.s32 %s91, 1
      %p95 = scmp.eq.s32.totalorder %s15, 1
      %p96 = scmp.ne.s32.totalorder %s91, %s93
      %p97 = scmp.eq.s32.totalorder %s15, 0
      %p98 = por %p96, %p97
      %p99 = scmp.ne.s32.totalorder %s91, %s93
      %p100 = scmp.eq.s32.totalorder %s20, 1
      %p101 = por %p99, %p100
      %p102 = scmp.ne.s32.totalorder %s93, %s94
      %p103 = scmp.eq.s32.totalorder %s20, 0
      %p104 = por %p102, %p103
      %p105 = scmp.ne.s32.totalorder %s93, %s94
      %p106 = scmp.eq.s32.totalorder %s21, 1
      %p107 = por %p105, %p106
      %p109 = scmp.ne.s32.totalorder %s94, %s108
      %p110 = scmp.eq.s32.totalorder %s21, 0
      %p111 = por %p109, %p110
      %s113 = sadd.s32 %s112, 1
      %p116 = scmp.eq.s32.totalorder %s15, 1
      %p117 = scmp.ne.s32.totalorder %s112, %s114
      %p118 = scmp.eq.s32.totalorder %s15, 0
      %p119 = por %p117, %p118
      %p120 = scmp.ne.s32.totalorder %s112, %s114
      %p121 = scmp.eq.s32.totalorder %s20, 1
      %p122 = por %p120, %p121
      %p123 = scmp.ne.s32.totalorder %s114, %s115
      %p124 = scmp.eq.s32.totalorder %s20, 0
      %p125 = por %p123, %p124
      %p126 = scmp.ne.s32.totalorder %s114, %s115
      %p127 = scmp.eq.s32.totalorder %s21, 1
      %p128 = por %p126, %p127
      %p130 = scmp.ne.s32.totalorder %s115, %s129
      %p131 = scmp.eq.s32.totalorder %s21, 0
      %p132 = por %p130, %p131
      %s134 = sadd.s32 %s133, 1
      %p137 = scmp.eq.s32.totalorder %s15, 1
      %p138 = scmp.ne.s32.totalorder %s133, %s135
      %p139 = scmp.eq.s32.totalorder %s15, 0
      %p140 = por %p138, %p139
      %p141 = scmp.ne.s32.totalorder %s133, %s135
      %p142 = scmp.eq.s32.totalorder %s20, 1
      %p143 = por %p141, %p142
      %p144 = scmp.ne.s32.totalorder %s135, %s136
      %p145 = scmp.eq.s32.totalorder %s20, 0
      %p146 = por %p144, %p145
      %p147 = scmp.ne.s32.totalorder %s135, %s136
      %p148 = scmp.eq.s32.totalorder %s21, 1
      %p149 = por %p147, %p148
      %p151 = scmp.ne.s32.totalorder %s136, %s150
      %p152 = scmp.eq.s32.totalorder %s21, 0
      %p153 = por %p151, %p152
      %s154 = ssub.s32 %s15, %s22
      %p155 = scmp.eq.s32.totalorder %s154, 0
      %s157 = sadd.s32 %s156, 1
      %s158 = scalar_select %p155, %s156, %s157
      %p161 = pneg %p155
      %p162 = scmp.eq.s32.totalorder %s15, 1
      %p163 = por %p161, %p162
      %p164 = scmp.ne.s32.totalorder %s156, %s159
      %p165 = scmp.eq.s32.totalorder %s15, 0
      %p166 = por %p164, %p165
      %p167 = scmp.ne.s32.totalorder %s156, %s159
      %p168 = scmp.eq.s32.totalorder %s20, 1
      %p169 = por %p167, %p168
      %p170 = scmp.ne.s32.totalorder %s159, %s160
      %p171 = scmp.eq.s32.totalorder %s20, 0
      %p172 = por %p170, %p171
      %p173 = scmp.ne.s32.totalorder %s159, %s160
      %p174 = scmp.eq.s32.totalorder %s21, 1
      %p175 = por %p173, %p174
      %p177 = scmp.ne.s32.totalorder %s160, %s176
      %p178 = scmp.eq.s32.totalorder %s21, 0
      %p179 = por %p177, %p178
      %p180 = scmp.le.s32.totalorder 1, %s15
      %p181 = scmp.lt.s32.totalorder %s15, 3
      %p182 = pnand %p180, %p181
      %p183 = pneg %p182
      // Predicated region
      $region9: #{timm_model_forward.1} parent=5 // pred_check
        _
      $region10: #{timm_model_forward.1} parent=5 // pred_check_branch
        %185 = sbr.rel (%p182) target = $region12
      $region11: #{timm_model_forward.1} parent=5 // pred_region
        %s186 = ssub.s32 %s15, 1
        // Predicated region
        $region13: #{timm_model_forward.1} parent=11 // pred_check
          %p187 = pneg %p62
        $region14: #{timm_model_forward.1} parent=11 // pred_check_branch
          %189 = sbr.rel (%p187) target = $region16
        $region15: #{timm_model_forward.1} parent=11 // pred_region
          _
        $region16: #{timm_model_forward.1} parent=11 // pred_fallthru
          _
        // Predicated region
        $region17: #{timm_model_forward.1} parent=11 // pred_check
          %p190 = pneg %p83
        $region18: #{timm_model_forward.1} parent=11 // pred_check_branch
          %192 = sbr.rel (%p190) target = $region20
        $region19: #{timm_model_forward.1} parent=11 // pred_region
          _
        $region20: #{timm_model_forward.1} parent=11 // pred_fallthru
          _
        // Predicated region
        $region21: #{timm_model_forward.1} parent=11 // pred_check
          %p193 = pneg %p104
        $region22: #{timm_model_forward.1} parent=11 // pred_check_branch
          %195 = sbr.rel (%p193) target = $region24
        $region23: #{timm_model_forward.1} parent=11 // pred_region
          _
        $region24: #{timm_model_forward.1} parent=11 // pred_fallthru
          _
        // Predicated region
        $region25: #{timm_model_forward.1} parent=11 // pred_check
          %p196 = pneg %p125
        $region26: #{timm_model_forward.1} parent=11 // pred_check_branch
          %198 = sbr.rel (%p196) target = $region28
        $region27: #{timm_model_forward.1} parent=11 // pred_region
          _
        $region28: #{timm_model_forward.1} parent=11 // pred_fallthru
          _
        // Predicated region
        $region29: #{timm_model_forward.1} parent=11 // pred_check
          %p199 = pneg %p146
        $region30: #{timm_model_forward.1} parent=11 // pred_check_branch
          %201 = sbr.rel (%p199) target = $region32
        $region31: #{timm_model_forward.1} parent=11 // pred_region
          _
        $region32: #{timm_model_forward.1} parent=11 // pred_fallthru
          _
      $region12: #{timm_model_forward.1} parent=5 // pred_fallthru
        _
      %p202 = scmp.lt.s32.totalorder %s15, 2
      // Predicated region
      $region33: #{timm_model_forward.1} parent=5 // pred_check
        %p203 = pneg %p202
      $region34: #{timm_model_forward.1} parent=5 // pred_check_branch
        %205 = sbr.rel (%p203) target = $region36
      $region35: #{timm_model_forward.1} parent=5 // pred_region
        // Predicated region
        $region37: #{timm_model_forward.1} parent=35 // pred_check
          %p206 = pneg %p35
        $region38: #{timm_model_forward.1} parent=35 // pred_check_branch
          %208 = sbr.rel (%p206) target = $region40
        $region39: #{timm_model_forward.1} parent=35 // pred_region
          %p209 = scmp.lt.s32.totalorder %s15, 1
          %s210 = scalar_select %p209, %s15, 1
          %s211 = smul.addr %s210, 41
          %s212 = smul.addr %s211, 4
          %s213 = scalar_lea.vmem %s0, %s212
        $region40: #{timm_model_forward.1} parent=35 // pred_fallthru
          _
      $region36: #{timm_model_forward.1} parent=5 // pred_fallthru
        _
      %p214 = scmp.le.s32.totalorder 1, %s15
      %p215 = scmp.lt.s32.totalorder %s15, 3
      %p216 = pnand %p214, %p215
      %p217 = pneg %p216
      // Predicated region
      $region41: #{timm_model_forward.1} parent=5 // pred_check
        _
      $region42: #{timm_model_forward.1} parent=5 // pred_check_branch
        %219 = sbr.rel (%p216) target = $region44
      $region43: #{timm_model_forward.1} parent=5 // pred_region
        %s220 = ssub.s32 %s15, 1
        %p221 = scmp.lt.s32.totalorder %s20, 1
        %s222 = scalar_select %p221, %s20, 1
        %s223 = smul.addr %s222, 41
        %s224 = smul.addr %s223, 4
        %s225 = scalar_lea.vmem %s0, %s224
        %p226 = pneg %p41
        %p227 = pneg %p38
        %p228 = pneg %p62
        %p229 = pneg %p59
        %p230 = pneg %p83
        %p231 = pneg %p80
        %p232 = pneg %p104
        %p233 = pneg %p101
        %p234 = pneg %p125
        %p235 = pneg %p122
        %p236 = pneg %p146
        %p237 = pneg %p143
        %p238 = pneg %p172
        %p239 = pneg %p169
        %s240 = sand.u32 %s159, 1
        %s241 = scalar_lea.sflag [#allocation3], %s240
        %s242 = sand.u32 %s159, 1
        %s243 = scalar_lea.vmem [#allocation2], %s242
        %p244 = scmp.lt.s32.totalorder %s20, 1
        %s245 = scalar_select %p244, %s20, 1
        %s246 = smul.addr %s245, 41
        %s247 = smul.addr %s246, 4
        %s248 = scalar_lea.vmem %s0, %s247
        %v250 = vld [vmem:[%s248] sm:$0xf]
        %v251 = vld [vmem:[%s248 + $0x4] sm:$0xf]
        %v252 = vld [vmem:[%s248 + $0x8] sm:$0xf]
        %v253 = vld [vmem:[%s248 + $0xc] sm:$0xf]
        %v254 = vld [vmem:[%s248 + $0x10] sm:$0xf]
        %v255 = vld [vmem:[%s248 + $0x14] sm:$0xf]
        %v256 = vld [vmem:[%s248 + $0x18] sm:$0xf]
        %v257 = vld [vmem:[%s248 + $0x1c] sm:$0xf]
        %v258 = vld [vmem:[%s248 + $0x20] sm:$0xf]
        %v259 = vld [vmem:[%s248 + $0x24] sm:$0xf]
        %v260 = vld [vmem:[%s248 + $0x28] sm:$0xf]
        %v261 = vld [vmem:[%s248 + $0x2c] sm:$0xf]
        %v262 = vld [vmem:[%s248 + $0x30] sm:$0xf]
        %v263 = vld [vmem:[%s248 + $0x34] sm:$0xf]
        %v264 = vld [vmem:[%s248 + $0x38] sm:$0xf]
        %v265 = vld [vmem:[%s248 + $0x3c] sm:$0xf]
        %v266 = vld [vmem:[%s248 + $0x40] sm:$0xf]
        %v267 = vld [vmem:[%s248 + $0x44] sm:$0xf]
        %v268 = vld [vmem:[%s248 + $0x48] sm:$0xf]
        %v269 = vld [vmem:[%s248 + $0x4c] sm:$0xf]
        %v270 = vld [vmem:[%s248 + $0x50] sm:$0xf]
        %v271 = vld [vmem:[%s248 + $0x54] sm:$0xf]
        %v272 = vld [vmem:[%s248 + $0x58] sm:$0xf]
        %v273 = vld [vmem:[%s248 + $0x5c] sm:$0xf]
        %v274 = vld [vmem:[%s248 + $0x60] sm:$0xf]
        %v275 = vld [vmem:[%s248 + $0x64] sm:$0xf]
        %v276 = vld [vmem:[%s248 + $0x68] sm:$0xf]
        %v277 = vld [vmem:[%s248 + $0x6c] sm:$0xf]
        %v278 = vld [vmem:[%s248 + $0x70] sm:$0xf]
        %v279 = vld [vmem:[%s248 + $0x74] sm:$0xf]
        %v280 = vld [vmem:[%s248 + $0x78] sm:$0xf]
        %v281 = vld [vmem:[%s248 + $0x7c] sm:$0xf]
        %v282 = vld [vmem:[%s248 + $0x80] sm:$0xf]
        %v283 = vld [vmem:[%s248 + $0x84] sm:$0xf]
        %v284 = vld [vmem:[%s248 + $0x88] sm:$0xf]
        %v285 = vld [vmem:[%s248 + $0x8c] sm:$0xf]
        %v286 = vld [vmem:[%s248 + $0x90] sm:$0xf]
        %v287 = vld [vmem:[%s248 + $0x94] sm:$0xf]
        %v288 = vld [vmem:[%s248 + $0x98] sm:$0xf]
        %v289 = vld [vmem:[%s248 + $0x9c] sm:$0xf]
        %v290 = vld [vmem:[%s248 + $0xa0] sm:$0xf]
        %v291 = vld [vmem:[%s1] sm:$0x3]
        %s292 = scalar_lea.vmem %s1, 2
        %v293 = vld [vmem:[%s292] sm:$0x3]
        %v331 = vunpack.c.l.b16 %v250
        %v332 = vunpack.c.l.b16 %v251
        %v333 = vunpack.c.l.b16 %v252
        %v334 = vunpack.c.l.b16 %v253
        %v335 = vunpack.c.l.b16 %v254
        %v336 = vunpack.c.l.b16 %v255
        %v337 = vunpack.c.l.b16 %v256
        %v338 = vunpack.c.l.b16 %v257
        %v339 = vunpack.c.l.b16 %v258
        %v340 = vunpack.c.l.b16 %v259
        %v341 = vunpack.c.l.b16 %v260
        %v342 = vunpack.c.l.b16 %v261
        %v343 = vunpack.c.l.b16 %v262
        %v344 = vunpack.c.l.b16 %v263
        %v345 = vunpack.c.l.b16 %v264
        %v346 = vunpack.c.l.b16 %v265
        %v347 = vunpack.c.l.b16 %v266
        %v348 = vunpack.c.l.b16 %v267
        %v349 = vunpack.c.l.b16 %v268
        %v350 = vunpack.c.l.b16 %v269
        %v351 = vunpack.c.l.b16 %v270
        %v352 = vunpack.c.l.b16 %v271
        %v353 = vunpack.c.l.b16 %v272
        %v354 = vunpack.c.l.b16 %v273
        %v355 = vunpack.c.l.b16 %v274
        %v356 = vunpack.c.l.b16 %v275
        %v357 = vunpack.c.l.b16 %v276
        %v358 = vunpack.c.l.b16 %v277
        %v359 = vunpack.c.l.b16 %v278
        %v360 = vunpack.c.l.b16 %v279
        %v361 = vunpack.c.l.b16 %v280
        %v362 = vunpack.c.l.b16 %v281
        %v363 = vunpack.c.l.b16 %v282
        %v364 = vunpack.c.l.b16 %v283
        %v365 = vunpack.c.l.b16 %v284
        %v366 = vunpack.c.l.b16 %v285
        %v367 = vunpack.c.l.b16 %v286
        %v368 = vpack.c.b16 %v332, %v331
        %v369 = vpack.c.b16 %v334, %v333
        %v370 = vpack.c.b16 %v336, %v335
        %v371 = vpack.c.b16 %v338, %v337
        %v372 = vpack.c.b16 %v340, %v339
        %v373 = vpack.c.b16 %v342, %v341
        %v374 = vpack.c.b16 %v344, %v343
        %v375 = vpack.c.b16 %v346, %v345
        %v376 = vpack.c.b16 %v348, %v347
        %v377 = vpack.c.b16 %v350, %v349
        %v378 = vpack.c.b16 %v352, %v351
        %v379 = vpack.c.b16 %v354, %v353
        %v380 = vpack.c.b16 %v356, %v355
        %v381 = vpack.c.b16 %v358, %v357
        %v382 = vpack.c.b16 %v360, %v359
        %v383 = vpack.c.b16 %v362, %v361
        %v384 = vpack.c.b16 %v364, %v363
        %v385 = vpack.c.b16 %v366, %v365
        %v386 = vpack.c.b16 %v367, %v367
        %vm387 = vsmask.f32 7424
        %v389 = vshrl.u32 %v368, 16
        %v391 = vshll.u32 %v368, 16
        %v393 = vrot.slane %v391, 1
        %v394 = vor.u32 %v389, %v393
        %v396 = vshll.u32 %v369, 16
        %v398 = vrot.slane %v396, 1
        %v399 = vsel %vm387, %v394, %v398
        %v400 = vshrl.u32 %v369, 16
        %v402 = vor.u32 %v400, %v398
        %v404 = vshll.u32 %v370, 16
        %v406 = vrot.slane %v404, 1
        %v407 = vsel %vm387, %v402, %v406
        %v408 = vshrl.u32 %v370, 16
        %v410 = vor.u32 %v408, %v406
        %v412 = vshll.u32 %v371, 16
        %v414 = vrot.slane %v412, 1
        %v415 = vsel %vm387, %v410, %v414
        %v416 = vshrl.u32 %v371, 16
        %v418 = vor.u32 %v416, %v414
        %v420 = vshll.u32 %v372, 16
        %v422 = vrot.slane %v420, 1
        %v423 = vsel %vm387, %v418, %v422
        %v424 = vshrl.u32 %v372, 16
        %v426 = vor.u32 %v424, %v422
        %v428 = vshll.u32 %v373, 16
        %v430 = vrot.slane %v428, 1
        %v431 = vsel %vm387, %v426, %v430
        %v432 = vshrl.u32 %v373, 16
        %v434 = vor.u32 %v432, %v430
        %v436 = vshll.u32 %v374, 16
        %v438 = vrot.slane %v436, 1
        %v439 = vsel %vm387, %v434, %v438
        %v440 = vshrl.u32 %v374, 16
        %v442 = vor.u32 %v440, %v438
        %v444 = vshll.u32 %v375, 16
        %v446 = vrot.slane %v444, 1
        %v447 = vsel %vm387, %v442, %v446
        %v448 = vshrl.u32 %v375, 16
        %v450 = vor.u32 %v448, %v446
        %v452 = vshll.u32 %v376, 16
        %v454 = vrot.slane %v452, 1
        %v455 = vsel %vm387, %v450, %v454
        %v456 = vshrl.u32 %v376, 16
        %v458 = vor.u32 %v456, %v454
        %v460 = vshll.u32 %v377, 16
        %v462 = vrot.slane %v460, 1
        %v463 = vsel %vm387, %v458, %v462
        %v464 = vshrl.u32 %v377, 16
        %v466 = vor.u32 %v464, %v462
        %v468 = vshll.u32 %v378, 16
        %v470 = vrot.slane %v468, 1
        %v471 = vsel %vm387, %v466, %v470
        %v472 = vshrl.u32 %v378, 16
        %v474 = vor.u32 %v472, %v470
        %v476 = vshll.u32 %v379, 16
        %v478 = vrot.slane %v476, 1
        %v479 = vsel %vm387, %v474, %v478
        %v480 = vshrl.u32 %v379, 16
        %v482 = vor.u32 %v480, %v478
        %v484 = vshll.u32 %v380, 16
        %v486 = vrot.slane %v484, 1
        %v487 = vsel %vm387, %v482, %v486
        %v488 = vshrl.u32 %v380, 16
        %v490 = vor.u32 %v488, %v486
        %v492 = vshll.u32 %v381, 16
        %v494 = vrot.slane %v492, 1
        %v495 = vsel %vm387, %v490, %v494
        %v496 = vshrl.u32 %v381, 16
        %v498 = vor.u32 %v496, %v494
        %v500 = vshll.u32 %v382, 16
        %v502 = vrot.slane %v500, 1
        %v503 = vsel %vm387, %v498, %v502
        %v504 = vshrl.u32 %v382, 16
        %v506 = vor.u32 %v504, %v502
        %v508 = vshll.u32 %v383, 16
        %v510 = vrot.slane %v508, 1
        %v511 = vsel %vm387, %v506, %v510
        %v512 = vshrl.u32 %v383, 16
        %v514 = vor.u32 %v512, %v510
        %v516 = vshll.u32 %v384, 16
        %v518 = vrot.slane %v516, 1
        %v519 = vsel %vm387, %v514, %v518
        %v520 = vshrl.u32 %v384, 16
        %v522 = vor.u32 %v520, %v518
        %v524 = vshll.u32 %v385, 16
        %v526 = vrot.slane %v524, 1
        %v527 = vsel %vm387, %v522, %v526
        %v528 = vshrl.u32 %v385, 16
        %v530 = vor.u32 %v528, %v526
        %v532 = vshll.u32 %v386, 16
        %v534 = vrot.slane %v532, 1
        %v535 = vsel %vm387, %v530, %v534
        %vm536 = vcmask 31744
        %v538 = vsel %vm536, %v399, 0
        %v541 = vsel %vm536, %v407, 0
        %v544 = vsel %vm536, %v415, 0
        %v547 = vsel %vm536, %v423, 0
        %v550 = vsel %vm536, %v431, 0
        %v553 = vsel %vm536, %v439, 0
        %v556 = vsel %vm536, %v447, 0
        %v559 = vsel %vm536, %v455, 0
        %v562 = vsel %vm536, %v463, 0
        %v565 = vsel %vm536, %v471, 0
        %v568 = vsel %vm536, %v479, 0
        %v571 = vsel %vm536, %v487, 0
        %v574 = vsel %vm536, %v495, 0
        %v577 = vsel %vm536, %v503, 0
        %v580 = vsel %vm536, %v511, 0
        %v583 = vsel %vm536, %v519, 0
        %v586 = vsel %vm536, %v527, 0
        %v589 = vsel %vm536, %v535, 0
        %vm591 = vcmask 1041408
        %v593 = vsel %vm591, %v293, 0
        %595 = vmatprep.subr.bf16.mxu0 0
        %596 = vmatpush1.bf16.msra.mxu0 0
        %597 = vmatprep.subr.bf16.mxu0 0
        %598 = vmatpush1.bf16.msra.mxu0 0
        %599 = vmatprep.subr.bf16.mxu0 0
        %600 = vmatpush1.bf16.msra.mxu0 0
        %601 = vmatprep.subr.bf16.mxu0 0
        %602 = vmatpush1.bf16.msra.mxu0 0
        %603 = vmatprep.subr.bf16.mxu0 0
        %604 = vmatpush1.bf16.msra.mxu0 0
        %605 = vmatprep.subr.bf16.mxu0 0
        %606 = vmatpush1.bf16.msra.mxu0 0
        %607 = vmatprep.subr.bf16.mxu0 0
        %608 = vmatpush1.bf16.msra.mxu0 0
        %609 = vmatprep.subr.bf16.mxu0 0
        %610 = vmatpush1.bf16.msra.mxu0 %v593
        %611 = vmatprep.subr.bf16.mxu0 0
        %612 = vmatpush2.bf16.msra.mxu0 0
        %613 = vmatprep.subr.bf16.mxu0 0
        %614 = vmatpush2.bf16.msra.mxu0 0
        %615 = vmatprep.subr.bf16.mxu0 0
        %616 = vmatpush2.bf16.msra.mxu0 0
        %617 = vmatprep.subr.bf16.mxu0 0
        %618 = vmatpush2.bf16.msra.mxu0 0
        %619 = vmatprep.subr.bf16.mxu0 0
        %620 = vmatpush2.bf16.msra.mxu0 0
        %621 = vmatprep.subr.bf16.mxu0 0
        %622 = vmatpush2.bf16.msra.mxu0 0
        %623 = vmatprep.subr.bf16.mxu0 0
        %624 = vmatpush2.bf16.msra.mxu0 0
        %625 = vmatprep.subr.bf16.mxu0 0
        %626 = vmatpush2.bf16.msra.mxu0 0
        %627 = vmatprep.mubr.bf16.mxu0 0
        %628 = vmatmul.mubr.bf16.gmra.mxu0 %v538
        %v629 = vpop.f32.mrf.mxu0
        %v630 = vadd.f32 0.0, %v629
        %v631 = vpop.f32.mrf.mxu0
        %v632 = vpop.f32.mrf.mxu0
        %v633 = vadd.f32 0.0, %v632
        %v634 = vpop.f32.mrf.mxu0
        %635 = vmatprep.mubr.bf16.mxu0 0
        %636 = vmatmul.mubr.bf16.gmra.mxu0 %v541
        %v637 = vpop.f32.mrf.mxu0
        %v638 = vadd.f32 0.0, %v637
        %v639 = vpop.f32.mrf.mxu0
        %v640 = vpop.f32.mrf.mxu0
        %v641 = vadd.f32 0.0, %v640
        %v642 = vpop.f32.mrf.mxu0
        %643 = vmatprep.mubr.bf16.mxu0 0
        %644 = vmatmul.mubr.bf16.gmra.mxu0 %v544
        %v645 = vpop.f32.mrf.mxu0
        %v646 = vadd.f32 0.0, %v645
        %v647 = vpop.f32.mrf.mxu0
        %v648 = vpop.f32.mrf.mxu0
        %v649 = vadd.f32 0.0, %v648
        %v650 = vpop.f32.mrf.mxu0
        %651 = vmatprep.mubr.bf16.mxu0 0
        %652 = vmatmul.mubr.bf16.gmra.mxu0 %v547
        %v653 = vpop.f32.mrf.mxu0
        %v654 = vadd.f32 0.0, %v653
        %v655 = vpop.f32.mrf.mxu0
        %v656 = vpop.f32.mrf.mxu0
        %v657 = vadd.f32 0.0, %v656
        %v658 = vpop.f32.mrf.mxu0
        %659 = vmatprep.mubr.bf16.mxu0 0
        %660 = vmatmul.mubr.bf16.gmra.mxu0 %v550
        %v661 = vpop.f32.mrf.mxu0
        %v662 = vadd.f32 0.0, %v661
        %v663 = vpop.f32.mrf.mxu0
        %v664 = vpop.f32.mrf.mxu0
        %v665 = vadd.f32 0.0, %v664
        %v666 = vpop.f32.mrf.mxu0
        %667 = vmatprep.mubr.bf16.mxu0 0
        %668 = vmatmul.mubr.bf16.gmra.mxu0 %v553
        %v669 = vpop.f32.mrf.mxu0
        %v670 = vadd.f32 0.0, %v669
        %v671 = vpop.f32.mrf.mxu0
        %v672 = vpop.f32.mrf.mxu0
        %v673 = vadd.f32 0.0, %v672
        %v674 = vpop.f32.mrf.mxu0
        %675 = vmatprep.mubr.bf16.mxu0 0
        %676 = vmatmul.mubr.bf16.gmra.mxu0 %v556
        %v677 = vpop.f32.mrf.mxu0
        %v678 = vadd.f32 0.0, %v677
        %v679 = vpop.f32.mrf.mxu0
        %v680 = vpop.f32.mrf.mxu0
        %v681 = vadd.f32 0.0, %v680
        %v682 = vpop.f32.mrf.mxu0
        %683 = vmatprep.mubr.bf16.mxu0 0
        %684 = vmatmul.mubr.bf16.gmra.mxu0 %v559
        %v685 = vpop.f32.mrf.mxu0
        %v686 = vadd.f32 0.0, %v685
        %v687 = vpop.f32.mrf.mxu0
        %v688 = vpop.f32.mrf.mxu0
        %v689 = vadd.f32 0.0, %v688
        %v690 = vpop.f32.mrf.mxu0
        %691 = vmatprep.mubr.bf16.mxu0 0
        %692 = vmatmul.mubr.bf16.gmra.mxu0 %v562
        %v693 = vpop.f32.mrf.mxu0
        %v694 = vadd.f32 0.0, %v693
        %v695 = vpop.f32.mrf.mxu0
        %v696 = vpop.f32.mrf.mxu0
        %v697 = vadd.f32 0.0, %v696
        %v698 = vpop.f32.mrf.mxu0
        %699 = vmatprep.mubr.bf16.mxu0 0
        %700 = vmatmul.mubr.bf16.gmra.mxu0 %v565
        %v701 = vpop.f32.mrf.mxu0
        %v702 = vadd.f32 0.0, %v701
        %v703 = vpop.f32.mrf.mxu0
        %v704 = vpop.f32.mrf.mxu0
        %v705 = vadd.f32 0.0, %v704
        %v706 = vpop.f32.mrf.mxu0
        %707 = vmatprep.mubr.bf16.mxu0 0
        %708 = vmatmul.mubr.bf16.gmra.mxu0 %v568
        %v709 = vpop.f32.mrf.mxu0
        %v710 = vadd.f32 0.0, %v709
        %v711 = vpop.f32.mrf.mxu0
        %v712 = vpop.f32.mrf.mxu0
        %v713 = vadd.f32 0.0, %v712
        %v714 = vpop.f32.mrf.mxu0
        %715 = vmatprep.mubr.bf16.mxu0 0
        %716 = vmatmul.mubr.bf16.gmra.mxu0 %v571
        %v717 = vpop.f32.mrf.mxu0
        %v718 = vadd.f32 0.0, %v717
        %v719 = vpop.f32.mrf.mxu0
        %v720 = vpop.f32.mrf.mxu0
        %v721 = vadd.f32 0.0, %v720
        %v722 = vpop.f32.mrf.mxu0
        %723 = vmatprep.mubr.bf16.mxu0 0
        %724 = vmatmul.mubr.bf16.gmra.mxu0 %v574
        %v725 = vpop.f32.mrf.mxu0
        %v726 = vadd.f32 0.0, %v725
        %v727 = vpop.f32.mrf.mxu0
        %v728 = vpop.f32.mrf.mxu0
        %v729 = vadd.f32 0.0, %v728
        %v730 = vpop.f32.mrf.mxu0
        %731 = vmatprep.mubr.bf16.mxu0 0
        %732 = vmatmul.mubr.bf16.gmra.mxu0 %v577
        %v733 = vpop.f32.mrf.mxu0
        %v734 = vadd.f32 0.0, %v733
        %v735 = vpop.f32.mrf.mxu0
        %v736 = vpop.f32.mrf.mxu0
        %v737 = vadd.f32 0.0, %v736
        %v738 = vpop.f32.mrf.mxu0
        %739 = vmatprep.mubr.bf16.mxu0 0
        %740 = vmatmul.mubr.bf16.gmra.mxu0 %v580
        %v741 = vpop.f32.mrf.mxu0
        %v742 = vadd.f32 0.0, %v741
        %v743 = vpop.f32.mrf.mxu0
        %v744 = vpop.f32.mrf.mxu0
        %v745 = vadd.f32 0.0, %v744
        %v746 = vpop.f32.mrf.mxu0
        %747 = vmatprep.mubr.bf16.mxu0 0
        %748 = vmatmul.mubr.bf16.gmra.mxu0 %v583
        %v749 = vpop.f32.mrf.mxu0
        %v750 = vadd.f32 0.0, %v749
        %v751 = vpop.f32.mrf.mxu0
        %v752 = vpop.f32.mrf.mxu0
        %v753 = vadd.f32 0.0, %v752
        %v754 = vpop.f32.mrf.mxu0
        %755 = vmatprep.mubr.bf16.mxu0 0
        %756 = vmatmul.mubr.bf16.gmra.mxu0 %v586
        %v757 = vpop.f32.mrf.mxu0
        %v758 = vadd.f32 0.0, %v757
        %v759 = vpop.f32.mrf.mxu0
        %v760 = vpop.f32.mrf.mxu0
        %v761 = vadd.f32 0.0, %v760
        %v762 = vpop.f32.mrf.mxu0
        %763 = vmatprep.mubr.bf16.mxu0 0
        %764 = vmatmul.mubr.bf16.gmra.mxu0 %v589
        %v765 = vpop.f32.mrf.mxu0
        %v766 = vadd.f32 0.0, %v765
        %v767 = vpop.f32.mrf.mxu0
        %v768 = vpop.f32.mrf.mxu0
        %v769 = vadd.f32 0.0, %v768
        %v770 = vpop.f32.mrf.mxu0
        %771 = vdwg.mxu0
        %v772 = vsel %vm536, %v368, 0
        %v774 = vsel %vm536, %v369, 0
        %v776 = vsel %vm536, %v370, 0
        %v778 = vsel %vm536, %v371, 0
        %v780 = vsel %vm536, %v372, 0
        %v782 = vsel %vm536, %v373, 0
        %v784 = vsel %vm536, %v374, 0
        %v786 = vsel %vm536, %v375, 0
        %v788 = vsel %vm536, %v376, 0
        %v790 = vsel %vm536, %v377, 0
        %v792 = vsel %vm536, %v378, 0
        %v794 = vsel %vm536, %v379, 0
        %v796 = vsel %vm536, %v380, 0
        %v798 = vsel %vm536, %v381, 0
        %v800 = vsel %vm536, %v382, 0
        %v802 = vsel %vm536, %v383, 0
        %v804 = vsel %vm536, %v384, 0
        %v806 = vsel %vm536, %v385, 0
        %v809 = vsel %vm591, %v291, 0
        %811 = vmatprep.subr.bf16.mxu0 0
        %812 = vmatpush1.bf16.msra.mxu0 0
        %813 = vmatprep.subr.bf16.mxu0 0
        %814 = vmatpush1.bf16.msra.mxu0 0
        %815 = vmatprep.subr.bf16.mxu0 0
        %816 = vmatpush1.bf16.msra.mxu0 0
        %817 = vmatprep.subr.bf16.mxu0 0
        %818 = vmatpush1.bf16.msra.mxu0 0
        %819 = vmatprep.subr.bf16.mxu0 0
        %820 = vmatpush1.bf16.msra.mxu0 0
        %821 = vmatprep.subr.bf16.mxu0 0
        %822 = vmatpush1.bf16.msra.mxu0 0
        %823 = vmatprep.subr.bf16.mxu0 0
        %824 = vmatpush1.bf16.msra.mxu0 0
        %825 = vmatprep.subr.bf16.mxu0 0
        %826 = vmatpush1.bf16.msra.mxu0 %v809
        %827 = vmatprep.subr.bf16.mxu0 0
        %828 = vmatpush2.bf16.msra.mxu0 0
        %829 = vmatprep.subr.bf16.mxu0 0
        %830 = vmatpush2.bf16.msra.mxu0 0
        %831 = vmatprep.subr.bf16.mxu0 0
        %832 = vmatpush2.bf16.msra.mxu0 0
        %833 = vmatprep.subr.bf16.mxu0 0
        %834 = vmatpush2.bf16.msra.mxu0 0
        %835 = vmatprep.subr.bf16.mxu0 0
        %836 = vmatpush2.bf16.msra.mxu0 0
        %837 = vmatprep.subr.bf16.mxu0 0
        %838 = vmatpush2.bf16.msra.mxu0 0
        %839 = vmatprep.subr.bf16.mxu0 0
        %840 = vmatpush2.bf16.msra.mxu0 0
        %841 = vmatprep.subr.bf16.mxu0 0
        %842 = vmatpush2.bf16.msra.mxu0 0
        %843 = vmatprep.mubr.bf16.mxu0 0
        %844 = vmatmul.mubr.bf16.gmra.mxu0 %v772
        %v845 = vpop.f32.mrf.mxu0
        %v846 = vadd.f32 %v630, %v845
        %v847 = vpop.f32.mrf.mxu0
        %v848 = vpop.f32.mrf.mxu0
        %v849 = vadd.f32 %v633, %v848
        %v850 = vpop.f32.mrf.mxu0
        %851 = vmatprep.mubr.bf16.mxu0 0
        %852 = vmatmul.mubr.bf16.gmra.mxu0 %v774
        %v853 = vpop.f32.mrf.mxu0
        %v854 = vadd.f32 %v638, %v853
        %v855 = vpop.f32.mrf.mxu0
        %v856 = vpop.f32.mrf.mxu0
        %v857 = vadd.f32 %v641, %v856
        %v858 = vpop.f32.mrf.mxu0
        %859 = vmatprep.mubr.bf16.mxu0 0
        %860 = vmatmul.mubr.bf16.gmra.mxu0 %v776
        %v861 = vpop.f32.mrf.mxu0
        %v862 = vadd.f32 %v646, %v861
        %v863 = vpop.f32.mrf.mxu0
        %v864 = vpop.f32.mrf.mxu0
        %v865 = vadd.f32 %v649, %v864
        %v866 = vpop.f32.mrf.mxu0
        %867 = vmatprep.mubr.bf16.mxu0 0
        %868 = vmatmul.mubr.bf16.gmra.mxu0 %v778
        %v869 = vpop.f32.mrf.mxu0
        %v870 = vadd.f32 %v654, %v869
        %v871 = vpop.f32.mrf.mxu0
        %v872 = vpop.f32.mrf.mxu0
        %v873 = vadd.f32 %v657, %v872
        %v874 = vpop.f32.mrf.mxu0
        %875 = vmatprep.mubr.bf16.mxu0 0
        %876 = vmatmul.mubr.bf16.gmra.mxu0 %v780
        %v877 = vpop.f32.mrf.mxu0
        %v878 = vadd.f32 %v662, %v877
        %v879 = vpop.f32.mrf.mxu0
        %v880 = vpop.f32.mrf.mxu0
        %v881 = vadd.f32 %v665, %v880
        %v882 = vpop.f32.mrf.mxu0
        %883 = vmatprep.mubr.bf16.mxu0 0
        %884 = vmatmul.mubr.bf16.gmra.mxu0 %v782
        %v885 = vpop.f32.mrf.mxu0
        %v886 = vadd.f32 %v670, %v885
        %v887 = vpop.f32.mrf.mxu0
        %v888 = vpop.f32.mrf.mxu0
        %v889 = vadd.f32 %v673, %v888
        %v890 = vpop.f32.mrf.mxu0
        %891 = vmatprep.mubr.bf16.mxu0 0
        %892 = vmatmul.mubr.bf16.gmra.mxu0 %v784
        %v893 = vpop.f32.mrf.mxu0
        %v894 = vadd.f32 %v678, %v893
        %v895 = vpop.f32.mrf.mxu0
        %v896 = vpop.f32.mrf.mxu0
        %v897 = vadd.f32 %v681, %v896
        %v898 = vpop.f32.mrf.mxu0
        %899 = vmatprep.mubr.bf16.mxu0 0
        %900 = vmatmul.mubr.bf16.gmra.mxu0 %v786
        %v901 = vpop.f32.mrf.mxu0
        %v902 = vadd.f32 %v686, %v901
        %v903 = vpop.f32.mrf.mxu0
        %v904 = vpop.f32.mrf.mxu0
        %v905 = vadd.f32 %v689, %v904
        %v906 = vpop.f32.mrf.mxu0
        %907 = vmatprep.mubr.bf16.mxu0 0
        %908 = vmatmul.mubr.bf16.gmra.mxu0 %v788
        %v909 = vpop.f32.mrf.mxu0
        %v910 = vadd.f32 %v694, %v909
        %v911 = vpop.f32.mrf.mxu0
        %v912 = vpop.f32.mrf.mxu0
        %v913 = vadd.f32 %v697, %v912
        %v914 = vpop.f32.mrf.mxu0
        %915 = vmatprep.mubr.bf16.mxu0 0
        %916 = vmatmul.mubr.bf16.gmra.mxu0 %v790
        %v917 = vpop.f32.mrf.mxu0
        %v918 = vadd.f32 %v702, %v917
        %v919 = vpop.f32.mrf.mxu0
        %v920 = vpop.f32.mrf.mxu0
        %v921 = vadd.f32 %v705, %v920
        %v922 = vpop.f32.mrf.mxu0
        %923 = vmatprep.mubr.bf16.mxu0 0
        %924 = vmatmul.mubr.bf16.gmra.mxu0 %v792
        %v925 = vpop.f32.mrf.mxu0
        %v926 = vadd.f32 %v710, %v925
        %v927 = vpop.f32.mrf.mxu0
        %v928 = vpop.f32.mrf.mxu0
        %v929 = vadd.f32 %v713, %v928
        %v930 = vpop.f32.mrf.mxu0
        %931 = vmatprep.mubr.bf16.mxu0 0
        %932 = vmatmul.mubr.bf16.gmra.mxu0 %v794
        %v933 = vpop.f32.mrf.mxu0
        %v934 = vadd.f32 %v718, %v933
        %v935 = vpop.f32.mrf.mxu0
        %v936 = vpop.f32.mrf.mxu0
        %v937 = vadd.f32 %v721, %v936
        %v938 = vpop.f32.mrf.mxu0
        %939 = vmatprep.mubr.bf16.mxu0 0
        %940 = vmatmul.mubr.bf16.gmra.mxu0 %v796
        %v941 = vpop.f32.mrf.mxu0
        %v942 = vadd.f32 %v726, %v941
        %v943 = vpop.f32.mrf.mxu0
        %v944 = vpop.f32.mrf.mxu0
        %v945 = vadd.f32 %v729, %v944
        %v946 = vpop.f32.mrf.mxu0
        %947 = vmatprep.mubr.bf16.mxu0 0
        %948 = vmatmul.mubr.bf16.gmra.mxu0 %v798
        %v949 = vpop.f32.mrf.mxu0
        %v950 = vadd.f32 %v734, %v949
        %v951 = vpop.f32.mrf.mxu0
        %v952 = vpop.f32.mrf.mxu0
        %v953 = vadd.f32 %v737, %v952
        %v954 = vpop.f32.mrf.mxu0
        %955 = vmatprep.mubr.bf16.mxu0 0
        %956 = vmatmul.mubr.bf16.gmra.mxu0 %v800
        %v957 = vpop.f32.mrf.mxu0
        %v958 = vadd.f32 %v742, %v957
        %v959 = vpop.f32.mrf.mxu0
        %v960 = vpop.f32.mrf.mxu0
        %v961 = vadd.f32 %v745, %v960
        %v962 = vpop.f32.mrf.mxu0
        %963 = vmatprep.mubr.bf16.mxu0 0
        %964 = vmatmul.mubr.bf16.gmra.mxu0 %v802
        %v965 = vpop.f32.mrf.mxu0
        %v966 = vadd.f32 %v750, %v965
        %v967 = vpop.f32.mrf.mxu0
        %v968 = vpop.f32.mrf.mxu0
        %v969 = vadd.f32 %v753, %v968
        %v970 = vpop.f32.mrf.mxu0
        %971 = vmatprep.mubr.bf16.mxu0 0
        %972 = vmatmul.mubr.bf16.gmra.mxu0 %v804
        %v973 = vpop.f32.mrf.mxu0
        %v974 = vadd.f32 %v758, %v973
        %v975 = vpop.f32.mrf.mxu0
        %v976 = vpop.f32.mrf.mxu0
        %v977 = vadd.f32 %v761, %v976
        %v978 = vpop.f32.mrf.mxu0
        %979 = vmatprep.mubr.bf16.mxu0 0
        %980 = vmatmul.mubr.bf16.gmra.mxu0 %v806
        %v981 = vpop.f32.mrf.mxu0
        %v982 = vadd.f32 %v766, %v981
        %v983 = vpop.f32.mrf.mxu0
        %v984 = vpop.f32.mrf.mxu0
        %v985 = vadd.f32 %v769, %v984
        %v986 = vpop.f32.mrf.mxu0
        %987 = vdwg.mxu0
        %s988 = scalar_lea.vmem %s1, 4
        %v989 = vld [vmem:[%s988] sm:$0x3]
        %vm990 = vcmask 1046528
        %v991 = vrot.slane %v368, 1
        %v992 = vrot.slane %v369, 1
        %v993 = vsel %vm990, %v991, %v992
        %v994 = vrot.slane %v370, 1
        %v995 = vsel %vm990, %v992, %v994
        %v996 = vrot.slane %v371, 1
        %v997 = vsel %vm990, %v994, %v996
        %v998 = vrot.slane %v372, 1
        %v999 = vsel %vm990, %v996, %v998
        %v1000 = vrot.slane %v373, 1
        %v1001 = vsel %vm990, %v998, %v1000
        %v1002 = vrot.slane %v374, 1
        %v1003 = vsel %vm990, %v1000, %v1002
        %v1004 = vrot.slane %v375, 1
        %v1005 = vsel %vm990, %v1002, %v1004
        %v1006 = vrot.slane %v376, 1
        %v1007 = vsel %vm990, %v1004, %v1006
        %v1008 = vrot.slane %v377, 1
        %v1009 = vsel %vm990, %v1006, %v1008
        %v1010 = vrot.slane %v378, 1
        %v1011 = vsel %vm990, %v1008, %v1010
        %v1012 = vrot.slane %v379, 1
        %v1013 = vsel %vm990, %v1010, %v1012
        %v1014 = vrot.slane %v380, 1
        %v1015 = vsel %vm990, %v1012, %v1014
        %v1016 = vrot.slane %v381, 1
        %v1017 = vsel %vm990, %v1014, %v1016
        %v1018 = vrot.slane %v382, 1
        %v1019 = vsel %vm990, %v1016, %v1018
        %v1020 = vrot.slane %v383, 1
        %v1021 = vsel %vm990, %v1018, %v1020
        %v1022 = vrot.slane %v384, 1
        %v1023 = vsel %vm990, %v1020, %v1022
        %v1024 = vrot.slane %v385, 1
        %v1025 = vsel %vm990, %v1022, %v1024
        %v1026 = vrot.slane %v386, 1
        %v1027 = vsel %vm990, %v1024, %v1026
        %v1029 = vsel %vm536, %v993, 0
        %v1032 = vsel %vm536, %v995, 0
        %v1035 = vsel %vm536, %v997, 0
        %v1038 = vsel %vm536, %v999, 0
        %v1041 = vsel %vm536, %v1001, 0
        %v1044 = vsel %vm536, %v1003, 0
        %v1047 = vsel %vm536, %v1005, 0
        %v1050 = vsel %vm536, %v1007, 0
        %v1053 = vsel %vm536, %v1009, 0
        %v1056 = vsel %vm536, %v1011, 0
        %v1059 = vsel %vm536, %v1013, 0
        %v1062 = vsel %vm536, %v1015, 0
        %v1065 = vsel %vm536, %v1017, 0
        %v1068 = vsel %vm536, %v1019, 0
        %v1071 = vsel %vm536, %v1021, 0
        %v1074 = vsel %vm536, %v1023, 0
        %v1077 = vsel %vm536, %v1025, 0
        %v1080 = vsel %vm536, %v1027, 0
        %v1083 = vsel %vm591, %v989, 0
        %1085 = vmatprep.subr.bf16.mxu0 0
        %1086 = vmatpush1.bf16.msra.mxu0 0
        %1087 = vmatprep.subr.bf16.mxu0 0
        %1088 = vmatpush1.bf16.msra.mxu0 0
        %1089 = vmatprep.subr.bf16.mxu0 0
        %1090 = vmatpush1.bf16.msra.mxu0 0
        %1091 = vmatprep.subr.bf16.mxu0 0
        %1092 = vmatpush1.bf16.msra.mxu0 0
        %1093 = vmatprep.subr.bf16.mxu0 0
        %1094 = vmatpush1.bf16.msra.mxu0 0
        %1095 = vmatprep.subr.bf16.mxu0 0
        %1096 = vmatpush1.bf16.msra.mxu0 0
        %1097 = vmatprep.subr.bf16.mxu0 0
        %1098 = vmatpush1.bf16.msra.mxu0 0
        %1099 = vmatprep.subr.bf16.mxu0 0
        %1100 = vmatpush1.bf16.msra.mxu0 %v1083
        %1101 = vmatprep.subr.bf16.mxu0 0
        %1102 = vmatpush2.bf16.msra.mxu0 0
        %1103 = vmatprep.subr.bf16.mxu0 0
        %1104 = vmatpush2.bf16.msra.mxu0 0
        %1105 = vmatprep.subr.bf16.mxu0 0
        %1106 = vmatpush2.bf16.msra.mxu0 0
        %1107 = vmatprep.subr.bf16.mxu0 0
        %1108 = vmatpush2.bf16.msra.mxu0 0
        %1109 = vmatprep.subr.bf16.mxu0 0
        %1110 = vmatpush2.bf16.msra.mxu0 0
        %1111 = vmatprep.subr.bf16.mxu0 0
        %1112 = vmatpush2.bf16.msra.mxu0 0
        %1113 = vmatprep.subr.bf16.mxu0 0
        %1114 = vmatpush2.bf16.msra.mxu0 0
        %1115 = vmatprep.subr.bf16.mxu0 0
        %1116 = vmatpush2.bf16.msra.mxu0 0
        %1117 = vmatprep.mubr.bf16.mxu0 0
        %1118 = vmatmul.mubr.bf16.gmra.mxu0 %v1029
        %v1119 = vpop.f32.mrf.mxu0
        %v1120 = vadd.f32 0.0, %v1119
        %v1121 = vpop.f32.mrf.mxu0
        %v1122 = vpop.f32.mrf.mxu0
        %v1123 = vadd.f32 0.0, %v1122
        %v1124 = vpop.f32.mrf.mxu0
        %1125 = vmatprep.mubr.bf16.mxu0 0
        %1126 = vmatmul.mubr.bf16.gmra.mxu0 %v1032
        %v1127 = vpop.f32.mrf.mxu0
        %v1128 = vadd.f32 0.0, %v1127
        %v1129 = vpop.f32.mrf.mxu0
        %v1130 = vpop.f32.mrf.mxu0
        %v1131 = vadd.f32 0.0, %v1130
        %v1132 = vpop.f32.mrf.mxu0
        %1133 = vmatprep.mubr.bf16.mxu0 0
        %1134 = vmatmul.mubr.bf16.gmra.mxu0 %v1035
        %v1135 = vpop.f32.mrf.mxu0
        %v1136 = vadd.f32 0.0, %v1135
        %v1137 = vpop.f32.mrf.mxu0
        %v1138 = vpop.f32.mrf.mxu0
        %v1139 = vadd.f32 0.0, %v1138
        %v1140 = vpop.f32.mrf.mxu0
        %1141 = vmatprep.mubr.bf16.mxu0 0
        %1142 = vmatmul.mubr.bf16.gmra.mxu0 %v1038
        %v1143 = vpop.f32.mrf.mxu0
        %v1144 = vadd.f32 0.0, %v1143
        %v1145 = vpop.f32.mrf.mxu0
        %v1146 = vpop.f32.mrf.mxu0
        %v1147 = vadd.f32 0.0, %v1146
        %v1148 = vpop.f32.mrf.mxu0
        %1149 = vmatprep.mubr.bf16.mxu0 0
        %1150 = vmatmul.mubr.bf16.gmra.mxu0 %v1041
        %v1151 = vpop.f32.mrf.mxu0
        %v1152 = vadd.f32 0.0, %v1151
        %v1153 = vpop.f32.mrf.mxu0
        %v1154 = vpop.f32.mrf.mxu0
        %v1155 = vadd.f32 0.0, %v1154
        %v1156 = vpop.f32.mrf.mxu0
        %1157 = vmatprep.mubr.bf16.mxu0 0
        %1158 = vmatmul.mubr.bf16.gmra.mxu0 %v1044
        %v1159 = vpop.f32.mrf.mxu0
        %v1160 = vadd.f32 0.0, %v1159
        %v1161 = vpop.f32.mrf.mxu0
        %v1162 = vpop.f32.mrf.mxu0
        %v1163 = vadd.f32 0.0, %v1162
        %v1164 = vpop.f32.mrf.mxu0
        %1165 = vmatprep.mubr.bf16.mxu0 0
        %1166 = vmatmul.mubr.bf16.gmra.mxu0 %v1047
        %v1167 = vpop.f32.mrf.mxu0
        %v1168 = vadd.f32 0.0, %v1167
        %v1169 = vpop.f32.mrf.mxu0
        %v1170 = vpop.f32.mrf.mxu0
        %v1171 = vadd.f32 0.0, %v1170
        %v1172 = vpop.f32.mrf.mxu0
        %1173 = vmatprep.mubr.bf16.mxu0 0
        %1174 = vmatmul.mubr.bf16.gmra.mxu0 %v1050
        %v1175 = vpop.f32.mrf.mxu0
        %v1176 = vadd.f32 0.0, %v1175
        %v1177 = vpop.f32.mrf.mxu0
        %v1178 = vpop.f32.mrf.mxu0
        %v1179 = vadd.f32 0.0, %v1178
        %v1180 = vpop.f32.mrf.mxu0
        %1181 = vmatprep.mubr.bf16.mxu0 0
        %1182 = vmatmul.mubr.bf16.gmra.mxu0 %v1053
        %v1183 = vpop.f32.mrf.mxu0
        %v1184 = vadd.f32 0.0, %v1183
        %v1185 = vpop.f32.mrf.mxu0
        %v1186 = vpop.f32.mrf.mxu0
        %v1187 = vadd.f32 0.0, %v1186
        %v1188 = vpop.f32.mrf.mxu0
        %1189 = vmatprep.mubr.bf16.mxu0 0
        %1190 = vmatmul.mubr.bf16.gmra.mxu0 %v1056
        %v1191 = vpop.f32.mrf.mxu0
        %v1192 = vadd.f32 0.0, %v1191
        %v1193 = vpop.f32.mrf.mxu0
        %v1194 = vpop.f32.mrf.mxu0
        %v1195 = vadd.f32 0.0, %v1194
        %v1196 = vpop.f32.mrf.mxu0
        %1197 = vmatprep.mubr.bf16.mxu0 0
        %1198 = vmatmul.mubr.bf16.gmra.mxu0 %v1059
        %v1199 = vpop.f32.mrf.mxu0
        %v1200 = vadd.f32 0.0, %v1199
        %v1201 = vpop.f32.mrf.mxu0
        %v1202 = vpop.f32.mrf.mxu0
        %v1203 = vadd.f32 0.0, %v1202
        %v1204 = vpop.f32.mrf.mxu0
        %1205 = vmatprep.mubr.bf16.mxu0 0
        %1206 = vmatmul.mubr.bf16.gmra.mxu0 %v1062
        %v1207 = vpop.f32.mrf.mxu0
        %v1208 = vadd.f32 0.0, %v1207
        %v1209 = vpop.f32.mrf.mxu0
        %v1210 = vpop.f32.mrf.mxu0
        %v1211 = vadd.f32 0.0, %v1210
        %v1212 = vpop.f32.mrf.mxu0
        %1213 = vmatprep.mubr.bf16.mxu0 0
        %1214 = vmatmul.mubr.bf16.gmra.mxu0 %v1065
        %v1215 = vpop.f32.mrf.mxu0
        %v1216 = vadd.f32 0.0, %v1215
        %v1217 = vpop.f32.mrf.mxu0
        %v1218 = vpop.f32.mrf.mxu0
        %v1219 = vadd.f32 0.0, %v1218
        %v1220 = vpop.f32.mrf.mxu0
        %1221 = vmatprep.mubr.bf16.mxu0 0
        %1222 = vmatmul.mubr.bf16.gmra.mxu0 %v1068
        %v1223 = vpop.f32.mrf.mxu0
        %v1224 = vadd.f32 0.0, %v1223
        %v1225 = vpop.f32.mrf.mxu0
        %v1226 = vpop.f32.mrf.mxu0
        %v1227 = vadd.f32 0.0, %v1226
        %v1228 = vpop.f32.mrf.mxu0
        %1229 = vmatprep.mubr.bf16.mxu0 0
        %1230 = vmatmul.mubr.bf16.gmra.mxu0 %v1071
        %v1231 = vpop.f32.mrf.mxu0
        %v1232 = vadd.f32 0.0, %v1231
        %v1233 = vpop.f32.mrf.mxu0
        %v1234 = vpop.f32.mrf.mxu0
        %v1235 = vadd.f32 0.0, %v1234
        %v1236 = vpop.f32.mrf.mxu0
        %1237 = vmatprep.mubr.bf16.mxu0 0
        %1238 = vmatmul.mubr.bf16.gmra.mxu0 %v1074
        %v1239 = vpop.f32.mrf.mxu0
        %v1240 = vadd.f32 0.0, %v1239
        %v1241 = vpop.f32.mrf.mxu0
        %v1242 = vpop.f32.mrf.mxu0
        %v1243 = vadd.f32 0.0, %v1242
        %v1244 = vpop.f32.mrf.mxu0
        %1245 = vmatprep.mubr.bf16.mxu0 0
        %1246 = vmatmul.mubr.bf16.gmra.mxu0 %v1077
        %v1247 = vpop.f32.mrf.mxu0
        %v1248 = vadd.f32 0.0, %v1247
        %v1249 = vpop.f32.mrf.mxu0
        %v1250 = vpop.f32.mrf.mxu0
        %v1251 = vadd.f32 0.0, %v1250
        %v1252 = vpop.f32.mrf.mxu0
        %1253 = vmatprep.mubr.bf16.mxu0 0
        %1254 = vmatmul.mubr.bf16.gmra.mxu0 %v1080
        %v1255 = vpop.f32.mrf.mxu0
        %v1256 = vadd.f32 0.0, %v1255
        %v1257 = vpop.f32.mrf.mxu0
        %v1258 = vpop.f32.mrf.mxu0
        %v1259 = vadd.f32 0.0, %v1258
        %v1260 = vpop.f32.mrf.mxu0
        %1261 = vdwg.mxu0
        %v1262 = vadd.f32 %v846, %v1120
        %v1263 = vadd.f32 %v849, %v1123
        %v1264 = vadd.f32 %v854, %v1128
        %v1265 = vadd.f32 %v857, %v1131
        %v1266 = vadd.f32 %v862, %v1136
        %v1267 = vadd.f32 %v865, %v1139
        %v1268 = vadd.f32 %v870, %v1144
        %v1269 = vadd.f32 %v873, %v1147
        %v1270 = vadd.f32 %v878, %v1152
        %v1271 = vadd.f32 %v881, %v1155
        %v1272 = vadd.f32 %v886, %v1160
        %v1273 = vadd.f32 %v889, %v1163
        %v1274 = vadd.f32 %v894, %v1168
        %v1275 = vadd.f32 %v897, %v1171
        %v1276 = vadd.f32 %v902, %v1176
        %v1277 = vadd.f32 %v905, %v1179
        %v1278 = vadd.f32 %v910, %v1184
        %v1279 = vadd.f32 %v913, %v1187
        %v1280 = vadd.f32 %v918, %v1192
        %v1281 = vadd.f32 %v921, %v1195
        %v1282 = vadd.f32 %v926, %v1200
        %v1283 = vadd.f32 %v929, %v1203
        %v1284 = vadd.f32 %v934, %v1208
        %v1285 = vadd.f32 %v937, %v1211
        %v1286 = vadd.f32 %v942, %v1216
        %v1287 = vadd.f32 %v945, %v1219
        %v1288 = vadd.f32 %v950, %v1224
        %v1289 = vadd.f32 %v953, %v1227
        %v1290 = vadd.f32 %v958, %v1232
        %v1291 = vadd.f32 %v961, %v1235
        %v1292 = vadd.f32 %v966, %v1240
        %v1293 = vadd.f32 %v969, %v1243
        %v1294 = vadd.f32 %v974, %v1248
        %v1295 = vadd.f32 %v977, %v1251
        %v1296 = vadd.f32 %v982, %v1256
        %v1297 = vadd.f32 %v985, %v1259
        %s1298 = scalar_lea.vmem %s1, 6
        %v1299 = vld [vmem:[%s1298] sm:$0x3]
        %v1302 = vunpack.c.l.b16 %v287
        %v1303 = vunpack.c.l.b16 %v288
        %v1304 = vpack.c.b16 %v1302, %v367
        %v1305 = vpack.c.b16 %v1303, %v1303
        %v1306 = vrot.slane %v1304, 1
        %v1307 = vsel %vm990, %v1024, %v1306
        %v1308 = vrot.slane %v1305, 1
        %v1309 = vsel %vm990, %v1306, %v1308
        %v1311 = vsel %vm536, %v1307, 0
        %v1314 = vsel %vm536, %v1309, 0
        %v1317 = vsel %vm591, %v1299, 0
        %1319 = vmatprep.subr.bf16.mxu0 0
        %1320 = vmatpush1.bf16.msra.mxu0 0
        %1321 = vmatprep.subr.bf16.mxu0 0
        %1322 = vmatpush1.bf16.msra.mxu0 0
        %1323 = vmatprep.subr.bf16.mxu0 0
        %1324 = vmatpush1.bf16.msra.mxu0 0
        %1325 = vmatprep.subr.bf16.mxu0 0
        %1326 = vmatpush1.bf16.msra.mxu0 0
        %1327 = vmatprep.subr.bf16.mxu0 0
        %1328 = vmatpush1.bf16.msra.mxu0 0
        %1329 = vmatprep.subr.bf16.mxu0 0
        %1330 = vmatpush1.bf16.msra.mxu0 0
        %1331 = vmatprep.subr.bf16.mxu0 0
        %1332 = vmatpush1.bf16.msra.mxu0 0
        %1333 = vmatprep.subr.bf16.mxu0 0
        %1334 = vmatpush1.bf16.msra.mxu0 %v1317
        %1335 = vmatprep.subr.bf16.mxu0 0
        %1336 = vmatpush2.bf16.msra.mxu0 0
        %1337 = vmatprep.subr.bf16.mxu0 0
        %1338 = vmatpush2.bf16.msra.mxu0 0
        %1339 = vmatprep.subr.bf16.mxu0 0
        %1340 = vmatpush2.bf16.msra.mxu0 0
        %1341 = vmatprep.subr.bf16.mxu0 0
        %1342 = vmatpush2.bf16.msra.mxu0 0
        %1343 = vmatprep.subr.bf16.mxu0 0
        %1344 = vmatpush2.bf16.msra.mxu0 0
        %1345 = vmatprep.subr.bf16.mxu0 0
        %1346 = vmatpush2.bf16.msra.mxu0 0
        %1347 = vmatprep.subr.bf16.mxu0 0
        %1348 = vmatpush2.bf16.msra.mxu0 0
        %1349 = vmatprep.subr.bf16.mxu0 0
        %1350 = vmatpush2.bf16.msra.mxu0 0
        %1351 = vmatprep.mubr.bf16.mxu0 0
        %1352 = vmatmul.mubr.bf16.gmra.mxu0 %v1032
        %v1353 = vpop.f32.mrf.mxu0
        %v1354 = vadd.f32 0.0, %v1353
        %v1355 = vpop.f32.mrf.mxu0
        %v1356 = vpop.f32.mrf.mxu0
        %v1357 = vadd.f32 0.0, %v1356
        %v1358 = vpop.f32.mrf.mxu0
        %1359 = vmatprep.mubr.bf16.mxu0 0
        %1360 = vmatmul.mubr.bf16.gmra.mxu0 %v1035
        %v1361 = vpop.f32.mrf.mxu0
        %v1362 = vadd.f32 0.0, %v1361
        %v1363 = vpop.f32.mrf.mxu0
        %v1364 = vpop.f32.mrf.mxu0
        %v1365 = vadd.f32 0.0, %v1364
        %v1366 = vpop.f32.mrf.mxu0
        %1367 = vmatprep.mubr.bf16.mxu0 0
        %1368 = vmatmul.mubr.bf16.gmra.mxu0 %v1038
        %v1369 = vpop.f32.mrf.mxu0
        %v1370 = vadd.f32 0.0, %v1369
        %v1371 = vpop.f32.mrf.mxu0
        %v1372 = vpop.f32.mrf.mxu0
        %v1373 = vadd.f32 0.0, %v1372
        %v1374 = vpop.f32.mrf.mxu0
        %1375 = vmatprep.mubr.bf16.mxu0 0
        %1376 = vmatmul.mubr.bf16.gmra.mxu0 %v1041
        %v1377 = vpop.f32.mrf.mxu0
        %v1378 = vadd.f32 0.0, %v1377
        %v1379 = vpop.f32.mrf.mxu0
        %v1380 = vpop.f32.mrf.mxu0
        %v1381 = vadd.f32 0.0, %v1380
        %v1382 = vpop.f32.mrf.mxu0
        %1383 = vmatprep.mubr.bf16.mxu0 0
        %1384 = vmatmul.mubr.bf16.gmra.mxu0 %v1044
        %v1385 = vpop.f32.mrf.mxu0
        %v1386 = vadd.f32 0.0, %v1385
        %v1387 = vpop.f32.mrf.mxu0
        %v1388 = vpop.f32.mrf.mxu0
        %v1389 = vadd.f32 0.0, %v1388
        %v1390 = vpop.f32.mrf.mxu0
        %1391 = vmatprep.mubr.bf16.mxu0 0
        %1392 = vmatmul.mubr.bf16.gmra.mxu0 %v1047
        %v1393 = vpop.f32.mrf.mxu0
        %v1394 = vadd.f32 0.0, %v1393
        %v1395 = vpop.f32.mrf.mxu0
        %v1396 = vpop.f32.mrf.mxu0
        %v1397 = vadd.f32 0.0, %v1396
        %v1398 = vpop.f32.mrf.mxu0
        %1399 = vmatprep.mubr.bf16.mxu0 0
        %1400 = vmatmul.mubr.bf16.gmra.mxu0 %v1050
        %v1401 = vpop.f32.mrf.mxu0
        %v1402 = vadd.f32 0.0, %v1401
        %v1403 = vpop.f32.mrf.mxu0
        %v1404 = vpop.f32.mrf.mxu0
        %v1405 = vadd.f32 0.0, %v1404
        %v1406 = vpop.f32.mrf.mxu0
        %1407 = vmatprep.mubr.bf16.mxu0 0
        %1408 = vmatmul.mubr.bf16.gmra.mxu0 %v1053
        %v1409 = vpop.f32.mrf.mxu0
        %v1410 = vadd.f32 0.0, %v1409
        %v1411 = vpop.f32.mrf.mxu0
        %v1412 = vpop.f32.mrf.mxu0
        %v1413 = vadd.f32 0.0, %v1412
        %v1414 = vpop.f32.mrf.mxu0
        %1415 = vmatprep.mubr.bf16.mxu0 0
        %1416 = vmatmul.mubr.bf16.gmra.mxu0 %v1056
        %v1417 = vpop.f32.mrf.mxu0
        %v1418 = vadd.f32 0.0, %v1417
        %v1419 = vpop.f32.mrf.mxu0
        %v1420 = vpop.f32.mrf.mxu0
        %v1421 = vadd.f32 0.0, %v1420
        %v1422 = vpop.f32.mrf.mxu0
        %1423 = vmatprep.mubr.bf16.mxu0 0
        %1424 = vmatmul.mubr.bf16.gmra.mxu0 %v1059
        %v1425 = vpop.f32.mrf.mxu0
        %v1426 = vadd.f32 0.0, %v1425
        %v1427 = vpop.f32.mrf.mxu0
        %v1428 = vpop.f32.mrf.mxu0
        %v1429 = vadd.f32 0.0, %v1428
        %v1430 = vpop.f32.mrf.mxu0
        %1431 = vmatprep.mubr.bf16.mxu0 0
        %1432 = vmatmul.mubr.bf16.gmra.mxu0 %v1062
        %v1433 = vpop.f32.mrf.mxu0
        %v1434 = vadd.f32 0.0, %v1433
        %v1435 = vpop.f32.mrf.mxu0
        %v1436 = vpop.f32.mrf.mxu0
        %v1437 = vadd.f32 0.0, %v1436
        %v1438 = vpop.f32.mrf.mxu0
        %1439 = vmatprep.mubr.bf16.mxu0 0
        %1440 = vmatmul.mubr.bf16.gmra.mxu0 %v1065
        %v1441 = vpop.f32.mrf.mxu0
        %v1442 = vadd.f32 0.0, %v1441
        %v1443 = vpop.f32.mrf.mxu0
        %v1444 = vpop.f32.mrf.mxu0
        %v1445 = vadd.f32 0.0, %v1444
        %v1446 = vpop.f32.mrf.mxu0
        %1447 = vmatprep.mubr.bf16.mxu0 0
        %1448 = vmatmul.mubr.bf16.gmra.mxu0 %v1068
        %v1449 = vpop.f32.mrf.mxu0
        %v1450 = vadd.f32 0.0, %v1449
        %v1451 = vpop.f32.mrf.mxu0
        %v1452 = vpop.f32.mrf.mxu0
        %v1453 = vadd.f32 0.0, %v1452
        %v1454 = vpop.f32.mrf.mxu0
        %1455 = vmatprep.mubr.bf16.mxu0 0
        %1456 = vmatmul.mubr.bf16.gmra.mxu0 %v1071
        %v1457 = vpop.f32.mrf.mxu0
        %v1458 = vadd.f32 0.0, %v1457
        %v1459 = vpop.f32.mrf.mxu0
        %v1460 = vpop.f32.mrf.mxu0
        %v1461 = vadd.f32 0.0, %v1460
        %v1462 = vpop.f32.mrf.mxu0
        %1463 = vmatprep.mubr.bf16.mxu0 0
        %1464 = vmatmul.mubr.bf16.gmra.mxu0 %v1074
        %v1465 = vpop.f32.mrf.mxu0
        %v1466 = vadd.f32 0.0, %v1465
        %v1467 = vpop.f32.mrf.mxu0
        %v1468 = vpop.f32.mrf.mxu0
        %v1469 = vadd.f32 0.0, %v1468
        %v1470 = vpop.f32.mrf.mxu0
        %1471 = vmatprep.mubr.bf16.mxu0 0
        %1472 = vmatmul.mubr.bf16.gmra.mxu0 %v1077
        %v1473 = vpop.f32.mrf.mxu0
        %v1474 = vadd.f32 0.0, %v1473
        %v1475 = vpop.f32.mrf.mxu0
        %v1476 = vpop.f32.mrf.mxu0
        %v1477 = vadd.f32 0.0, %v1476
        %v1478 = vpop.f32.mrf.mxu0
        %1479 = vmatprep.mubr.bf16.mxu0 0
        %1480 = vmatmul.mubr.bf16.gmra.mxu0 %v1311
        %v1481 = vpop.f32.mrf.mxu0
        %v1482 = vadd.f32 0.0, %v1481
        %v1483 = vpop.f32.mrf.mxu0
        %v1484 = vpop.f32.mrf.mxu0
        %v1485 = vadd.f32 0.0, %v1484
        %v1486 = vpop.f32.mrf.mxu0
        %1487 = vmatprep.mubr.bf16.mxu0 0
        %1488 = vmatmul.mubr.bf16.gmra.mxu0 %v1314
        %v1489 = vpop.f32.mrf.mxu0
        %v1490 = vadd.f32 0.0, %v1489
        %v1491 = vpop.f32.mrf.mxu0
        %v1492 = vpop.f32.mrf.mxu0
        %v1493 = vadd.f32 0.0, %v1492
        %v1494 = vpop.f32.mrf.mxu0
        %1495 = vdwg.mxu0
        %v1496 = vadd.f32 %v1262, %v1354
        %v1497 = vadd.f32 %v1263, %v1357
        %v1498 = vadd.f32 %v1264, %v1362
        %v1499 = vadd.f32 %v1265, %v1365
        %v1500 = vadd.f32 %v1266, %v1370
        %v1501 = vadd.f32 %v1267, %v1373
        %v1502 = vadd.f32 %v1268, %v1378
        %v1503 = vadd.f32 %v1269, %v1381
        %v1504 = vadd.f32 %v1270, %v1386
        %v1505 = vadd.f32 %v1271, %v1389
        %v1506 = vadd.f32 %v1272, %v1394
        %v1507 = vadd.f32 %v1273, %v1397
        %v1508 = vadd.f32 %v1274, %v1402
        %v1509 = vadd.f32 %v1275, %v1405
        %v1510 = vadd.f32 %v1276, %v1410
        %v1511 = vadd.f32 %v1277, %v1413
        %v1512 = vadd.f32 %v1278, %v1418
        %v1513 = vadd.f32 %v1279, %v1421
        %v1514 = vadd.f32 %v1280, %v1426
        %v1515 = vadd.f32 %v1281, %v1429
        %v1516 = vadd.f32 %v1282, %v1434
        %v1517 = vadd.f32 %v1283, %v1437
        %v1518 = vadd.f32 %v1284, %v1442
        %v1519 = vadd.f32 %v1285, %v1445
        %v1520 = vadd.f32 %v1286, %v1450
        %v1521 = vadd.f32 %v1287, %v1453
        %v1522 = vadd.f32 %v1288, %v1458
        %v1523 = vadd.f32 %v1289, %v1461
        %v1524 = vadd.f32 %v1290, %v1466
        %v1525 = vadd.f32 %v1291, %v1469
        %v1526 = vadd.f32 %v1292, %v1474
        %v1527 = vadd.f32 %v1293, %v1477
        %v1528 = vadd.f32 %v1294, %v1482
        %v1529 = vadd.f32 %v1295, %v1485
        %v1530 = vadd.f32 %v1296, %v1490
        %v1531 = vadd.f32 %v1297, %v1493
        %s1532 = scalar_lea.vmem %s1, 8
        %v1533 = vld [vmem:[%s1532] sm:$0x3]
        %vm1534 = vsmask.f32 6400
        %v1535 = vrot.slane %v400, 1
        %v1536 = vrot.slane %v396, 2
        %v1537 = vor.u32 %v1535, %v1536
        %v1538 = vrot.slane %v408, 1
        %v1539 = vrot.slane %v404, 2
        %v1540 = vor.u32 %v1538, %v1539
        %v1541 = vsel %vm1534, %v1537, %v1540
        %v1542 = vrot.slane %v416, 1
        %v1543 = vrot.slane %v412, 2
        %v1544 = vor.u32 %v1542, %v1543
        %v1545 = vsel %vm1534, %v1540, %v1544
        %v1546 = vrot.slane %v424, 1
        %v1547 = vrot.slane %v420, 2
        %v1548 = vor.u32 %v1546, %v1547
        %v1549 = vsel %vm1534, %v1544, %v1548
        %v1550 = vrot.slane %v432, 1
        %v1551 = vrot.slane %v428, 2
        %v1552 = vor.u32 %v1550, %v1551
        %v1553 = vsel %vm1534, %v1548, %v1552
        %v1554 = vrot.slane %v440, 1
        %v1555 = vrot.slane %v436, 2
        %v1556 = vor.u32 %v1554, %v1555
        %v1557 = vsel %vm1534, %v1552, %v1556
        %v1558 = vrot.slane %v448, 1
        %v1559 = vrot.slane %v444, 2
        %v1560 = vor.u32 %v1558, %v1559
        %v1561 = vsel %vm1534, %v1556, %v1560
        %v1562 = vrot.slane %v456, 1
        %v1563 = vrot.slane %v452, 2
        %v1564 = vor.u32 %v1562, %v1563
        %v1565 = vsel %vm1534, %v1560, %v1564
        %v1566 = vrot.slane %v464, 1
        %v1567 = vrot.slane %v460, 2
        %v1568 = vor.u32 %v1566, %v1567
        %v1569 = vsel %vm1534, %v1564, %v1568
        %v1570 = vrot.slane %v472, 1
        %v1571 = vrot.slane %v468, 2
        %v1572 = vor.u32 %v1570, %v1571
        %v1573 = vsel %vm1534, %v1568, %v1572
        %v1574 = vrot.slane %v480, 1
        %v1575 = vrot.slane %v476, 2
        %v1576 = vor.u32 %v1574, %v1575
        %v1577 = vsel %vm1534, %v1572, %v1576
        %v1578 = vrot.slane %v488, 1
        %v1579 = vrot.slane %v484, 2
        %v1580 = vor.u32 %v1578, %v1579
        %v1581 = vsel %vm1534, %v1576, %v1580
        %v1582 = vrot.slane %v496, 1
        %v1583 = vrot.slane %v492, 2
        %v1584 = vor.u32 %v1582, %v1583
        %v1585 = vsel %vm1534, %v1580, %v1584
        %v1586 = vrot.slane %v504, 1
        %v1587 = vrot.slane %v500, 2
        %v1588 = vor.u32 %v1586, %v1587
        %v1589 = vsel %vm1534, %v1584, %v1588
        %v1590 = vrot.slane %v512, 1
        %v1591 = vrot.slane %v508, 2
        %v1592 = vor.u32 %v1590, %v1591
        %v1593 = vsel %vm1534, %v1588, %v1592
        %v1594 = vrot.slane %v520, 1
        %v1595 = vrot.slane %v516, 2
        %v1596 = vor.u32 %v1594, %v1595
        %v1597 = vsel %vm1534, %v1592, %v1596
        %v1598 = vrot.slane %v528, 1
        %v1599 = vrot.slane %v524, 2
        %v1600 = vor.u32 %v1598, %v1599
        %v1601 = vsel %vm1534, %v1596, %v1600
        %v1603 = vshrl.u32 %v1304, 16
        %v1605 = vrot.slane %v1603, 1
        %v1606 = vshll.u32 %v1304, 16
        %v1608 = vrot.slane %v1606, 2
        %v1609 = vor.u32 %v1605, %v1608
        %v1610 = vsel %vm1534, %v1600, %v1609
        %v1612 = vshrl.u32 %v1305, 16
        %v1614 = vrot.slane %v1612, 1
        %v1615 = vshll.u32 %v1305, 16
        %v1617 = vrot.slane %v1615, 2
        %v1618 = vor.u32 %v1614, %v1617
        %v1619 = vsel %vm1534, %v1609, %v1618
        %v1621 = vsel %vm536, %v1541, 0
        %v1624 = vsel %vm536, %v1545, 0
        %v1627 = vsel %vm536, %v1549, 0
        %v1630 = vsel %vm536, %v1553, 0
        %v1633 = vsel %vm536, %v1557, 0
        %v1636 = vsel %vm536, %v1561, 0
        %v1639 = vsel %vm536, %v1565, 0
        %v1642 = vsel %vm536, %v1569, 0
        %v1645 = vsel %vm536, %v1573, 0
        %v1648 = vsel %vm536, %v1577, 0
        %v1651 = vsel %vm536, %v1581, 0
        %v1654 = vsel %vm536, %v1585, 0
        %v1657 = vsel %vm536, %v1589, 0
        %v1660 = vsel %vm536, %v1593, 0
        %v1663 = vsel %vm536, %v1597, 0
        %v1666 = vsel %vm536, %v1601, 0
        %v1669 = vsel %vm536, %v1610, 0
        %v1672 = vsel %vm536, %v1619, 0
        %v1675 = vsel %vm591, %v1533, 0
        %1677 = vmatprep.subr.bf16.mxu0 0
        %1678 = vmatpush1.bf16.msra.mxu0 0
        %1679 = vmatprep.subr.bf16.mxu0 0
        %1680 = vmatpush1.bf16.msra.mxu0 0
        %1681 = vmatprep.subr.bf16.mxu0 0
        %1682 = vmatpush1.bf16.msra.mxu0 0
        %1683 = vmatprep.subr.bf16.mxu0 0
        %1684 = vmatpush1.bf16.msra.mxu0 0
        %1685 = vmatprep.subr.bf16.mxu0 0
        %1686 = vmatpush1.bf16.msra.mxu0 0
        %1687 = vmatprep.subr.bf16.mxu0 0
        %1688 = vmatpush1.bf16.msra.mxu0 0
        %1689 = vmatprep.subr.bf16.mxu0 0
        %1690 = vmatpush1.bf16.msra.mxu0 0
        %1691 = vmatprep.subr.bf16.mxu0 0
        %1692 = vmatpush1.bf16.msra.mxu0 %v1675
        %1693 = vmatprep.subr.bf16.mxu0 0
        %1694 = vmatpush2.bf16.msra.mxu0 0
        %1695 = vmatprep.subr.bf16.mxu0 0
        %1696 = vmatpush2.bf16.msra.mxu0 0
        %1697 = vmatprep.subr.bf16.mxu0 0
        %1698 = vmatpush2.bf16.msra.mxu0 0
        %1699 = vmatprep.subr.bf16.mxu0 0
        %1700 = vmatpush2.bf16.msra.mxu0 0
        %1701 = vmatprep.subr.bf16.mxu0 0
        %1702 = vmatpush2.bf16.msra.mxu0 0
        %1703 = vmatprep.subr.bf16.mxu0 0
        %1704 = vmatpush2.bf16.msra.mxu0 0
        %1705 = vmatprep.subr.bf16.mxu0 0
        %1706 = vmatpush2.bf16.msra.mxu0 0
        %1707 = vmatprep.subr.bf16.mxu0 0
        %1708 = vmatpush2.bf16.msra.mxu0 0
        %1709 = vmatprep.mubr.bf16.mxu0 0
        %1710 = vmatmul.mubr.bf16.gmra.mxu0 %v1621
        %v1711 = vpop.f32.mrf.mxu0
        %v1712 = vadd.f32 0.0, %v1711
        %v1713 = vpop.f32.mrf.mxu0
        %v1714 = vpop.f32.mrf.mxu0
        %v1715 = vadd.f32 0.0, %v1714
        %v1716 = vpop.f32.mrf.mxu0
        %1717 = vmatprep.mubr.bf16.mxu0 0
        %1718 = vmatmul.mubr.bf16.gmra.mxu0 %v1624
        %v1719 = vpop.f32.mrf.mxu0
        %v1720 = vadd.f32 0.0, %v1719
        %v1721 = vpop.f32.mrf.mxu0
        %v1722 = vpop.f32.mrf.mxu0
        %v1723 = vadd.f32 0.0, %v1722
        %v1724 = vpop.f32.mrf.mxu0
        %1725 = vmatprep.mubr.bf16.mxu0 0
        %1726 = vmatmul.mubr.bf16.gmra.mxu0 %v1627
        %v1727 = vpop.f32.mrf.mxu0
        %v1728 = vadd.f32 0.0, %v1727
        %v1729 = vpop.f32.mrf.mxu0
        %v1730 = vpop.f32.mrf.mxu0
        %v1731 = vadd.f32 0.0, %v1730
        %v1732 = vpop.f32.mrf.mxu0
        %1733 = vmatprep.mubr.bf16.mxu0 0
        %1734 = vmatmul.mubr.bf16.gmra.mxu0 %v1630
        %v1735 = vpop.f32.mrf.mxu0
        %v1736 = vadd.f32 0.0, %v1735
        %v1737 = vpop.f32.mrf.mxu0
        %v1738 = vpop.f32.mrf.mxu0
        %v1739 = vadd.f32 0.0, %v1738
        %v1740 = vpop.f32.mrf.mxu0
        %1741 = vmatprep.mubr.bf16.mxu0 0
        %1742 = vmatmul.mubr.bf16.gmra.mxu0 %v1633
        %v1743 = vpop.f32.mrf.mxu0
        %v1744 = vadd.f32 0.0, %v1743
        %v1745 = vpop.f32.mrf.mxu0
        %v1746 = vpop.f32.mrf.mxu0
        %v1747 = vadd.f32 0.0, %v1746
        %v1748 = vpop.f32.mrf.mxu0
        %1749 = vmatprep.mubr.bf16.mxu0 0
        %1750 = vmatmul.mubr.bf16.gmra.mxu0 %v1636
        %v1751 = vpop.f32.mrf.mxu0
        %v1752 = vadd.f32 0.0, %v1751
        %v1753 = vpop.f32.mrf.mxu0
        %v1754 = vpop.f32.mrf.mxu0
        %v1755 = vadd.f32 0.0, %v1754
        %v1756 = vpop.f32.mrf.mxu0
        %1757 = vmatprep.mubr.bf16.mxu0 0
        %1758 = vmatmul.mubr.bf16.gmra.mxu0 %v1639
        %v1759 = vpop.f32.mrf.mxu0
        %v1760 = vadd.f32 0.0, %v1759
        %v1761 = vpop.f32.mrf.mxu0
        %v1762 = vpop.f32.mrf.mxu0
        %v1763 = vadd.f32 0.0, %v1762
        %v1764 = vpop.f32.mrf.mxu0
        %1765 = vmatprep.mubr.bf16.mxu0 0
        %1766 = vmatmul.mubr.bf16.gmra.mxu0 %v1642
        %v1767 = vpop.f32.mrf.mxu0
        %v1768 = vadd.f32 0.0, %v1767
        %v1769 = vpop.f32.mrf.mxu0
        %v1770 = vpop.f32.mrf.mxu0
        %v1771 = vadd.f32 0.0, %v1770
        %v1772 = vpop.f32.mrf.mxu0
        %1773 = vmatprep.mubr.bf16.mxu0 0
        %1774 = vmatmul.mubr.bf16.gmra.mxu0 %v1645
        %v1775 = vpop.f32.mrf.mxu0
        %v1776 = vadd.f32 0.0, %v1775
        %v1777 = vpop.f32.mrf.mxu0
        %v1778 = vpop.f32.mrf.mxu0
        %v1779 = vadd.f32 0.0, %v1778
        %v1780 = vpop.f32.mrf.mxu0
        %1781 = vmatprep.mubr.bf16.mxu0 0
        %1782 = vmatmul.mubr.bf16.gmra.mxu0 %v1648
        %v1783 = vpop.f32.mrf.mxu0
        %v1784 = vadd.f32 0.0, %v1783
        %v1785 = vpop.f32.mrf.mxu0
        %v1786 = vpop.f32.mrf.mxu0
        %v1787 = vadd.f32 0.0, %v1786
        %v1788 = vpop.f32.mrf.mxu0
        %1789 = vmatprep.mubr.bf16.mxu0 0
        %1790 = vmatmul.mubr.bf16.gmra.mxu0 %v1651
        %v1791 = vpop.f32.mrf.mxu0
        %v1792 = vadd.f32 0.0, %v1791
        %v1793 = vpop.f32.mrf.mxu0
        %v1794 = vpop.f32.mrf.mxu0
        %v1795 = vadd.f32 0.0, %v1794
        %v1796 = vpop.f32.mrf.mxu0
        %1797 = vmatprep.mubr.bf16.mxu0 0
        %1798 = vmatmul.mubr.bf16.gmra.mxu0 %v1654
        %v1799 = vpop.f32.mrf.mxu0
        %v1800 = vadd.f32 0.0, %v1799
        %v1801 = vpop.f32.mrf.mxu0
        %v1802 = vpop.f32.mrf.mxu0
        %v1803 = vadd.f32 0.0, %v1802
        %v1804 = vpop.f32.mrf.mxu0
        %1805 = vmatprep.mubr.bf16.mxu0 0
        %1806 = vmatmul.mubr.bf16.gmra.mxu0 %v1657
        %v1807 = vpop.f32.mrf.mxu0
        %v1808 = vadd.f32 0.0, %v1807
        %v1809 = vpop.f32.mrf.mxu0
        %v1810 = vpop.f32.mrf.mxu0
        %v1811 = vadd.f32 0.0, %v1810
        %v1812 = vpop.f32.mrf.mxu0
        %1813 = vmatprep.mubr.bf16.mxu0 0
        %1814 = vmatmul.mubr.bf16.gmra.mxu0 %v1660
        %v1815 = vpop.f32.mrf.mxu0
        %v1816 = vadd.f32 0.0, %v1815
        %v1817 = vpop.f32.mrf.mxu0
        %v1818 = vpop.f32.mrf.mxu0
        %v1819 = vadd.f32 0.0, %v1818
        %v1820 = vpop.f32.mrf.mxu0
        %1821 = vmatprep.mubr.bf16.mxu0 0
        %1822 = vmatmul.mubr.bf16.gmra.mxu0 %v1663
        %v1823 = vpop.f32.mrf.mxu0
        %v1824 = vadd.f32 0.0, %v1823
        %v1825 = vpop.f32.mrf.mxu0
        %v1826 = vpop.f32.mrf.mxu0
        %v1827 = vadd.f32 0.0, %v1826
        %v1828 = vpop.f32.mrf.mxu0
        %1829 = vmatprep.mubr.bf16.mxu0 0
        %1830 = vmatmul.mubr.bf16.gmra.mxu0 %v1666
        %v1831 = vpop.f32.mrf.mxu0
        %v1832 = vadd.f32 0.0, %v1831
        %v1833 = vpop.f32.mrf.mxu0
        %v1834 = vpop.f32.mrf.mxu0
        %v1835 = vadd.f32 0.0, %v1834
        %v1836 = vpop.f32.mrf.mxu0
        %1837 = vmatprep.mubr.bf16.mxu0 0
        %1838 = vmatmul.mubr.bf16.gmra.mxu0 %v1669
        %v1839 = vpop.f32.mrf.mxu0
        %v1840 = vadd.f32 0.0, %v1839
        %v1841 = vpop.f32.mrf.mxu0
        %v1842 = vpop.f32.mrf.mxu0
        %v1843 = vadd.f32 0.0, %v1842
        %v1844 = vpop.f32.mrf.mxu0
        %1845 = vmatprep.mubr.bf16.mxu0 0
        %1846 = vmatmul.mubr.bf16.gmra.mxu0 %v1672
        %v1847 = vpop.f32.mrf.mxu0
        %v1848 = vadd.f32 0.0, %v1847
        %v1849 = vpop.f32.mrf.mxu0
        %v1850 = vpop.f32.mrf.mxu0
        %v1851 = vadd.f32 0.0, %v1850
        %v1852 = vpop.f32.mrf.mxu0
        %1853 = vdwg.mxu0
        %v1854 = vadd.f32 %v1496, %v1712
        %v1855 = vadd.f32 %v1497, %v1715
        %v1856 = vadd.f32 %v1498, %v1720
        %v1857 = vadd.f32 %v1499, %v1723
        %v1858 = vadd.f32 %v1500, %v1728
        %v1859 = vadd.f32 %v1501, %v1731
        %v1860 = vadd.f32 %v1502, %v1736
        %v1861 = vadd.f32 %v1503, %v1739
        %v1862 = vadd.f32 %v1504, %v1744
        %v1863 = vadd.f32 %v1505, %v1747
        %v1864 = vadd.f32 %v1506, %v1752
        %v1865 = vadd.f32 %v1507, %v1755
        %v1866 = vadd.f32 %v1508, %v1760
        %v1867 = vadd.f32 %v1509, %v1763
        %v1868 = vadd.f32 %v1510, %v1768
        %v1869 = vadd.f32 %v1511, %v1771
        %v1870 = vadd.f32 %v1512, %v1776
        %v1871 = vadd.f32 %v1513, %v1779
        %v1872 = vadd.f32 %v1514, %v1784
        %v1873 = vadd.f32 %v1515, %v1787
        %v1874 = vadd.f32 %v1516, %v1792
        %v1875 = vadd.f32 %v1517, %v1795
        %v1876 = vadd.f32 %v1518, %v1800
        %v1877 = vadd.f32 %v1519, %v1803
        %v1878 = vadd.f32 %v1520, %v1808
        %v1879 = vadd.f32 %v1521, %v1811
        %v1880 = vadd.f32 %v1522, %v1816
        %v1881 = vadd.f32 %v1523, %v1819
        %v1882 = vadd.f32 %v1524, %v1824
        %v1883 = vadd.f32 %v1525, %v1827
        %v1884 = vadd.f32 %v1526, %v1832
        %v1885 = vadd.f32 %v1527, %v1835
        %v1886 = vadd.f32 %v1528, %v1840
        %v1887 = vadd.f32 %v1529, %v1843
        %v1888 = vadd.f32 %v1530, %v1848
        %v1889 = vadd.f32 %v1531, %v1851
        %s1890 = scalar_lea.vmem %s1, 10
        %v1891 = vld [vmem:[%s1890] sm:$0x3]
        %vm1892 = vcmask 1045504
        %v1893 = vrot.slane %v369, 2
        %v1894 = vrot.slane %v370, 2
        %v1895 = vsel %vm1892, %v1893, %v1894
        %v1896 = vrot.slane %v371, 2
        %v1897 = vsel %vm1892, %v1894, %v1896
        %v1898 = vrot.slane %v372, 2
        %v1899 = vsel %vm1892, %v1896, %v1898
        %v1900 = vrot.slane %v373, 2
        %v1901 = vsel %vm1892, %v1898, %v1900
        %v1902 = vrot.slane %v374, 2
        %v1903 = vsel %vm1892, %v1900, %v1902
        %v1904 = vrot.slane %v375, 2
        %v1905 = vsel %vm1892, %v1902, %v1904
        %v1906 = vrot.slane %v376, 2
        %v1907 = vsel %vm1892, %v1904, %v1906
        %v1908 = vrot.slane %v377, 2
        %v1909 = vsel %vm1892, %v1906, %v1908
        %v1910 = vrot.slane %v378, 2
        %v1911 = vsel %vm1892, %v1908, %v1910
        %v1912 = vrot.slane %v379, 2
        %v1913 = vsel %vm1892, %v1910, %v1912
        %v1914 = vrot.slane %v380, 2
        %v1915 = vsel %vm1892, %v1912, %v1914
        %v1916 = vrot.slane %v381, 2
        %v1917 = vsel %vm1892, %v1914, %v1916
        %v1918 = vrot.slane %v382, 2
        %v1919 = vsel %vm1892, %v1916, %v1918
        %v1920 = vrot.slane %v383, 2
        %v1921 = vsel %vm1892, %v1918, %v1920
        %v1922 = vrot.slane %v384, 2
        %v1923 = vsel %vm1892, %v1920, %v1922
        %v1924 = vrot.slane %v385, 2
        %v1925 = vsel %vm1892, %v1922, %v1924
        %v1926 = vrot.slane %v1304, 2
        %v1927 = vsel %vm1892, %v1924, %v1926
        %v1928 = vrot.slane %v1305, 2
        %v1929 = vsel %vm1892, %v1926, %v1928
        %v1931 = vsel %vm536, %v1895, 0
        %v1934 = vsel %vm536, %v1897, 0
        %v1937 = vsel %vm536, %v1899, 0
        %v1940 = vsel %vm536, %v1901, 0
        %v1943 = vsel %vm536, %v1903, 0
        %v1946 = vsel %vm536, %v1905, 0
        %v1949 = vsel %vm536, %v1907, 0
        %v1952 = vsel %vm536, %v1909, 0
        %v1955 = vsel %vm536, %v1911, 0
        %v1958 = vsel %vm536, %v1913, 0
        %v1961 = vsel %vm536, %v1915, 0
        %v1964 = vsel %vm536, %v1917, 0
        %v1967 = vsel %vm536, %v1919, 0
        %v1970 = vsel %vm536, %v1921, 0
        %v1973 = vsel %vm536, %v1923, 0
        %v1976 = vsel %vm536, %v1925, 0
        %v1979 = vsel %vm536, %v1927, 0
        %v1982 = vsel %vm536, %v1929, 0
        %v1985 = vsel %vm591, %v1891, 0
        %1987 = vmatprep.subr.bf16.mxu0 0
        %1988 = vmatpush1.bf16.msra.mxu0 0
        %1989 = vmatprep.subr.bf16.mxu0 0
        %1990 = vmatpush1.bf16.msra.mxu0 0
        %1991 = vmatprep.subr.bf16.mxu0 0
        %1992 = vmatpush1.bf16.msra.mxu0 0
        %1993 = vmatprep.subr.bf16.mxu0 0
        %1994 = vmatpush1.bf16.msra.mxu0 0
        %1995 = vmatprep.subr.bf16.mxu0 0
        %1996 = vmatpush1.bf16.msra.mxu0 0
        %1997 = vmatprep.subr.bf16.mxu0 0
        %1998 = vmatpush1.bf16.msra.mxu0 0
        %1999 = vmatprep.subr.bf16.mxu0 0
        %2000 = vmatpush1.bf16.msra.mxu0 0
        %2001 = vmatprep.subr.bf16.mxu0 0
        %2002 = vmatpush1.bf16.msra.mxu0 %v1985
        %2003 = vmatprep.subr.bf16.mxu0 0
        %2004 = vmatpush2.bf16.msra.mxu0 0
        %2005 = vmatprep.subr.bf16.mxu0 0
        %2006 = vmatpush2.bf16.msra.mxu0 0
        %2007 = vmatprep.subr.bf16.mxu0 0
        %2008 = vmatpush2.bf16.msra.mxu0 0
        %2009 = vmatprep.subr.bf16.mxu0 0
        %2010 = vmatpush2.bf16.msra.mxu0 0
        %2011 = vmatprep.subr.bf16.mxu0 0
        %2012 = vmatpush2.bf16.msra.mxu0 0
        %2013 = vmatprep.subr.bf16.mxu0 0
        %2014 = vmatpush2.bf16.msra.mxu0 0
        %2015 = vmatprep.subr.bf16.mxu0 0
        %2016 = vmatpush2.bf16.msra.mxu0 0
        %2017 = vmatprep.subr.bf16.mxu0 0
        %2018 = vmatpush2.bf16.msra.mxu0 0
        %2019 = vmatprep.mubr.bf16.mxu0 0
        %2020 = vmatmul.mubr.bf16.gmra.mxu0 %v1931
        %v2021 = vpop.f32.mrf.mxu0
        %v2022 = vadd.f32 0.0, %v2021
        %v2023 = vpop.f32.mrf.mxu0
        %v2024 = vpop.f32.mrf.mxu0
        %v2025 = vadd.f32 0.0, %v2024
        %v2026 = vpop.f32.mrf.mxu0
        %2027 = vmatprep.mubr.bf16.mxu0 0
        %2028 = vmatmul.mubr.bf16.gmra.mxu0 %v1934
        %v2029 = vpop.f32.mrf.mxu0
        %v2030 = vadd.f32 0.0, %v2029
        %v2031 = vpop.f32.mrf.mxu0
        %v2032 = vpop.f32.mrf.mxu0
        %v2033 = vadd.f32 0.0, %v2032
        %v2034 = vpop.f32.mrf.mxu0
        %2035 = vmatprep.mubr.bf16.mxu0 0
        %2036 = vmatmul.mubr.bf16.gmra.mxu0 %v1937
        %v2037 = vpop.f32.mrf.mxu0
        %v2038 = vadd.f32 0.0, %v2037
        %v2039 = vpop.f32.mrf.mxu0
        %v2040 = vpop.f32.mrf.mxu0
        %v2041 = vadd.f32 0.0, %v2040
        %v2042 = vpop.f32.mrf.mxu0
        %2043 = vmatprep.mubr.bf16.mxu0 0
        %2044 = vmatmul.mubr.bf16.gmra.mxu0 %v1940
        %v2045 = vpop.f32.mrf.mxu0
        %v2046 = vadd.f32 0.0, %v2045
        %v2047 = vpop.f32.mrf.mxu0
        %v2048 = vpop.f32.mrf.mxu0
        %v2049 = vadd.f32 0.0, %v2048
        %v2050 = vpop.f32.mrf.mxu0
        %2051 = vmatprep.mubr.bf16.mxu0 0
        %2052 = vmatmul.mubr.bf16.gmra.mxu0 %v1943
        %v2053 = vpop.f32.mrf.mxu0
        %v2054 = vadd.f32 0.0, %v2053
        %v2055 = vpop.f32.mrf.mxu0
        %v2056 = vpop.f32.mrf.mxu0
        %v2057 = vadd.f32 0.0, %v2056
        %v2058 = vpop.f32.mrf.mxu0
        %2059 = vmatprep.mubr.bf16.mxu0 0
        %2060 = vmatmul.mubr.bf16.gmra.mxu0 %v1946
        %v2061 = vpop.f32.mrf.mxu0
        %v2062 = vadd.f32 0.0, %v2061
        %v2063 = vpop.f32.mrf.mxu0
        %v2064 = vpop.f32.mrf.mxu0
        %v2065 = vadd.f32 0.0, %v2064
        %v2066 = vpop.f32.mrf.mxu0
        %2067 = vmatprep.mubr.bf16.mxu0 0
        %2068 = vmatmul.mubr.bf16.gmra.mxu0 %v1949
        %v2069 = vpop.f32.mrf.mxu0
        %v2070 = vadd.f32 0.0, %v2069
        %v2071 = vpop.f32.mrf.mxu0
        %v2072 = vpop.f32.mrf.mxu0
        %v2073 = vadd.f32 0.0, %v2072
        %v2074 = vpop.f32.mrf.mxu0
        %2075 = vmatprep.mubr.bf16.mxu0 0
        %2076 = vmatmul.mubr.bf16.gmra.mxu0 %v1952
        %v2077 = vpop.f32.mrf.mxu0
        %v2078 = vadd.f32 0.0, %v2077
        %v2079 = vpop.f32.mrf.mxu0
        %v2080 = vpop.f32.mrf.mxu0
        %v2081 = vadd.f32 0.0, %v2080
        %v2082 = vpop.f32.mrf.mxu0
        %2083 = vmatprep.mubr.bf16.mxu0 0
        %2084 = vmatmul.mubr.bf16.gmra.mxu0 %v1955
        %v2085 = vpop.f32.mrf.mxu0
        %v2086 = vadd.f32 0.0, %v2085
        %v2087 = vpop.f32.mrf.mxu0
        %v2088 = vpop.f32.mrf.mxu0
        %v2089 = vadd.f32 0.0, %v2088
        %v2090 = vpop.f32.mrf.mxu0
        %2091 = vmatprep.mubr.bf16.mxu0 0
        %2092 = vmatmul.mubr.bf16.gmra.mxu0 %v1958
        %v2093 = vpop.f32.mrf.mxu0
        %v2094 = vadd.f32 0.0, %v2093
        %v2095 = vpop.f32.mrf.mxu0
        %v2096 = vpop.f32.mrf.mxu0
        %v2097 = vadd.f32 0.0, %v2096
        %v2098 = vpop.f32.mrf.mxu0
        %2099 = vmatprep.mubr.bf16.mxu0 0
        %2100 = vmatmul.mubr.bf16.gmra.mxu0 %v1961
        %v2101 = vpop.f32.mrf.mxu0
        %v2102 = vadd.f32 0.0, %v2101
        %v2103 = vpop.f32.mrf.mxu0
        %v2104 = vpop.f32.mrf.mxu0
        %v2105 = vadd.f32 0.0, %v2104
        %v2106 = vpop.f32.mrf.mxu0
        %2107 = vmatprep.mubr.bf16.mxu0 0
        %2108 = vmatmul.mubr.bf16.gmra.mxu0 %v1964
        %v2109 = vpop.f32.mrf.mxu0
        %v2110 = vadd.f32 0.0, %v2109
        %v2111 = vpop.f32.mrf.mxu0
        %v2112 = vpop.f32.mrf.mxu0
        %v2113 = vadd.f32 0.0, %v2112
        %v2114 = vpop.f32.mrf.mxu0
        %2115 = vmatprep.mubr.bf16.mxu0 0
        %2116 = vmatmul.mubr.bf16.gmra.mxu0 %v1967
        %v2117 = vpop.f32.mrf.mxu0
        %v2118 = vadd.f32 0.0, %v2117
        %v2119 = vpop.f32.mrf.mxu0
        %v2120 = vpop.f32.mrf.mxu0
        %v2121 = vadd.f32 0.0, %v2120
        %v2122 = vpop.f32.mrf.mxu0
        %2123 = vmatprep.mubr.bf16.mxu0 0
        %2124 = vmatmul.mubr.bf16.gmra.mxu0 %v1970
        %v2125 = vpop.f32.mrf.mxu0
        %v2126 = vadd.f32 0.0, %v2125
        %v2127 = vpop.f32.mrf.mxu0
        %v2128 = vpop.f32.mrf.mxu0
        %v2129 = vadd.f32 0.0, %v2128
        %v2130 = vpop.f32.mrf.mxu0
        %2131 = vmatprep.mubr.bf16.mxu0 0
        %2132 = vmatmul.mubr.bf16.gmra.mxu0 %v1973
        %v2133 = vpop.f32.mrf.mxu0
        %v2134 = vadd.f32 0.0, %v2133
        %v2135 = vpop.f32.mrf.mxu0
        %v2136 = vpop.f32.mrf.mxu0
        %v2137 = vadd.f32 0.0, %v2136
        %v2138 = vpop.f32.mrf.mxu0
        %2139 = vmatprep.mubr.bf16.mxu0 0
        %2140 = vmatmul.mubr.bf16.gmra.mxu0 %v1976
        %v2141 = vpop.f32.mrf.mxu0
        %v2142 = vadd.f32 0.0, %v2141
        %v2143 = vpop.f32.mrf.mxu0
        %v2144 = vpop.f32.mrf.mxu0
        %v2145 = vadd.f32 0.0, %v2144
        %v2146 = vpop.f32.mrf.mxu0
        %2147 = vmatprep.mubr.bf16.mxu0 0
        %2148 = vmatmul.mubr.bf16.gmra.mxu0 %v1979
        %v2149 = vpop.f32.mrf.mxu0
        %v2150 = vadd.f32 0.0, %v2149
        %v2151 = vpop.f32.mrf.mxu0
        %v2152 = vpop.f32.mrf.mxu0
        %v2153 = vadd.f32 0.0, %v2152
        %v2154 = vpop.f32.mrf.mxu0
        %2155 = vmatprep.mubr.bf16.mxu0 0
        %2156 = vmatmul.mubr.bf16.gmra.mxu0 %v1982
        %v2157 = vpop.f32.mrf.mxu0
        %v2158 = vadd.f32 0.0, %v2157
        %v2159 = vpop.f32.mrf.mxu0
        %v2160 = vpop.f32.mrf.mxu0
        %v2161 = vadd.f32 0.0, %v2160
        %v2162 = vpop.f32.mrf.mxu0
        %2163 = vdwg.mxu0
        %v2164 = vadd.f32 %v1854, %v2022
        %v2165 = vadd.f32 %v1855, %v2025
        %v2166 = vadd.f32 %v1856, %v2030
        %v2167 = vadd.f32 %v1857, %v2033
        %v2168 = vadd.f32 %v1858, %v2038
        %v2169 = vadd.f32 %v1859, %v2041
        %v2170 = vadd.f32 %v1860, %v2046
        %v2171 = vadd.f32 %v1861, %v2049
        %v2172 = vadd.f32 %v1862, %v2054
        %v2173 = vadd.f32 %v1863, %v2057
        %v2174 = vadd.f32 %v1864, %v2062
        %v2175 = vadd.f32 %v1865, %v2065
        %v2176 = vadd.f32 %v1866, %v2070
        %v2177 = vadd.f32 %v1867, %v2073
        %v2178 = vadd.f32 %v1868, %v2078
        %v2179 = vadd.f32 %v1869, %v2081
        %v2180 = vadd.f32 %v1870, %v2086
        %v2181 = vadd.f32 %v1871, %v2089
        %v2182 = vadd.f32 %v1872, %v2094
        %v2183 = vadd.f32 %v1873, %v2097
        %v2184 = vadd.f32 %v1874, %v2102
        %v2185 = vadd.f32 %v1875, %v2105
        %v2186 = vadd.f32 %v1876, %v2110
        %v2187 = vadd.f32 %v1877, %v2113
        %v2188 = vadd.f32 %v1878, %v2118
        %v2189 = vadd.f32 %v1879, %v2121
        %v2190 = vadd.f32 %v1880, %v2126
        %v2191 = vadd.f32 %v1881, %v2129
        %v2192 = vadd.f32 %v1882, %v2134
        %v2193 = vadd.f32 %v1883, %v2137
        %v2194 = vadd.f32 %v1884, %v2142
        %v2195 = vadd.f32 %v1885, %v2145
        %v2196 = vadd.f32 %v1886, %v2150
        %v2197 = vadd.f32 %v1887, %v2153
        %v2198 = vadd.f32 %v1888, %v2158
        %v2199 = vadd.f32 %v1889, %v2161
        %s2200 = scalar_lea.vmem %s1, 12
        %v2201 = vld [vmem:[%s2200] sm:$0x3]
        %v2204 = vunpack.c.l.b16 %v289
        %v2205 = vunpack.c.l.b16 %v290
        %v2206 = vpack.c.b16 %v2204, %v1303
        %v2207 = vpack.c.b16 %v2205, %v2205
        %v2208 = vrot.slane %v2206, 2
        %v2209 = vsel %vm1892, %v1926, %v2208
        %v2210 = vrot.slane %v2207, 2
        %v2211 = vsel %vm1892, %v2208, %v2210
        %v2213 = vsel %vm536, %v2209, 0
        %v2216 = vsel %vm536, %v2211, 0
        %v2219 = vsel %vm591, %v2201, 0
        %2221 = vmatprep.subr.bf16.mxu0 0
        %2222 = vmatpush1.bf16.msra.mxu0 0
        %2223 = vmatprep.subr.bf16.mxu0 0
        %2224 = vmatpush1.bf16.msra.mxu0 0
        %2225 = vmatprep.subr.bf16.mxu0 0
        %2226 = vmatpush1.bf16.msra.mxu0 0
        %2227 = vmatprep.subr.bf16.mxu0 0
        %2228 = vmatpush1.bf16.msra.mxu0 0
        %2229 = vmatprep.subr.bf16.mxu0 0
        %2230 = vmatpush1.bf16.msra.mxu0 0
        %2231 = vmatprep.subr.bf16.mxu0 0
        %2232 = vmatpush1.bf16.msra.mxu0 0
        %2233 = vmatprep.subr.bf16.mxu0 0
        %2234 = vmatpush1.bf16.msra.mxu0 0
        %2235 = vmatprep.subr.bf16.mxu0 0
        %2236 = vmatpush1.bf16.msra.mxu0 %v2219
        %2237 = vmatprep.subr.bf16.mxu0 0
        %2238 = vmatpush2.bf16.msra.mxu0 0
        %2239 = vmatprep.subr.bf16.mxu0 0
        %2240 = vmatpush2.bf16.msra.mxu0 0
        %2241 = vmatprep.subr.bf16.mxu0 0
        %2242 = vmatpush2.bf16.msra.mxu0 0
        %2243 = vmatprep.subr.bf16.mxu0 0
        %2244 = vmatpush2.bf16.msra.mxu0 0
        %2245 = vmatprep.subr.bf16.mxu0 0
        %2246 = vmatpush2.bf16.msra.mxu0 0
        %2247 = vmatprep.subr.bf16.mxu0 0
        %2248 = vmatpush2.bf16.msra.mxu0 0
        %2249 = vmatprep.subr.bf16.mxu0 0
        %2250 = vmatpush2.bf16.msra.mxu0 0
        %2251 = vmatprep.subr.bf16.mxu0 0
        %2252 = vmatpush2.bf16.msra.mxu0 0
        %2253 = vmatprep.mubr.bf16.mxu0 0
        %2254 = vmatmul.mubr.bf16.gmra.mxu0 %v1934
        %v2255 = vpop.f32.mrf.mxu0
        %v2256 = vadd.f32 0.0, %v2255
        %v2257 = vpop.f32.mrf.mxu0
        %v2258 = vpop.f32.mrf.mxu0
        %v2259 = vadd.f32 0.0, %v2258
        %v2260 = vpop.f32.mrf.mxu0
        %2261 = vmatprep.mubr.bf16.mxu0 0
        %2262 = vmatmul.mubr.bf16.gmra.mxu0 %v1937
        %v2263 = vpop.f32.mrf.mxu0
        %v2264 = vadd.f32 0.0, %v2263
        %v2265 = vpop.f32.mrf.mxu0
        %v2266 = vpop.f32.mrf.mxu0
        %v2267 = vadd.f32 0.0, %v2266
        %v2268 = vpop.f32.mrf.mxu0
        %2269 = vmatprep.mubr.bf16.mxu0 0
        %2270 = vmatmul.mubr.bf16.gmra.mxu0 %v1940
        %v2271 = vpop.f32.mrf.mxu0
        %v2272 = vadd.f32 0.0, %v2271
        %v2273 = vpop.f32.mrf.mxu0
        %v2274 = vpop.f32.mrf.mxu0
        %v2275 = vadd.f32 0.0, %v2274
        %v2276 = vpop.f32.mrf.mxu0
        %2277 = vmatprep.mubr.bf16.mxu0 0
        %2278 = vmatmul.mubr.bf16.gmra.mxu0 %v1943
        %v2279 = vpop.f32.mrf.mxu0
        %v2280 = vadd.f32 0.0, %v2279
        %v2281 = vpop.f32.mrf.mxu0
        %v2282 = vpop.f32.mrf.mxu0
        %v2283 = vadd.f32 0.0, %v2282
        %v2284 = vpop.f32.mrf.mxu0
        %2285 = vmatprep.mubr.bf16.mxu0 0
        %2286 = vmatmul.mubr.bf16.gmra.mxu0 %v1946
        %v2287 = vpop.f32.mrf.mxu0
        %v2288 = vadd.f32 0.0, %v2287
        %v2289 = vpop.f32.mrf.mxu0
        %v2290 = vpop.f32.mrf.mxu0
        %v2291 = vadd.f32 0.0, %v2290
        %v2292 = vpop.f32.mrf.mxu0
        %2293 = vmatprep.mubr.bf16.mxu0 0
        %2294 = vmatmul.mubr.bf16.gmra.mxu0 %v1949
        %v2295 = vpop.f32.mrf.mxu0
        %v2296 = vadd.f32 0.0, %v2295
        %v2297 = vpop.f32.mrf.mxu0
        %v2298 = vpop.f32.mrf.mxu0
        %v2299 = vadd.f32 0.0, %v2298
        %v2300 = vpop.f32.mrf.mxu0
        %2301 = vmatprep.mubr.bf16.mxu0 0
        %2302 = vmatmul.mubr.bf16.gmra.mxu0 %v1952
        %v2303 = vpop.f32.mrf.mxu0
        %v2304 = vadd.f32 0.0, %v2303
        %v2305 = vpop.f32.mrf.mxu0
        %v2306 = vpop.f32.mrf.mxu0
        %v2307 = vadd.f32 0.0, %v2306
        %v2308 = vpop.f32.mrf.mxu0
        %2309 = vmatprep.mubr.bf16.mxu0 0
        %2310 = vmatmul.mubr.bf16.gmra.mxu0 %v1955
        %v2311 = vpop.f32.mrf.mxu0
        %v2312 = vadd.f32 0.0, %v2311
        %v2313 = vpop.f32.mrf.mxu0
        %v2314 = vpop.f32.mrf.mxu0
        %v2315 = vadd.f32 0.0, %v2314
        %v2316 = vpop.f32.mrf.mxu0
        %2317 = vmatprep.mubr.bf16.mxu0 0
        %2318 = vmatmul.mubr.bf16.gmra.mxu0 %v1958
        %v2319 = vpop.f32.mrf.mxu0
        %v2320 = vadd.f32 0.0, %v2319
        %v2321 = vpop.f32.mrf.mxu0
        %v2322 = vpop.f32.mrf.mxu0
        %v2323 = vadd.f32 0.0, %v2322
        %v2324 = vpop.f32.mrf.mxu0
        %2325 = vmatprep.mubr.bf16.mxu0 0
        %2326 = vmatmul.mubr.bf16.gmra.mxu0 %v1961
        %v2327 = vpop.f32.mrf.mxu0
        %v2328 = vadd.f32 0.0, %v2327
        %v2329 = vpop.f32.mrf.mxu0
        %v2330 = vpop.f32.mrf.mxu0
        %v2331 = vadd.f32 0.0, %v2330
        %v2332 = vpop.f32.mrf.mxu0
        %2333 = vmatprep.mubr.bf16.mxu0 0
        %2334 = vmatmul.mubr.bf16.gmra.mxu0 %v1964
        %v2335 = vpop.f32.mrf.mxu0
        %v2336 = vadd.f32 0.0, %v2335
        %v2337 = vpop.f32.mrf.mxu0
        %v2338 = vpop.f32.mrf.mxu0
        %v2339 = vadd.f32 0.0, %v2338
        %v2340 = vpop.f32.mrf.mxu0
        %2341 = vmatprep.mubr.bf16.mxu0 0
        %2342 = vmatmul.mubr.bf16.gmra.mxu0 %v1967
        %v2343 = vpop.f32.mrf.mxu0
        %v2344 = vadd.f32 0.0, %v2343
        %v2345 = vpop.f32.mrf.mxu0
        %v2346 = vpop.f32.mrf.mxu0
        %v2347 = vadd.f32 0.0, %v2346
        %v2348 = vpop.f32.mrf.mxu0
        %2349 = vmatprep.mubr.bf16.mxu0 0
        %2350 = vmatmul.mubr.bf16.gmra.mxu0 %v1970
        %v2351 = vpop.f32.mrf.mxu0
        %v2352 = vadd.f32 0.0, %v2351
        %v2353 = vpop.f32.mrf.mxu0
        %v2354 = vpop.f32.mrf.mxu0
        %v2355 = vadd.f32 0.0, %v2354
        %v2356 = vpop.f32.mrf.mxu0
        %2357 = vmatprep.mubr.bf16.mxu0 0
        %2358 = vmatmul.mubr.bf16.gmra.mxu0 %v1973
        %v2359 = vpop.f32.mrf.mxu0
        %v2360 = vadd.f32 0.0, %v2359
        %v2361 = vpop.f32.mrf.mxu0
        %v2362 = vpop.f32.mrf.mxu0
        %v2363 = vadd.f32 0.0, %v2362
        %v2364 = vpop.f32.mrf.mxu0
        %2365 = vmatprep.mubr.bf16.mxu0 0
        %2366 = vmatmul.mubr.bf16.gmra.mxu0 %v1976
        %v2367 = vpop.f32.mrf.mxu0
        %v2368 = vadd.f32 0.0, %v2367
        %v2369 = vpop.f32.mrf.mxu0
        %v2370 = vpop.f32.mrf.mxu0
        %v2371 = vadd.f32 0.0, %v2370
        %v2372 = vpop.f32.mrf.mxu0
        %2373 = vmatprep.mubr.bf16.mxu0 0
        %2374 = vmatmul.mubr.bf16.gmra.mxu0 %v1979
        %v2375 = vpop.f32.mrf.mxu0
        %v2376 = vadd.f32 0.0, %v2375
        %v2377 = vpop.f32.mrf.mxu0
        %v2378 = vpop.f32.mrf.mxu0
        %v2379 = vadd.f32 0.0, %v2378
        %v2380 = vpop.f32.mrf.mxu0
        %2381 = vmatprep.mubr.bf16.mxu0 0
        %2382 = vmatmul.mubr.bf16.gmra.mxu0 %v2213
        %v2383 = vpop.f32.mrf.mxu0
        %v2384 = vadd.f32 0.0, %v2383
        %v2385 = vpop.f32.mrf.mxu0
        %v2386 = vpop.f32.mrf.mxu0
        %v2387 = vadd.f32 0.0, %v2386
        %v2388 = vpop.f32.mrf.mxu0
        %2389 = vmatprep.mubr.bf16.mxu0 0
        %2390 = vmatmul.mubr.bf16.gmra.mxu0 %v2216
        %v2391 = vpop.f32.mrf.mxu0
        %v2392 = vadd.f32 0.0, %v2391
        %v2393 = vpop.f32.mrf.mxu0
        %v2394 = vpop.f32.mrf.mxu0
        %v2395 = vadd.f32 0.0, %v2394
        %v2396 = vpop.f32.mrf.mxu0
        %2397 = vdwg.mxu0
        %v2398 = vadd.f32 %v2164, %v2256
        %v2399 = vadd.f32 %v2165, %v2259
        %v2400 = vadd.f32 %v2166, %v2264
        %v2401 = vadd.f32 %v2167, %v2267
        %v2402 = vadd.f32 %v2168, %v2272
        %v2403 = vadd.f32 %v2169, %v2275
        %v2404 = vadd.f32 %v2170, %v2280
        %v2405 = vadd.f32 %v2171, %v2283
        %v2406 = vadd.f32 %v2172, %v2288
        %v2407 = vadd.f32 %v2173, %v2291
        %v2408 = vadd.f32 %v2174, %v2296
        %v2409 = vadd.f32 %v2175, %v2299
        %v2410 = vadd.f32 %v2176, %v2304
        %v2411 = vadd.f32 %v2177, %v2307
        %v2412 = vadd.f32 %v2178, %v2312
        %v2413 = vadd.f32 %v2179, %v2315
        %v2414 = vadd.f32 %v2180, %v2320
        %v2415 = vadd.f32 %v2181, %v2323
        %v2416 = vadd.f32 %v2182, %v2328
        %v2417 = vadd.f32 %v2183, %v2331
        %v2418 = vadd.f32 %v2184, %v2336
        %v2419 = vadd.f32 %v2185, %v2339
        %v2420 = vadd.f32 %v2186, %v2344
        %v2421 = vadd.f32 %v2187, %v2347
        %v2422 = vadd.f32 %v2188, %v2352
        %v2423 = vadd.f32 %v2189, %v2355
        %v2424 = vadd.f32 %v2190, %v2360
        %v2425 = vadd.f32 %v2191, %v2363
        %v2426 = vadd.f32 %v2192, %v2368
        %v2427 = vadd.f32 %v2193, %v2371
        %v2428 = vadd.f32 %v2194, %v2376
        %v2429 = vadd.f32 %v2195, %v2379
        %v2430 = vadd.f32 %v2196, %v2384
        %v2431 = vadd.f32 %v2197, %v2387
        %v2432 = vadd.f32 %v2198, %v2392
        %v2433 = vadd.f32 %v2199, %v2395
        %s2434 = scalar_lea.vmem %s1, 14
        %v2435 = vld [vmem:[%s2434] sm:$0x3]
        %vm2436 = vsmask.f32 5376
        %v2437 = vrot.slane %v408, 2
        %v2438 = vrot.slane %v404, 3
        %v2439 = vor.u32 %v2437, %v2438
        %v2440 = vrot.slane %v416, 2
        %v2441 = vrot.slane %v412, 3
        %v2442 = vor.u32 %v2440, %v2441
        %v2443 = vsel %vm2436, %v2439, %v2442
        %v2444 = vrot.slane %v424, 2
        %v2445 = vrot.slane %v420, 3
        %v2446 = vor.u32 %v2444, %v2445
        %v2447 = vsel %vm2436, %v2442, %v2446
        %v2448 = vrot.slane %v432, 2
        %v2449 = vrot.slane %v428, 3
        %v2450 = vor.u32 %v2448, %v2449
        %v2451 = vsel %vm2436, %v2446, %v2450
        %v2452 = vrot.slane %v440, 2
        %v2453 = vrot.slane %v436, 3
        %v2454 = vor.u32 %v2452, %v2453
        %v2455 = vsel %vm2436, %v2450, %v2454
        %v2456 = vrot.slane %v448, 2
        %v2457 = vrot.slane %v444, 3
        %v2458 = vor.u32 %v2456, %v2457
        %v2459 = vsel %vm2436, %v2454, %v2458
        %v2460 = vrot.slane %v456, 2
        %v2461 = vrot.slane %v452, 3
        %v2462 = vor.u32 %v2460, %v2461
        %v2463 = vsel %vm2436, %v2458, %v2462
        %v2464 = vrot.slane %v464, 2
        %v2465 = vrot.slane %v460, 3
        %v2466 = vor.u32 %v2464, %v2465
        %v2467 = vsel %vm2436, %v2462, %v2466
        %v2468 = vrot.slane %v472, 2
        %v2469 = vrot.slane %v468, 3
        %v2470 = vor.u32 %v2468, %v2469
        %v2471 = vsel %vm2436, %v2466, %v2470
        %v2472 = vrot.slane %v480, 2
        %v2473 = vrot.slane %v476, 3
        %v2474 = vor.u32 %v2472, %v2473
        %v2475 = vsel %vm2436, %v2470, %v2474
        %v2476 = vrot.slane %v488, 2
        %v2477 = vrot.slane %v484, 3
        %v2478 = vor.u32 %v2476, %v2477
        %v2479 = vsel %vm2436, %v2474, %v2478
        %v2480 = vrot.slane %v496, 2
        %v2481 = vrot.slane %v492, 3
        %v2482 = vor.u32 %v2480, %v2481
        %v2483 = vsel %vm2436, %v2478, %v2482
        %v2484 = vrot.slane %v504, 2
        %v2485 = vrot.slane %v500, 3
        %v2486 = vor.u32 %v2484, %v2485
        %v2487 = vsel %vm2436, %v2482, %v2486
        %v2488 = vrot.slane %v512, 2
        %v2489 = vrot.slane %v508, 3
        %v2490 = vor.u32 %v2488, %v2489
        %v2491 = vsel %vm2436, %v2486, %v2490
        %v2492 = vrot.slane %v520, 2
        %v2493 = vrot.slane %v516, 3
        %v2494 = vor.u32 %v2492, %v2493
        %v2495 = vsel %vm2436, %v2490, %v2494
        %v2496 = vrot.slane %v528, 2
        %v2497 = vrot.slane %v524, 3
        %v2498 = vor.u32 %v2496, %v2497
        %v2499 = vsel %vm2436, %v2494, %v2498
        %v2500 = vrot.slane %v1603, 2
        %v2501 = vrot.slane %v1606, 3
        %v2502 = vor.u32 %v2500, %v2501
        %v2503 = vsel %vm2436, %v2498, %v2502
        %v2505 = vshrl.u32 %v2206, 16
        %v2507 = vrot.slane %v2505, 2
        %v2508 = vshll.u32 %v2206, 16
        %v2510 = vrot.slane %v2508, 3
        %v2511 = vor.u32 %v2507, %v2510
        %v2512 = vsel %vm2436, %v2502, %v2511
        %v2514 = vshrl.u32 %v2207, 16
        %v2516 = vrot.slane %v2514, 2
        %v2517 = vshll.u32 %v2207, 16
        %v2519 = vrot.slane %v2517, 3
        %v2520 = vor.u32 %v2516, %v2519
        %v2521 = vsel %vm2436, %v2511, %v2520
        %v2523 = vsel %vm536, %v2443, 0
        %v2526 = vsel %vm536, %v2447, 0
        %v2529 = vsel %vm536, %v2451, 0
        %v2532 = vsel %vm536, %v2455, 0
        %v2535 = vsel %vm536, %v2459, 0
        %v2538 = vsel %vm536, %v2463, 0
        %v2541 = vsel %vm536, %v2467, 0
        %v2544 = vsel %vm536, %v2471, 0
        %v2547 = vsel %vm536, %v2475, 0
        %v2550 = vsel %vm536, %v2479, 0
        %v2553 = vsel %vm536, %v2483, 0
        %v2556 = vsel %vm536, %v2487, 0
        %v2559 = vsel %vm536, %v2491, 0
        %v2562 = vsel %vm536, %v2495, 0
        %v2565 = vsel %vm536, %v2499, 0
        %v2568 = vsel %vm536, %v2503, 0
        %v2571 = vsel %vm536, %v2512, 0
        %v2574 = vsel %vm536, %v2521, 0
        %v2577 = vsel %vm591, %v2435, 0
        %2579 = vmatprep.subr.bf16.mxu0 0
        %2580 = vmatpush1.bf16.msra.mxu0 0
        %2581 = vmatprep.subr.bf16.mxu0 0
        %2582 = vmatpush1.bf16.msra.mxu0 0
        %2583 = vmatprep.subr.bf16.mxu0 0
        %2584 = vmatpush1.bf16.msra.mxu0 0
        %2585 = vmatprep.subr.bf16.mxu0 0
        %2586 = vmatpush1.bf16.msra.mxu0 0
        %2587 = vmatprep.subr.bf16.mxu0 0
        %2588 = vmatpush1.bf16.msra.mxu0 0
        %2589 = vmatprep.subr.bf16.mxu0 0
        %2590 = vmatpush1.bf16.msra.mxu0 0
        %2591 = vmatprep.subr.bf16.mxu0 0
        %2592 = vmatpush1.bf16.msra.mxu0 0
        %2593 = vmatprep.subr.bf16.mxu0 0
        %2594 = vmatpush1.bf16.msra.mxu0 %v2577
        %2595 = vmatprep.subr.bf16.mxu0 0
        %2596 = vmatpush2.bf16.msra.mxu0 0
        %2597 = vmatprep.subr.bf16.mxu0 0
        %2598 = vmatpush2.bf16.msra.mxu0 0
        %2599 = vmatprep.subr.bf16.mxu0 0
        %2600 = vmatpush2.bf16.msra.mxu0 0
        %2601 = vmatprep.subr.bf16.mxu0 0
        %2602 = vmatpush2.bf16.msra.mxu0 0
        %2603 = vmatprep.subr.bf16.mxu0 0
        %2604 = vmatpush2.bf16.msra.mxu0 0
        %2605 = vmatprep.subr.bf16.mxu0 0
        %2606 = vmatpush2.bf16.msra.mxu0 0
        %2607 = vmatprep.subr.bf16.mxu0 0
        %2608 = vmatpush2.bf16.msra.mxu0 0
        %2609 = vmatprep.subr.bf16.mxu0 0
        %2610 = vmatpush2.bf16.msra.mxu0 0
        %2611 = vmatprep.mubr.bf16.mxu0 0
        %2612 = vmatmul.mubr.bf16.gmra.mxu0 %v2523
        %v2613 = vpop.f32.mrf.mxu0
        %v2614 = vadd.f32 0.0, %v2613
        %v2615 = vpop.f32.mrf.mxu0
        %v2616 = vpop.f32.mrf.mxu0
        %v2617 = vadd.f32 0.0, %v2616
        %v2618 = vpop.f32.mrf.mxu0
        %2619 = vmatprep.mubr.bf16.mxu0 0
        %2620 = vmatmul.mubr.bf16.gmra.mxu0 %v2526
        %v2621 = vpop.f32.mrf.mxu0
        %v2622 = vadd.f32 0.0, %v2621
        %v2623 = vpop.f32.mrf.mxu0
        %v2624 = vpop.f32.mrf.mxu0
        %v2625 = vadd.f32 0.0, %v2624
        %v2626 = vpop.f32.mrf.mxu0
        %2627 = vmatprep.mubr.bf16.mxu0 0
        %2628 = vmatmul.mubr.bf16.gmra.mxu0 %v2529
        %v2629 = vpop.f32.mrf.mxu0
        %v2630 = vadd.f32 0.0, %v2629
        %v2631 = vpop.f32.mrf.mxu0
        %v2632 = vpop.f32.mrf.mxu0
        %v2633 = vadd.f32 0.0, %v2632
        %v2634 = vpop.f32.mrf.mxu0
        %2635 = vmatprep.mubr.bf16.mxu0 0
        %2636 = vmatmul.mubr.bf16.gmra.mxu0 %v2532
        %v2637 = vpop.f32.mrf.mxu0
        %v2638 = vadd.f32 0.0, %v2637
        %v2639 = vpop.f32.mrf.mxu0
        %v2640 = vpop.f32.mrf.mxu0
        %v2641 = vadd.f32 0.0, %v2640
        %v2642 = vpop.f32.mrf.mxu0
        %2643 = vmatprep.mubr.bf16.mxu0 0
        %2644 = vmatmul.mubr.bf16.gmra.mxu0 %v2535
        %v2645 = vpop.f32.mrf.mxu0
        %v2646 = vadd.f32 0.0, %v2645
        %v2647 = vpop.f32.mrf.mxu0
        %v2648 = vpop.f32.mrf.mxu0
        %v2649 = vadd.f32 0.0, %v2648
        %v2650 = vpop.f32.mrf.mxu0
        %2651 = vmatprep.mubr.bf16.mxu0 0
        %2652 = vmatmul.mubr.bf16.gmra.mxu0 %v2538
        %v2653 = vpop.f32.mrf.mxu0
        %v2654 = vadd.f32 0.0, %v2653
        %v2655 = vpop.f32.mrf.mxu0
        %v2656 = vpop.f32.mrf.mxu0
        %v2657 = vadd.f32 0.0, %v2656
        %v2658 = vpop.f32.mrf.mxu0
        %2659 = vmatprep.mubr.bf16.mxu0 0
        %2660 = vmatmul.mubr.bf16.gmra.mxu0 %v2541
        %v2661 = vpop.f32.mrf.mxu0
        %v2662 = vadd.f32 0.0, %v2661
        %v2663 = vpop.f32.mrf.mxu0
        %v2664 = vpop.f32.mrf.mxu0
        %v2665 = vadd.f32 0.0, %v2664
        %v2666 = vpop.f32.mrf.mxu0
        %2667 = vmatprep.mubr.bf16.mxu0 0
        %2668 = vmatmul.mubr.bf16.gmra.mxu0 %v2544
        %v2669 = vpop.f32.mrf.mxu0
        %v2670 = vadd.f32 0.0, %v2669
        %v2671 = vpop.f32.mrf.mxu0
        %v2672 = vpop.f32.mrf.mxu0
        %v2673 = vadd.f32 0.0, %v2672
        %v2674 = vpop.f32.mrf.mxu0
        %2675 = vmatprep.mubr.bf16.mxu0 0
        %2676 = vmatmul.mubr.bf16.gmra.mxu0 %v2547
        %v2677 = vpop.f32.mrf.mxu0
        %v2678 = vadd.f32 0.0, %v2677
        %v2679 = vpop.f32.mrf.mxu0
        %v2680 = vpop.f32.mrf.mxu0
        %v2681 = vadd.f32 0.0, %v2680
        %v2682 = vpop.f32.mrf.mxu0
        %2683 = vmatprep.mubr.bf16.mxu0 0
        %2684 = vmatmul.mubr.bf16.gmra.mxu0 %v2550
        %v2685 = vpop.f32.mrf.mxu0
        %v2686 = vadd.f32 0.0, %v2685
        %v2687 = vpop.f32.mrf.mxu0
        %v2688 = vpop.f32.mrf.mxu0
        %v2689 = vadd.f32 0.0, %v2688
        %v2690 = vpop.f32.mrf.mxu0
        %2691 = vmatprep.mubr.bf16.mxu0 0
        %2692 = vmatmul.mubr.bf16.gmra.mxu0 %v2553
        %v2693 = vpop.f32.mrf.mxu0
        %v2694 = vadd.f32 0.0, %v2693
        %v2695 = vpop.f32.mrf.mxu0
        %v2696 = vpop.f32.mrf.mxu0
        %v2697 = vadd.f32 0.0, %v2696
        %v2698 = vpop.f32.mrf.mxu0
        %2699 = vmatprep.mubr.bf16.mxu0 0
        %2700 = vmatmul.mubr.bf16.gmra.mxu0 %v2556
        %v2701 = vpop.f32.mrf.mxu0
        %v2702 = vadd.f32 0.0, %v2701
        %v2703 = vpop.f32.mrf.mxu0
        %v2704 = vpop.f32.mrf.mxu0
        %v2705 = vadd.f32 0.0, %v2704
        %v2706 = vpop.f32.mrf.mxu0
        %2707 = vmatprep.mubr.bf16.mxu0 0
        %2708 = vmatmul.mubr.bf16.gmra.mxu0 %v2559
        %v2709 = vpop.f32.mrf.mxu0
        %v2710 = vadd.f32 0.0, %v2709
        %v2711 = vpop.f32.mrf.mxu0
        %v2712 = vpop.f32.mrf.mxu0
        %v2713 = vadd.f32 0.0, %v2712
        %v2714 = vpop.f32.mrf.mxu0
        %2715 = vmatprep.mubr.bf16.mxu0 0
        %2716 = vmatmul.mubr.bf16.gmra.mxu0 %v2562
        %v2717 = vpop.f32.mrf.mxu0
        %v2718 = vadd.f32 0.0, %v2717
        %v2719 = vpop.f32.mrf.mxu0
        %v2720 = vpop.f32.mrf.mxu0
        %v2721 = vadd.f32 0.0, %v2720
        %v2722 = vpop.f32.mrf.mxu0
        %2723 = vmatprep.mubr.bf16.mxu0 0
        %2724 = vmatmul.mubr.bf16.gmra.mxu0 %v2565
        %v2725 = vpop.f32.mrf.mxu0
        %v2726 = vadd.f32 0.0, %v2725
        %v2727 = vpop.f32.mrf.mxu0
        %v2728 = vpop.f32.mrf.mxu0
        %v2729 = vadd.f32 0.0, %v2728
        %v2730 = vpop.f32.mrf.mxu0
        %2731 = vmatprep.mubr.bf16.mxu0 0
        %2732 = vmatmul.mubr.bf16.gmra.mxu0 %v2568
        %v2733 = vpop.f32.mrf.mxu0
        %v2734 = vadd.f32 0.0, %v2733
        %v2735 = vpop.f32.mrf.mxu0
        %v2736 = vpop.f32.mrf.mxu0
        %v2737 = vadd.f32 0.0, %v2736
        %v2738 = vpop.f32.mrf.mxu0
        %2739 = vmatprep.mubr.bf16.mxu0 0
        %2740 = vmatmul.mubr.bf16.gmra.mxu0 %v2571
        %v2741 = vpop.f32.mrf.mxu0
        %v2742 = vadd.f32 0.0, %v2741
        %v2743 = vpop.f32.mrf.mxu0
        %v2744 = vpop.f32.mrf.mxu0
        %v2745 = vadd.f32 0.0, %v2744
        %v2746 = vpop.f32.mrf.mxu0
        %2747 = vmatprep.mubr.bf16.mxu0 0
        %2748 = vmatmul.mubr.bf16.gmra.mxu0 %v2574
        %v2749 = vpop.f32.mrf.mxu0
        %v2750 = vadd.f32 0.0, %v2749
        %v2751 = vpop.f32.mrf.mxu0
        %v2752 = vpop.f32.mrf.mxu0
        %v2753 = vadd.f32 0.0, %v2752
        %v2754 = vpop.f32.mrf.mxu0
        %2755 = vdwg.mxu0
        %v2756 = vadd.f32 %v2398, %v2614
        %v2757 = vadd.f32 %v2399, %v2617
        %v2758 = vadd.f32 %v2400, %v2622
        %v2759 = vadd.f32 %v2401, %v2625
        %v2760 = vadd.f32 %v2402, %v2630
        %v2761 = vadd.f32 %v2403, %v2633
        %v2762 = vadd.f32 %v2404, %v2638
        %v2763 = vadd.f32 %v2405, %v2641
        %v2764 = vadd.f32 %v2406, %v2646
        %v2765 = vadd.f32 %v2407, %v2649
        %v2766 = vadd.f32 %v2408, %v2654
        %v2767 = vadd.f32 %v2409, %v2657
        %v2768 = vadd.f32 %v2410, %v2662
        %v2769 = vadd.f32 %v2411, %v2665
        %v2770 = vadd.f32 %v2412, %v2670
        %v2771 = vadd.f32 %v2413, %v2673
        %v2772 = vadd.f32 %v2414, %v2678
        %v2773 = vadd.f32 %v2415, %v2681
        %v2774 = vadd.f32 %v2416, %v2686
        %v2775 = vadd.f32 %v2417, %v2689
        %v2776 = vadd.f32 %v2418, %v2694
        %v2777 = vadd.f32 %v2419, %v2697
        %v2778 = vadd.f32 %v2420, %v2702
        %v2779 = vadd.f32 %v2421, %v2705
        %v2780 = vadd.f32 %v2422, %v2710
        %v2781 = vadd.f32 %v2423, %v2713
        %v2782 = vadd.f32 %v2424, %v2718
        %v2783 = vadd.f32 %v2425, %v2721
        %v2784 = vadd.f32 %v2426, %v2726
        %v2785 = vadd.f32 %v2427, %v2729
        %v2786 = vadd.f32 %v2428, %v2734
        %v2787 = vadd.f32 %v2429, %v2737
        %v2788 = vadd.f32 %v2430, %v2742
        %v2789 = vadd.f32 %v2431, %v2745
        %v2790 = vadd.f32 %v2432, %v2750
        %v2791 = vadd.f32 %v2433, %v2753
        %s2792 = scalar_lea.vmem %s1, 16
        %v2793 = vld [vmem:[%s2792] sm:$0x3]
        %vm2794 = vcmask 1044480
        %v2795 = vrot.slane %v370, 3
        %v2796 = vrot.slane %v371, 3
        %v2797 = vsel %vm2794, %v2795, %v2796
        %v2798 = vrot.slane %v372, 3
        %v2799 = vsel %vm2794, %v2796, %v2798
        %v2800 = vrot.slane %v373, 3
        %v2801 = vsel %vm2794, %v2798, %v2800
        %v2802 = vrot.slane %v374, 3
        %v2803 = vsel %vm2794, %v2800, %v2802
        %v2804 = vrot.slane %v375, 3
        %v2805 = vsel %vm2794, %v2802, %v2804
        %v2806 = vrot.slane %v376, 3
        %v2807 = vsel %vm2794, %v2804, %v2806
        %v2808 = vrot.slane %v377, 3
        %v2809 = vsel %vm2794, %v2806, %v2808
        %v2810 = vrot.slane %v378, 3
        %v2811 = vsel %vm2794, %v2808, %v2810
        %v2812 = vrot.slane %v379, 3
        %v2813 = vsel %vm2794, %v2810, %v2812
        %v2814 = vrot.slane %v380, 3
        %v2815 = vsel %vm2794, %v2812, %v2814
        %v2816 = vrot.slane %v381, 3
        %v2817 = vsel %vm2794, %v2814, %v2816
        %v2818 = vrot.slane %v382, 3
        %v2819 = vsel %vm2794, %v2816, %v2818
        %v2820 = vrot.slane %v383, 3
        %v2821 = vsel %vm2794, %v2818, %v2820
        %v2822 = vrot.slane %v384, 3
        %v2823 = vsel %vm2794, %v2820, %v2822
        %v2824 = vrot.slane %v385, 3
        %v2825 = vsel %vm2794, %v2822, %v2824
        %v2826 = vrot.slane %v1304, 3
        %v2827 = vsel %vm2794, %v2824, %v2826
        %v2828 = vrot.slane %v2206, 3
        %v2829 = vsel %vm2794, %v2826, %v2828
        %v2830 = vrot.slane %v2207, 3
        %v2831 = vsel %vm2794, %v2828, %v2830
        %v2833 = vsel %vm536, %v2797, 0
        %v2836 = vsel %vm536, %v2799, 0
        %v2839 = vsel %vm536, %v2801, 0
        %v2842 = vsel %vm536, %v2803, 0
        %v2845 = vsel %vm536, %v2805, 0
        %v2848 = vsel %vm536, %v2807, 0
        %v2851 = vsel %vm536, %v2809, 0
        %v2854 = vsel %vm536, %v2811, 0
        %v2857 = vsel %vm536, %v2813, 0
        %v2860 = vsel %vm536, %v2815, 0
        %v2863 = vsel %vm536, %v2817, 0
        %v2866 = vsel %vm536, %v2819, 0
        %v2869 = vsel %vm536, %v2821, 0
        %v2872 = vsel %vm536, %v2823, 0
        %v2875 = vsel %vm536, %v2825, 0
        %v2878 = vsel %vm536, %v2827, 0
        %v2881 = vsel %vm536, %v2829, 0
        %v2884 = vsel %vm536, %v2831, 0
        %v2887 = vsel %vm591, %v2793, 0
        %2889 = vmatprep.subr.bf16.mxu0 0
        %2890 = vmatpush1.bf16.msra.mxu0 0
        %2891 = vmatprep.subr.bf16.mxu0 0
        %2892 = vmatpush1.bf16.msra.mxu0 0
        %2893 = vmatprep.subr.bf16.mxu0 0
        %2894 = vmatpush1.bf16.msra.mxu0 0
        %2895 = vmatprep.subr.bf16.mxu0 0
        %2896 = vmatpush1.bf16.msra.mxu0 0
        %2897 = vmatprep.subr.bf16.mxu0 0
        %2898 = vmatpush1.bf16.msra.mxu0 0
        %2899 = vmatprep.subr.bf16.mxu0 0
        %2900 = vmatpush1.bf16.msra.mxu0 0
        %2901 = vmatprep.subr.bf16.mxu0 0
        %2902 = vmatpush1.bf16.msra.mxu0 0
        %2903 = vmatprep.subr.bf16.mxu0 0
        %2904 = vmatpush1.bf16.msra.mxu0 %v2887
        %2905 = vmatprep.subr.bf16.mxu0 0
        %2906 = vmatpush2.bf16.msra.mxu0 0
        %2907 = vmatprep.subr.bf16.mxu0 0
        %2908 = vmatpush2.bf16.msra.mxu0 0
        %2909 = vmatprep.subr.bf16.mxu0 0
        %2910 = vmatpush2.bf16.msra.mxu0 0
        %2911 = vmatprep.subr.bf16.mxu0 0
        %2912 = vmatpush2.bf16.msra.mxu0 0
        %2913 = vmatprep.subr.bf16.mxu0 0
        %2914 = vmatpush2.bf16.msra.mxu0 0
        %2915 = vmatprep.subr.bf16.mxu0 0
        %2916 = vmatpush2.bf16.msra.mxu0 0
        %2917 = vmatprep.subr.bf16.mxu0 0
        %2918 = vmatpush2.bf16.msra.mxu0 0
        %2919 = vmatprep.subr.bf16.mxu0 0
        %2920 = vmatpush2.bf16.msra.mxu0 0
        %2921 = vmatprep.mubr.bf16.mxu0 0
        %2922 = vmatmul.mubr.bf16.gmra.mxu0 %v2833
        %v2923 = vpop.f32.mrf.mxu0
        %v2924 = vadd.f32 0.0, %v2923
        %v2925 = vpop.f32.mrf.mxu0
        %v2926 = vpop.f32.mrf.mxu0
        %v2927 = vadd.f32 0.0, %v2926
        %v2928 = vpop.f32.mrf.mxu0
        %2929 = vmatprep.mubr.bf16.mxu0 0
        %2930 = vmatmul.mubr.bf16.gmra.mxu0 %v2836
        %v2931 = vpop.f32.mrf.mxu0
        %v2932 = vadd.f32 0.0, %v2931
        %v2933 = vpop.f32.mrf.mxu0
        %v2934 = vpop.f32.mrf.mxu0
        %v2935 = vadd.f32 0.0, %v2934
        %v2936 = vpop.f32.mrf.mxu0
        %2937 = vmatprep.mubr.bf16.mxu0 0
        %2938 = vmatmul.mubr.bf16.gmra.mxu0 %v2839
        %v2939 = vpop.f32.mrf.mxu0
        %v2940 = vadd.f32 0.0, %v2939
        %v2941 = vpop.f32.mrf.mxu0
        %v2942 = vpop.f32.mrf.mxu0
        %v2943 = vadd.f32 0.0, %v2942
        %v2944 = vpop.f32.mrf.mxu0
        %2945 = vmatprep.mubr.bf16.mxu0 0
        %2946 = vmatmul.mubr.bf16.gmra.mxu0 %v2842
        %v2947 = vpop.f32.mrf.mxu0
        %v2948 = vadd.f32 0.0, %v2947
        %v2949 = vpop.f32.mrf.mxu0
        %v2950 = vpop.f32.mrf.mxu0
        %v2951 = vadd.f32 0.0, %v2950
        %v2952 = vpop.f32.mrf.mxu0
        %2953 = vmatprep.mubr.bf16.mxu0 0
        %2954 = vmatmul.mubr.bf16.gmra.mxu0 %v2845
        %v2955 = vpop.f32.mrf.mxu0
        %v2956 = vadd.f32 0.0, %v2955
        %v2957 = vpop.f32.mrf.mxu0
        %v2958 = vpop.f32.mrf.mxu0
        %v2959 = vadd.f32 0.0, %v2958
        %v2960 = vpop.f32.mrf.mxu0
        %2961 = vmatprep.mubr.bf16.mxu0 0
        %2962 = vmatmul.mubr.bf16.gmra.mxu0 %v2848
        %v2963 = vpop.f32.mrf.mxu0
        %v2964 = vadd.f32 0.0, %v2963
        %v2965 = vpop.f32.mrf.mxu0
        %v2966 = vpop.f32.mrf.mxu0
        %v2967 = vadd.f32 0.0, %v2966
        %v2968 = vpop.f32.mrf.mxu0
        %2969 = vmatprep.mubr.bf16.mxu0 0
        %2970 = vmatmul.mubr.bf16.gmra.mxu0 %v2851
        %v2971 = vpop.f32.mrf.mxu0
        %v2972 = vadd.f32 0.0, %v2971
        %v2973 = vpop.f32.mrf.mxu0
        %v2974 = vpop.f32.mrf.mxu0
        %v2975 = vadd.f32 0.0, %v2974
        %v2976 = vpop.f32.mrf.mxu0
        %2977 = vmatprep.mubr.bf16.mxu0 0
        %2978 = vmatmul.mubr.bf16.gmra.mxu0 %v2854
        %v2979 = vpop.f32.mrf.mxu0
        %v2980 = vadd.f32 0.0, %v2979
        %v2981 = vpop.f32.mrf.mxu0
        %v2982 = vpop.f32.mrf.mxu0
        %v2983 = vadd.f32 0.0, %v2982
        %v2984 = vpop.f32.mrf.mxu0
        %2985 = vmatprep.mubr.bf16.mxu0 0
        %2986 = vmatmul.mubr.bf16.gmra.mxu0 %v2857
        %v2987 = vpop.f32.mrf.mxu0
        %v2988 = vadd.f32 0.0, %v2987
        %v2989 = vpop.f32.mrf.mxu0
        %v2990 = vpop.f32.mrf.mxu0
        %v2991 = vadd.f32 0.0, %v2990
        %v2992 = vpop.f32.mrf.mxu0
        %2993 = vmatprep.mubr.bf16.mxu0 0
        %2994 = vmatmul.mubr.bf16.gmra.mxu0 %v2860
        %v2995 = vpop.f32.mrf.mxu0
        %v2996 = vadd.f32 0.0, %v2995
        %v2997 = vpop.f32.mrf.mxu0
        %v2998 = vpop.f32.mrf.mxu0
        %v2999 = vadd.f32 0.0, %v2998
        %v3000 = vpop.f32.mrf.mxu0
        %3001 = vmatprep.mubr.bf16.mxu0 0
        %3002 = vmatmul.mubr.bf16.gmra.mxu0 %v2863
        %v3003 = vpop.f32.mrf.mxu0
        %v3004 = vadd.f32 0.0, %v3003
        %v3005 = vpop.f32.mrf.mxu0
        %v3006 = vpop.f32.mrf.mxu0
        %v3007 = vadd.f32 0.0, %v3006
        %v3008 = vpop.f32.mrf.mxu0
        %3009 = vmatprep.mubr.bf16.mxu0 0
        %3010 = vmatmul.mubr.bf16.gmra.mxu0 %v2866
        %v3011 = vpop.f32.mrf.mxu0
        %v3012 = vadd.f32 0.0, %v3011
        %v3013 = vpop.f32.mrf.mxu0
        %v3014 = vpop.f32.mrf.mxu0
        %v3015 = vadd.f32 0.0, %v3014
        %v3016 = vpop.f32.mrf.mxu0
        %3017 = vmatprep.mubr.bf16.mxu0 0
        %3018 = vmatmul.mubr.bf16.gmra.mxu0 %v2869
        %v3019 = vpop.f32.mrf.mxu0
        %v3020 = vadd.f32 0.0, %v3019
        %v3021 = vpop.f32.mrf.mxu0
        %v3022 = vpop.f32.mrf.mxu0
        %v3023 = vadd.f32 0.0, %v3022
        %v3024 = vpop.f32.mrf.mxu0
        %3025 = vmatprep.mubr.bf16.mxu0 0
        %3026 = vmatmul.mubr.bf16.gmra.mxu0 %v2872
        %v3027 = vpop.f32.mrf.mxu0
        %v3028 = vadd.f32 0.0, %v3027
        %v3029 = vpop.f32.mrf.mxu0
        %v3030 = vpop.f32.mrf.mxu0
        %v3031 = vadd.f32 0.0, %v3030
        %v3032 = vpop.f32.mrf.mxu0
        %3033 = vmatprep.mubr.bf16.mxu0 0
        %3034 = vmatmul.mubr.bf16.gmra.mxu0 %v2875
        %v3035 = vpop.f32.mrf.mxu0
        %v3036 = vadd.f32 0.0, %v3035
        %v3037 = vpop.f32.mrf.mxu0
        %v3038 = vpop.f32.mrf.mxu0
        %v3039 = vadd.f32 0.0, %v3038
        %v3040 = vpop.f32.mrf.mxu0
        %3041 = vmatprep.mubr.bf16.mxu0 0
        %3042 = vmatmul.mubr.bf16.gmra.mxu0 %v2878
        %v3043 = vpop.f32.mrf.mxu0
        %v3044 = vadd.f32 0.0, %v3043
        %v3045 = vpop.f32.mrf.mxu0
        %v3046 = vpop.f32.mrf.mxu0
        %v3047 = vadd.f32 0.0, %v3046
        %v3048 = vpop.f32.mrf.mxu0
        %3049 = vmatprep.mubr.bf16.mxu0 0
        %3050 = vmatmul.mubr.bf16.gmra.mxu0 %v2881
        %v3051 = vpop.f32.mrf.mxu0
        %v3052 = vadd.f32 0.0, %v3051
        %v3053 = vpop.f32.mrf.mxu0
        %v3054 = vpop.f32.mrf.mxu0
        %v3055 = vadd.f32 0.0, %v3054
        %v3056 = vpop.f32.mrf.mxu0
        %3057 = vmatprep.mubr.bf16.mxu0 0
        %3058 = vmatmul.mubr.bf16.gmra.mxu0 %v2884
        %v3059 = vpop.f32.mrf.mxu0
        %v3060 = vadd.f32 0.0, %v3059
        %v3061 = vpop.f32.mrf.mxu0
        %v3062 = vpop.f32.mrf.mxu0
        %v3063 = vadd.f32 0.0, %v3062
        %v3064 = vpop.f32.mrf.mxu0
        %3065 = vdwg.mxu0
        %v3066 = vadd.f32 %v2756, %v2924
        %v3067 = vadd.f32 %v2757, %v2927
        %v3068 = vadd.f32 %v2758, %v2932
        %v3069 = vadd.f32 %v2759, %v2935
        %v3070 = vadd.f32 %v2760, %v2940
        %v3071 = vadd.f32 %v2761, %v2943
        %v3072 = vadd.f32 %v2762, %v2948
        %v3073 = vadd.f32 %v2763, %v2951
        %v3074 = vadd.f32 %v2764, %v2956
        %v3075 = vadd.f32 %v2765, %v2959
        %v3076 = vadd.f32 %v2766, %v2964
        %v3077 = vadd.f32 %v2767, %v2967
        %v3078 = vadd.f32 %v2768, %v2972
        %v3079 = vadd.f32 %v2769, %v2975
        %v3080 = vadd.f32 %v2770, %v2980
        %v3081 = vadd.f32 %v2771, %v2983
        %v3082 = vadd.f32 %v2772, %v2988
        %v3083 = vadd.f32 %v2773, %v2991
        %v3084 = vadd.f32 %v2774, %v2996
        %v3085 = vadd.f32 %v2775, %v2999
        %v3086 = vadd.f32 %v2776, %v3004
        %v3087 = vadd.f32 %v2777, %v3007
        %v3088 = vadd.f32 %v2778, %v3012
        %v3089 = vadd.f32 %v2779, %v3015
        %v3090 = vadd.f32 %v2780, %v3020
        %v3091 = vadd.f32 %v2781, %v3023
        %v3092 = vadd.f32 %v2782, %v3028
        %v3093 = vadd.f32 %v2783, %v3031
        %v3094 = vadd.f32 %v2784, %v3036
        %v3095 = vadd.f32 %v2785, %v3039
        %v3096 = vadd.f32 %v2786, %v3044
        %v3097 = vadd.f32 %v2787, %v3047
        %v3098 = vadd.f32 %v2788, %v3052
        %v3099 = vadd.f32 %v2789, %v3055
        %v3100 = vadd.f32 %v2790, %v3060
        %v3101 = vadd.f32 %v2791, %v3063
        %v3102 = vld [vmem:[%s2] sm:$0x1]
        %v3104 = vlaneseq
        %v3105 = vshrl.u32 %v3104, 7
        %v3106 = vsub.s32 0, %v3105
        %v3107 = vrot.slane %v3102, %v3106
        %v3109 = vadd.f32 %v3066, %v3107
        %v3110 = vadd.f32 %v3067, %v3107
        %v3111 = vadd.f32 %v3068, %v3107
        %v3112 = vadd.f32 %v3069, %v3107
        %v3113 = vadd.f32 %v3070, %v3107
        %v3114 = vadd.f32 %v3071, %v3107
        %v3115 = vadd.f32 %v3072, %v3107
        %v3116 = vadd.f32 %v3073, %v3107
        %v3117 = vadd.f32 %v3074, %v3107
        %v3118 = vadd.f32 %v3075, %v3107
        %v3119 = vadd.f32 %v3076, %v3107
        %v3120 = vadd.f32 %v3077, %v3107
        %v3121 = vadd.f32 %v3078, %v3107
        %v3122 = vadd.f32 %v3079, %v3107
        %v3123 = vadd.f32 %v3080, %v3107
        %v3124 = vadd.f32 %v3081, %v3107
        %v3125 = vadd.f32 %v3082, %v3107
        %v3126 = vadd.f32 %v3083, %v3107
        %v3127 = vadd.f32 %v3084, %v3107
        %v3128 = vadd.f32 %v3085, %v3107
        %v3129 = vadd.f32 %v3086, %v3107
        %v3130 = vadd.f32 %v3087, %v3107
        %v3131 = vadd.f32 %v3088, %v3107
        %v3132 = vadd.f32 %v3089, %v3107
        %v3133 = vadd.f32 %v3090, %v3107
        %v3134 = vadd.f32 %v3091, %v3107
        %v3135 = vadd.f32 %v3092, %v3107
        %v3136 = vadd.f32 %v3093, %v3107
        %v3137 = vadd.f32 %v3094, %v3107
        %v3138 = vadd.f32 %v3095, %v3107
        %v3139 = vadd.f32 %v3096, %v3107
        %v3140 = vadd.f32 %v3097, %v3107
        %v3141 = vadd.f32 %v3098, %v3107
        %v3142 = vadd.f32 %v3099, %v3107
        %v3143 = vadd.f32 %v3100, %v3107
        %v3144 = vadd.f32 %v3101, %v3107
        %v3145 = vmax.f32 %v3109, 0.0
        %v3146 = vmax.f32 %v3110, 0.0
        %v3147 = vmax.f32 %v3111, 0.0
        %v3148 = vmax.f32 %v3112, 0.0
        %v3149 = vmax.f32 %v3113, 0.0
        %v3150 = vmax.f32 %v3114, 0.0
        %v3151 = vmax.f32 %v3115, 0.0
        %v3152 = vmax.f32 %v3116, 0.0
        %v3153 = vmax.f32 %v3117, 0.0
        %v3154 = vmax.f32 %v3118, 0.0
        %v3155 = vmax.f32 %v3119, 0.0
        %v3156 = vmax.f32 %v3120, 0.0
        %v3157 = vmax.f32 %v3121, 0.0
        %v3158 = vmax.f32 %v3122, 0.0
        %v3159 = vmax.f32 %v3123, 0.0
        %v3160 = vmax.f32 %v3124, 0.0
        %v3161 = vmax.f32 %v3125, 0.0
        %v3162 = vmax.f32 %v3126, 0.0
        %v3163 = vmax.f32 %v3127, 0.0
        %v3164 = vmax.f32 %v3128, 0.0
        %v3165 = vmax.f32 %v3129, 0.0
        %v3166 = vmax.f32 %v3130, 0.0
        %v3167 = vmax.f32 %v3131, 0.0
        %v3168 = vmax.f32 %v3132, 0.0
        %v3169 = vmax.f32 %v3133, 0.0
        %v3170 = vmax.f32 %v3134, 0.0
        %v3171 = vmax.f32 %v3135, 0.0
        %v3172 = vmax.f32 %v3136, 0.0
        %v3173 = vmax.f32 %v3137, 0.0
        %v3174 = vmax.f32 %v3138, 0.0
        %v3175 = vmax.f32 %v3139, 0.0
        %v3176 = vmax.f32 %v3140, 0.0
        %v3177 = vmax.f32 %v3141, 0.0
        %v3178 = vmax.f32 %v3142, 0.0
        %v3179 = vmax.f32 %v3143, 0.0
        %v3180 = vmax.f32 %v3144, 0.0
        %v3181 = vld [vmem:[%s3] sm:$0xff]
        %v3182 = vld [vmem:[%s3 + $0x8] sm:$0xff]
        %v3183 = vld [vmem:[%s3 + $0x10] sm:$0xff]
        %v3184 = vld [vmem:[%s3 + $0x18] sm:$0xff]
        %v3185 = vld [vmem:[%s3 + $0x20] sm:$0xff]
        %v3186 = vld [vmem:[%s3 + $0x28] sm:$0xff]
        %v3187 = vld [vmem:[%s3 + $0x30] sm:$0xff]
        %v3188 = vld [vmem:[%s3 + $0x38] sm:$0xff]
        %v3189 = vld [vmem:[%s3 + $0x40] sm:$0xff]
        %v3190 = vld [vmem:[%s3 + $0x48] sm:$0xff]
        %v3191 = vld [vmem:[%s3 + $0x50] sm:$0xff]
        %v3192 = vld [vmem:[%s3 + $0x58] sm:$0xff]
        %v3193 = vld [vmem:[%s3 + $0x60] sm:$0xff]
        %v3194 = vld [vmem:[%s3 + $0x68] sm:$0xff]
        %v3195 = vld [vmem:[%s3 + $0x70] sm:$0xff]
        %v3196 = vld [vmem:[%s3 + $0x78] sm:$0xff]
        %v3197 = vld [vmem:[%s3 + $0x80] sm:$0xff]
        %v3198 = vld [vmem:[%s3 + $0x88] sm:$0xff]
        %v3199 = vld [vmem:[%s3 + $0x90] sm:$0xff]
        %v3200 = vld [vmem:[%s3 + $0x98] sm:$0xff]
        %v3201 = vld [vmem:[%s3 + $0xa0] sm:$0xff]
        %v3202 = vld [vmem:[%s3 + $0xa8] sm:$0xff]
        %v3203 = vld [vmem:[%s3 + $0xb0] sm:$0xff]
        %v3204 = vld [vmem:[%s3 + $0xb8] sm:$0xff]
        %v3205 = vld [vmem:[%s3 + $0xc0] sm:$0xff]
        %v3206 = vld [vmem:[%s3 + $0xc8] sm:$0xff]
        %v3207 = vld [vmem:[%s3 + $0xd0] sm:$0xff]
        %v3208 = vld [vmem:[%s3 + $0xd8] sm:$0xff]
        %v3209 = vld [vmem:[%s3 + $0xe0] sm:$0xff]
        %v3210 = vld [vmem:[%s3 + $0xe8] sm:$0xff]
        %v3211 = vld [vmem:[%s3 + $0xf0] sm:$0xff]
        %v3212 = vld [vmem:[%s3 + $0xf8] sm:$0xff]
        %v3213 = vld [vmem:[%s3 + $0x100] sm:$0xff]
        %v3214 = vld [vmem:[%s3 + $0x108] sm:$0xff]
        %v3215 = vld [vmem:[%s3 + $0x110] sm:$0xff]
        %v3216 = vld [vmem:[%s3 + $0x118] sm:$0xff]
        %3218 = vset.pattern.permute.xlu0 0
        %3219 = vperm.xlu0 %3218, %v3181
        %v3220 = vpop.permute.xlu0 %3219
        %3223 = vset.pattern.permute.xlu0 0
        %3224 = vperm.xlu0 %3223, %v3182
        %v3225 = vpop.permute.xlu0 %3224
        %3228 = vset.pattern.permute.xlu0 0
        %3229 = vperm.xlu0 %3228, %v3183
        %v3230 = vpop.permute.xlu0 %3229
        %3233 = vset.pattern.permute.xlu0 0
        %3234 = vperm.xlu0 %3233, %v3184
        %v3235 = vpop.permute.xlu0 %3234
        %3238 = vset.pattern.permute.xlu0 0
        %3239 = vperm.xlu0 %3238, %v3185
        %v3240 = vpop.permute.xlu0 %3239
        %3243 = vset.pattern.permute.xlu0 0
        %3244 = vperm.xlu0 %3243, %v3186
        %v3245 = vpop.permute.xlu0 %3244
        %3248 = vset.pattern.permute.xlu0 0
        %3249 = vperm.xlu0 %3248, %v3187
        %v3250 = vpop.permute.xlu0 %3249
        %3253 = vset.pattern.permute.xlu0 0
        %3254 = vperm.xlu0 %3253, %v3188
        %v3255 = vpop.permute.xlu0 %3254
        %3258 = vset.pattern.permute.xlu0 0
        %3259 = vperm.xlu0 %3258, %v3189
        %v3260 = vpop.permute.xlu0 %3259
        %3263 = vset.pattern.permute.xlu0 0
        %3264 = vperm.xlu0 %3263, %v3190
        %v3265 = vpop.permute.xlu0 %3264
        %3268 = vset.pattern.permute.xlu0 0
        %3269 = vperm.xlu0 %3268, %v3191
        %v3270 = vpop.permute.xlu0 %3269
        %3273 = vset.pattern.permute.xlu0 0
        %3274 = vperm.xlu0 %3273, %v3192
        %v3275 = vpop.permute.xlu0 %3274
        %3278 = vset.pattern.permute.xlu0 0
        %3279 = vperm.xlu0 %3278, %v3193
        %v3280 = vpop.permute.xlu0 %3279
        %3283 = vset.pattern.permute.xlu0 0
        %3284 = vperm.xlu0 %3283, %v3194
        %v3285 = vpop.permute.xlu0 %3284
        %3288 = vset.pattern.permute.xlu0 0
        %3289 = vperm.xlu0 %3288, %v3195
        %v3290 = vpop.permute.xlu0 %3289
        %3293 = vset.pattern.permute.xlu0 0
        %3294 = vperm.xlu0 %3293, %v3196
        %v3295 = vpop.permute.xlu0 %3294
        %3298 = vset.pattern.permute.xlu0 0
        %3299 = vperm.xlu0 %3298, %v3197
        %v3300 = vpop.permute.xlu0 %3299
        %3303 = vset.pattern.permute.xlu0 0
        %3304 = vperm.xlu0 %3303, %v3198
        %v3305 = vpop.permute.xlu0 %3304
        %3308 = vset.pattern.permute.xlu0 0
        %3309 = vperm.xlu0 %3308, %v3199
        %v3310 = vpop.permute.xlu0 %3309
        %3313 = vset.pattern.permute.xlu0 0
        %3314 = vperm.xlu0 %3313, %v3200
        %v3315 = vpop.permute.xlu0 %3314
        %3318 = vset.pattern.permute.xlu0 0
        %3319 = vperm.xlu0 %3318, %v3201
        %v3320 = vpop.permute.xlu0 %3319
        %3323 = vset.pattern.permute.xlu0 0
        %3324 = vperm.xlu0 %3323, %v3202
        %v3325 = vpop.permute.xlu0 %3324
        %3328 = vset.pattern.permute.xlu0 0
        %3329 = vperm.xlu0 %3328, %v3203
        %v3330 = vpop.permute.xlu0 %3329
        %3333 = vset.pattern.permute.xlu0 0
        %3334 = vperm.xlu0 %3333, %v3204
        %v3335 = vpop.permute.xlu0 %3334
        %3338 = vset.pattern.permute.xlu0 0
        %3339 = vperm.xlu0 %3338, %v3205
        %v3340 = vpop.permute.xlu0 %3339
        %3343 = vset.pattern.permute.xlu0 0
        %3344 = vperm.xlu0 %3343, %v3206
        %v3345 = vpop.permute.xlu0 %3344
        %3348 = vset.pattern.permute.xlu0 0
        %3349 = vperm.xlu0 %3348, %v3207
        %v3350 = vpop.permute.xlu0 %3349
        %3353 = vset.pattern.permute.xlu0 0
        %3354 = vperm.xlu0 %3353, %v3208
        %v3355 = vpop.permute.xlu0 %3354
        %3358 = vset.pattern.permute.xlu0 0
        %3359 = vperm.xlu0 %3358, %v3209
        %v3360 = vpop.permute.xlu0 %3359
        %3363 = vset.pattern.permute.xlu0 0
        %3364 = vperm.xlu0 %3363, %v3210
        %v3365 = vpop.permute.xlu0 %3364
        %3368 = vset.pattern.permute.xlu0 0
        %3369 = vperm.xlu0 %3368, %v3211
        %v3370 = vpop.permute.xlu0 %3369
        %3373 = vset.pattern.permute.xlu0 0
        %3374 = vperm.xlu0 %3373, %v3212
        %v3375 = vpop.permute.xlu0 %3374
        %3378 = vset.pattern.permute.xlu0 0
        %3379 = vperm.xlu0 %3378, %v3213
        %v3380 = vpop.permute.xlu0 %3379
        %3383 = vset.pattern.permute.xlu0 0
        %3384 = vperm.xlu0 %3383, %v3214
        %v3385 = vpop.permute.xlu0 %3384
        %3388 = vset.pattern.permute.xlu0 0
        %3389 = vperm.xlu0 %3388, %v3215
        %v3390 = vpop.permute.xlu0 %3389
        %3393 = vset.pattern.permute.xlu0 0
        %3394 = vperm.xlu0 %3393, %v3216
        %v3395 = vpop.permute.xlu0 %3394
        %v3397 = vmul.f32 %v3145, %v3220
        %v3398 = vmul.f32 %v3146, %v3225
        %v3399 = vmul.f32 %v3147, %v3230
        %v3400 = vmul.f32 %v3148, %v3235
        %v3401 = vmul.f32 %v3149, %v3240
        %v3402 = vmul.f32 %v3150, %v3245
        %v3403 = vmul.f32 %v3151, %v3250
        %v3404 = vmul.f32 %v3152, %v3255
        %v3405 = vmul.f32 %v3153, %v3260
        %v3406 = vmul.f32 %v3154, %v3265
        %v3407 = vmul.f32 %v3155, %v3270
        %v3408 = vmul.f32 %v3156, %v3275
        %v3409 = vmul.f32 %v3157, %v3280
        %v3410 = vmul.f32 %v3158, %v3285
        %v3411 = vmul.f32 %v3159, %v3290
        %v3412 = vmul.f32 %v3160, %v3295
        %v3413 = vmul.f32 %v3161, %v3300
        %v3414 = vmul.f32 %v3162, %v3305
        %v3415 = vmul.f32 %v3163, %v3310
        %v3416 = vmul.f32 %v3164, %v3315
        %v3417 = vmul.f32 %v3165, %v3320
        %v3418 = vmul.f32 %v3166, %v3325
        %v3419 = vmul.f32 %v3167, %v3330
        %v3420 = vmul.f32 %v3168, %v3335
        %v3421 = vmul.f32 %v3169, %v3340
        %v3422 = vmul.f32 %v3170, %v3345
        %v3423 = vmul.f32 %v3171, %v3350
        %v3424 = vmul.f32 %v3172, %v3355
        %v3425 = vmul.f32 %v3173, %v3360
        %v3426 = vmul.f32 %v3174, %v3365
        %v3427 = vmul.f32 %v3175, %v3370
        %v3428 = vmul.f32 %v3176, %v3375
        %v3429 = vmul.f32 %v3177, %v3380
        %v3430 = vmul.f32 %v3178, %v3385
        %v3431 = vmul.f32 %v3179, %v3390
        %v3432 = vmul.f32 %v3180, %v3395
        %vm3433 = vcmask 261120
        %v3434 = vsel %vm3433, %v3397, 0.0
        %v3435 = vsel %vm3433, %v3398, 0.0
        %v3436 = vadd.f32 %v3434, %v3435
        %v3437 = vsel %vm3433, %v3399, 0.0
        %v3438 = vadd.f32 %v3436, %v3437
        %v3439 = vsel %vm3433, %v3400, 0.0
        %v3440 = vadd.f32 %v3438, %v3439
        %v3441 = vsel %vm3433, %v3401, 0.0
        %v3442 = vadd.f32 %v3440, %v3441
        %v3443 = vsel %vm3433, %v3402, 0.0
        %v3444 = vadd.f32 %v3442, %v3443
        %v3445 = vsel %vm3433, %v3403, 0.0
        %v3446 = vadd.f32 %v3444, %v3445
        %v3447 = vsel %vm3433, %v3404, 0.0
        %v3448 = vadd.f32 %v3446, %v3447
        %v3449 = vsel %vm3433, %v3405, 0.0
        %v3450 = vadd.f32 %v3448, %v3449
        %v3451 = vsel %vm3433, %v3406, 0.0
        %v3452 = vadd.f32 %v3450, %v3451
        %v3453 = vsel %vm3433, %v3407, 0.0
        %v3454 = vadd.f32 %v3452, %v3453
        %v3455 = vsel %vm3433, %v3408, 0.0
        %v3456 = vadd.f32 %v3454, %v3455
        %v3457 = vsel %vm3433, %v3409, 0.0
        %v3458 = vadd.f32 %v3456, %v3457
        %v3459 = vsel %vm3433, %v3410, 0.0
        %v3460 = vadd.f32 %v3458, %v3459
        %v3461 = vsel %vm3433, %v3411, 0.0
        %v3462 = vadd.f32 %v3460, %v3461
        %v3463 = vsel %vm3433, %v3412, 0.0
        %v3464 = vadd.f32 %v3462, %v3463
        %v3465 = vsel %vm3433, %v3413, 0.0
        %v3466 = vadd.f32 %v3464, %v3465
        %v3467 = vsel %vm3433, %v3414, 0.0
        %v3468 = vadd.f32 %v3466, %v3467
        %v3469 = vsel %vm3433, %v3415, 0.0
        %v3470 = vadd.f32 %v3468, %v3469
        %v3471 = vsel %vm3433, %v3416, 0.0
        %v3472 = vadd.f32 %v3470, %v3471
        %v3473 = vsel %vm3433, %v3417, 0.0
        %v3474 = vadd.f32 %v3472, %v3473
        %v3475 = vsel %vm3433, %v3418, 0.0
        %v3476 = vadd.f32 %v3474, %v3475
        %v3477 = vsel %vm3433, %v3419, 0.0
        %v3478 = vadd.f32 %v3476, %v3477
        %v3479 = vsel %vm3433, %v3420, 0.0
        %v3480 = vadd.f32 %v3478, %v3479
        %v3481 = vsel %vm3433, %v3421, 0.0
        %v3482 = vadd.f32 %v3480, %v3481
        %v3483 = vsel %vm3433, %v3422, 0.0
        %v3484 = vadd.f32 %v3482, %v3483
        %v3485 = vsel %vm3433, %v3423, 0.0
        %v3486 = vadd.f32 %v3484, %v3485
        %v3487 = vsel %vm3433, %v3424, 0.0
        %v3488 = vadd.f32 %v3486, %v3487
        %v3489 = vsel %vm3433, %v3425, 0.0
        %v3490 = vadd.f32 %v3488, %v3489
        %v3491 = vsel %vm3433, %v3426, 0.0
        %v3492 = vadd.f32 %v3490, %v3491
        %v3493 = vsel %vm3433, %v3427, 0.0
        %v3494 = vadd.f32 %v3492, %v3493
        %v3495 = vsel %vm3433, %v3428, 0.0
        %v3496 = vadd.f32 %v3494, %v3495
        %v3497 = vsel %vm3433, %v3429, 0.0
        %v3498 = vadd.f32 %v3496, %v3497
        %v3499 = vsel %vm3433, %v3430, 0.0
        %v3500 = vadd.f32 %v3498, %v3499
        %v3501 = vsel %vm3433, %v3431, 0.0
        %v3502 = vadd.f32 %v3500, %v3501
        %v3503 = vsel %vm3433, %v3432, 0.0
        %v3504 = vadd.f32 %v3502, %v3503
        %v3505 = vrot.slane %v3504, 4
        %v3506 = vadd.f32 %v3504, %v3505
        %v3507 = vrot.slane %v3506, 2
        %v3508 = vadd.f32 %v3506, %v3507
        %v3509 = vrot.slane %v3508, 1
        %v3510 = vadd.f32 %v3508, %v3509
        %v3511 = vpack.c.bf16 %v3510, %v3510
        %v3512 = vld [vmem:[%s4] sm:$0xf]
        %v3513 = vld [vmem:[%s4 + $0x4] sm:$0xf]
        %v3514 = vld [vmem:[%s4 + $0x8] sm:$0xf]
        %v3515 = vld [vmem:[%s4 + $0xc] sm:$0xf]
        %v3516 = vld [vmem:[%s5] sm:$0x1]
        %v3521 = vunpack.c.l.b16 %v3512
        %v3522 = vunpack.c.l.b16 %v3513
        %v3523 = vunpack.c.l.b16 %v3514
        %v3524 = vunpack.c.l.b16 %v3515
        %v3525 = vpack.c.b16 %v3522, %v3521
        %v3526 = vpack.c.b16 %v3524, %v3523
        %v3530 = vsel %vm3433, %v3511, 0
        %3532 = vmatprep.subr.bf16.mxu0 0
        %3533 = vmatpush1.bf16.msra.mxu0 0
        %3534 = vmatprep.subr.bf16.mxu0 0
        %3535 = vmatpush1.bf16.msra.mxu0 0
        %3536 = vmatprep.subr.bf16.mxu0 0
        %3537 = vmatpush1.bf16.msra.mxu0 0
        %3538 = vmatprep.subr.bf16.mxu0 0
        %3539 = vmatpush1.bf16.msra.mxu0 0
        %3540 = vmatprep.subr.bf16.mxu0 0
        %3541 = vmatpush1.bf16.msra.mxu0 0
        %3542 = vmatprep.subr.bf16.mxu0 0
        %3543 = vmatpush1.bf16.msra.mxu0 0
        %3544 = vmatprep.subr.bf16.mxu0 0
        %3545 = vmatpush1.bf16.msra.mxu0 %v3526
        %3546 = vmatprep.subr.bf16.mxu0 0
        %3547 = vmatpush1.bf16.msra.mxu0 %v3525
        %3548 = vmatprep.subr.bf16.mxu0 0
        %3549 = vmatpush2.bf16.msra.mxu0 0
        %3550 = vmatprep.subr.bf16.mxu0 0
        %3551 = vmatpush2.bf16.msra.mxu0 0
        %3552 = vmatprep.subr.bf16.mxu0 0
        %3553 = vmatpush2.bf16.msra.mxu0 0
        %3554 = vmatprep.subr.bf16.mxu0 0
        %3555 = vmatpush2.bf16.msra.mxu0 0
        %3556 = vmatprep.subr.bf16.mxu0 0
        %3557 = vmatpush2.bf16.msra.mxu0 0
        %3558 = vmatprep.subr.bf16.mxu0 0
        %3559 = vmatpush2.bf16.msra.mxu0 0
        %3560 = vmatprep.subr.bf16.mxu0 0
        %3561 = vmatpush2.bf16.msra.mxu0 0
        %3562 = vmatprep.subr.bf16.mxu0 0
        %3563 = vmatpush2.bf16.msra.mxu0 0
        %3564 = vmatprep.mubr.bf16.mxu0 0
        %3565 = vmatmul.mubr.bf16.gmra.mxu0 %v3530
        %v3566 = vpop.f32.mrf.mxu0
        %v3567 = vadd.f32 %v3516, %v3566
        %v3568 = vpop.f32.mrf.mxu0
        %v3569 = vpop.f32.mrf.mxu0
        %v3570 = vpop.f32.mrf.mxu0
        %3571 = vdwg.mxu0
        %3572 = vst [vmem:[%s243] sm:$0x1] %v3567
        %s3573 = sand.u32 %s159, 1
        %s3574 = scalar_lea.sflag [#allocation3], %s3573
        %s3575 = sand.u32 %s159, 1
        %s3576 = scalar_lea.vmem [#allocation2], %s3575
        // Predicated region
        $region45: #{timm_model_forward.1} parent=43 // pred_check
          %p3577 = pneg %p169
        $region46: #{timm_model_forward.1} parent=43 // pred_check_branch
          %3579 = sbr.rel (%p3577) target = $region48
        $region47: #{timm_model_forward.1} parent=43 // pred_region
          %s3581 = ssub.s32 16, 16
          %3582 = vsyncadd %s3574, %s3581
          %s3583 = smul.addr %s20, 16
          %s3584 = scalar_lea.hbm %s6, %s3583
          %s3586 = sshll.u32 %s3576, 4
          %s3587 = int_to_ptr.vmem [resolvable:$true] %s3586
          %3589 = dma.vmem_to_hbm [thread:$0]  %s3587, 16, %s3584, %s3574
        $region48: #{timm_model_forward.1} parent=43 // pred_fallthru
          _
      $region44: #{timm_model_forward.1} parent=5 // pred_fallthru
        _
      %p3590 = scmp.le.s32.totalorder 2, %s15
      // Predicated region
      $region49: #{timm_model_forward.1} parent=5 // pred_check
        %p3591 = pneg %p3590
      $region50: #{timm_model_forward.1} parent=5 // pred_check_branch
        %3593 = sbr.rel (%p3591) target = $region52
      $region51: #{timm_model_forward.1} parent=5 // pred_region
        %s3594 = ssub.s32 %s15, 2
        // Predicated region
        $region53: #{timm_model_forward.1} parent=51 // pred_check
          %p3595 = pneg %p175
        $region54: #{timm_model_forward.1} parent=51 // pred_check_branch
          %3597 = sbr.rel (%p3595) target = $region56
        $region55: #{timm_model_forward.1} parent=51 // pred_region
          %s3598 = sand.u32 %s160, 1
          %s3599 = scalar_lea.sflag [#allocation3], %s3598
          %s3600 = sand.u32 %s160, 1
          %s3601 = scalar_lea.vmem [#allocation2], %s3600
          %3602 = dma.done %s3599, 16
        $region56: #{timm_model_forward.1} parent=51 // pred_fallthru
          _
      $region52: #{timm_model_forward.1} parent=5 // pred_fallthru
        _
    $region6: #{timm_model_forward.1} parent=1 // loop_footer
      %s19 = sadd.s32 1, %s15
    $region7: #{timm_model_forward.1} parent=1 // loop_footer_branch
      %14 = sbr.rel target = $region3
    $region8: #{timm_model_forward.1} parent=1 // loop_exit
      _
    %3603 = vsyncpa [#allocation3], 1
    %s3604 = scalar_lea.sflag [#allocation3], 1
    %3605 = vsyncpa %s3604, 1

</llo_original>
